<compile_context>
chip_gen: v7x
topology: tpu7x:2x2x1
jax: 0.10.0
libtpu: 0.0.40
codegen_flags: <defaults>
</compile_context>

<pallas_src>
import functools

import numpy as np
import jax
import jax.numpy as jnp
from jax import lax
from jax.experimental import pallas as pl
from jax.experimental.pallas import tpu as pltpu

NEG_SLOPE = 0.01   # F.leaky_relu default
GN_EPS = 1e-5      # F.group_norm default
GN_GROUPS = 4


def _leaky(v):
    return jnp.where(v >= 0, v, NEG_SLOPE * v)


def _round_up(x, m):
    return ((x + m - 1) // m) * m


# ---------------------------------------------------------------------------
# Fused Pallas kernel (one grid step == `spb` batch samples packed on lanes)
# ---------------------------------------------------------------------------
def _fused_resnet_kernel(x_ref, w1s_ref, b1s_ref, w2_ref, b2_ref, w3_ref, b3_ref,
                         p1_ref, p2_ref, mask_ref, s_ref, o_ref,
                         patch_ref, skip_ref, *, H, W, spb, c1):
    HW = H * W
    L = spb * HW
    f32 = jnp.float32
    offsets = [dh * W + dw for dh in (-1, 0, 1) for dw in (-1, 0, 1)]

    def conv3x3(a, w_ref_, b_ref_):
        """3x3 / pad=1 / stride=1 conv + bias on (Cin, spb*HW); Cin % 8 == 0."""
        cin = a.shape[0]
        for t, off in enumerate(offsets):
            shifted = a if off == 0 else pltpu.roll(a, shift=(-off) % L, axis=1)
            # Precomputed 0/1 border mask; it also zeroes taps that the roll
            # wrapped across sample boundaries on the packed lane axis.
            val = shifted if off == 0 else shifted * mask_ref[t:t + 1, :]
            patch_ref[t * cin:(t + 1) * cin, :] = val      # 8-sublane-aligned slot
        return (jnp.dot(w_ref_[...], patch_ref[:9 * cin, :],
                        preferred_element_type=f32) + b_ref_[...])

    def group_norm(a, p_ref):
        """Per-sample F.group_norm (no affine); samples are HW-lane blocks."""
        pieces = []
        for b in range(spb):
            blk = a[:, b * HW:(b + 1) * HW]                        # lane-aligned
            mean = jnp.dot(p_ref[...],
                           jnp.sum(blk, axis=1, keepdims=True),
                           preferred_element_type=f32)             # (C, 1)
            xc = blk - mean
            var = jnp.dot(p_ref[...],
                          jnp.sum(xc * xc, axis=1, keepdims=True),
                          preferred_element_type=f32)              # (C, 1)
            pieces.append(xc * lax.rsqrt(var + GN_EPS))
        return pieces[0] if spb == 1 else jnp.concatenate(pieces, axis=1)

    x = x_ref[0].astype(f32)                                       # (Cpad, L)

    # conv1 and skip_conv share x's patches: one MXU push with stacked weights.
    y1s = conv3x3(x, w1s_ref, b1s_ref)                             # (c1+cs, L)
    # Skip path: subsample to output resolution now and park it in VMEM
    # (keeps only a (32, spb*HoWo) slab live instead of (32, L)).
    skip_ref[...] = jnp.dot(y1s[c1:, :], s_ref[...], preferred_element_type=f32)

    # TODO(synk): nn.Dropout2d treated as identity (inference mode); training-
    # mode stochastic channel dropout is omitted.
    a1 = group_norm(_leaky(y1s[:c1, :]), p1_ref)                   # (c1, L)
    a2 = group_norm(_leaky(conv3x3(a1, w2_ref, b2_ref)), p2_ref)   # (c2, L)
    y3 = _leaky(conv3x3(a2, w3_ref, b3_ref))                       # (c3, L)

    # Column subsample == stride-s conv (k=3, pad=1); commutes with leaky_relu.
    out = jnp.dot(y3, s_ref[...], preferred_element_type=f32) + skip_ref[...]
    o_ref[0] = out.astype(o_ref.dtype)


# ---------------------------------------------------------------------------
# Compile-time-constant matrices (built once in the wrapper, numpy -> literals)
# ---------------------------------------------------------------------------
def _make_constants(h, w, stride, spb, c1, c2):
    hw = h * w
    L = spb * hw
    ho = (h - 1) // stride + 1
    wo = (w - 1) // stride + 1
    howo = ho * wo

    # 3x3 border masks on the packed lane axis (per-sample via p % hw).
    p = np.arange(L)
    rh = (p % hw) // w
    rw = p % w
    masks = np.zeros((9, L), np.float32)
    t = 0
    for dh in (-1, 0, 1):
        for dw in (-1, 0, 1):
            masks[t] = ((rh + dh >= 0) & (rh + dh < h) &
                        (rw + dw >= 0) & (rw + dw < w))
            t += 1

    # Group-averaging matrices: (P @ s) mixes channels of the same group,
    # scaled so the result is the per-(sample, group) mean.
    def gmat(c):
        cg = c // GN_GROUPS
        ci = np.arange(c)
        m = (ci[:, None] // cg == ci[None, :] // cg).astype(np.float32)
        return m / np.float32(cg * hw)

    # Block-diagonal stride-selection matrix: stride-1 conv columns -> strided.
    q = np.arange(spb * howo)
    ql = q % howo
    sel = (q // howo) * hw + (ql // wo) * (stride * w) + (ql % wo) * stride
    smat = np.zeros((L, spb * howo), np.float32)
    smat[sel, q] = 1.0

    return (jnp.asarray(masks), jnp.asarray(gmat(c1)), jnp.asarray(gmat(c2)),
            jnp.asarray(smat))


def _conv_weight_as_matrix(w, cin_pad=None):
    # (3, 3, Cin, Cout) -> (Cout, 9*Cin_pad); columns tap-major / channel-minor
    # with the Cin axis zero-padded to an 8-sublane-aligned slot per tap.
    _, _, cin, cout = w.shape
    if cin_pad is None:
        cin_pad = cin
    if cin_pad != cin:
        w = jnp.pad(w, ((0, 0), (0, 0), (0, cin_pad - cin), (0, 0)))
    return jnp.transpose(w.reshape(9 * cin_pad, cout))


# ---------------------------------------------------------------------------
# Wrapper (public API is NCHW to match PyTorch)
# ---------------------------------------------------------------------------
def strided_resnet_forward(x_nchw, params, *, stride=2, samples_per_step=None):
    n, cin, h, w = x_nchw.shape
    hw = h * w
    ho = (h - 1) // stride + 1
    wo = (w - 1) // stride + 1
    howo = ho * wo

    w1, b1 = params["conv1"]
    w2, b2 = params["conv2"]
    w3, b3 = params["conv3"]
    ws, bs = params["skip"]
    c1, c2, c3, cs = w1.shape[-1], w2.shape[-1], w3.shape[-1], ws.shape[-1]
    assert cs == c3 and c1 % GN_GROUPS == 0 and c2 % GN_GROUPS == 0

    cpad = _round_up(cin, 8)            # sublane-aligned tap slots for x patches

    if samples_per_step is None:
        # Pack enough samples on the lane axis for a lane-dense (>=128-lane)
        # output block; with batch >= 2*spb the grid keeps >=2 parallel steps
        # so v7x's two TensorCores both get work.
        samples_per_step = min(n, max(1, (128 + howo - 1) // howo))
    spb = samples_per_step
    assert n % spb == 0, (n, spb)
    steps = n // spb
    L = spb * hw
    Lo = spb * howo

    masks, p1m, p2m, smat = _make_constants(h, w, stride, spb, c1, c2)

    # Pack the input: (N, Cin, H, W) -> (steps, Cpad, spb*HW), lane = sample*HW+pix.
    xp = x_nchw.reshape(n, cin, hw)
    if cpad != cin:
        xp = jnp.pad(xp, ((0, 0), (0, cpad - cin), (0, 0)))
    xp = xp.reshape(steps, spb, cpad, hw).transpose(0, 2, 1, 3).reshape(steps, cpad, L)

    # conv1 and skip_conv fused into one stacked weight matrix.
    w1s = jnp.concatenate([_conv_weight_as_matrix(w1, cpad),
                           _conv_weight_as_matrix(ws, cpad)], axis=0)  # (c1+cs, 9*cpad)
    b1s = jnp.concatenate([b1, bs]).reshape(c1 + cs, 1)
    w2m = _conv_weight_as_matrix(w2)                                   # (c2, 9*c1)
    w3m = _conv_weight_as_matrix(w3)                                   # (c3, 9*c2)

    kmax = max(cpad, c1, c2)

    # Advisory cost estimate (tiny kernel -> help XLA schedule around it).
    flops = n * (2 * hw * ((c1 + cs) * 9 * cpad + c2 * 9 * c1 + c3 * 9 * c2)
                 + 2 * hw * howo * (c3 + cs)
                 + 10 * hw * (c1 + c2))
    transcendentals = n * (c1 + c2)
    bytes_accessed = 4 * (n * cpad * hw + n * c3 * howo
                          + (c1 + cs) * (9 * cpad + 1) + c2 * (9 * c1 + 1)
                          + c3 * (9 * c2 + 1) + c1 * c1 + c2 * c2
                          + 9 * L + L * Lo)

    def whole(shape):
        return pl.BlockSpec(shape, lambda i: (0, 0))

    kernel = functools.partial(_fused_resnet_kernel, H=h, W=w, spb=spb, c1=c1)

    out = pl.pallas_call(
        kernel,
        out_shape=jax.ShapeDtypeStruct((steps, c3, Lo), x_nchw.dtype),
        grid_spec=pltpu.PrefetchScalarGridSpec(
            num_scalar_prefetch=0,
            grid=(steps,),
            in_specs=[
                pl.BlockSpec((1, cpad, L), lambda i: (i, 0, 0)),
                whole((c1 + cs, 9 * cpad)), whole((c1 + cs, 1)),
                whole((c2, 9 * c1)), whole((c2, 1)),
                whole((c3, 9 * c2)), whole((c3, 1)),
                whole((c1, c1)), whole((c2, c2)),
                whole((9, L)), whole((L, Lo)),
            ],
            out_specs=pl.BlockSpec((1, c3, Lo), lambda i: (i, 0, 0)),
            scratch_shapes=[pltpu.VMEM((9 * kmax, L), jnp.float32),   # patches
                            pltpu.VMEM((c3, Lo), jnp.float32)],       # skip slab
        ),
        compiler_params=pltpu.CompilerParams(
            dimension_semantics=("parallel",),
            # ~1 MiB actually used at these shapes; explicit, generous limit
            # that is still <= physical VMEM on v7x (64 MiB/TC).
            vmem_limit_bytes=32 * 1024 * 1024),
        cost_estimate=pl.CostEstimate(flops=int(flops),
                                      transcendentals=int(transcendentals),
                                      bytes_accessed=int(bytes_accessed)),
    )(xp, w1s, b1s, w2m, b2.reshape(c2, 1), w3m, b3.reshape(c3, 1),
      p1m, p2m, masks, smat)

    # Unpack the lane axis back to NCHW.
    out = out.reshape(steps, c3, spb, howo).transpose(0, 2, 1, 3)
    return out.reshape(n, c3, ho, wo)


# ---------------------------------------------------------------------------
# Parameters
# ---------------------------------------------------------------------------
def init_params(key, in_channels=3, out_channels=32):
    def conv_init(k, cin, cout):
        k1, k2 = jax.random.split(k)
        fan_in = cin * 9
        bound = 1.0 / jnp.sqrt(jnp.float32(fan_in))
        w = jax.random.uniform(k1, (3, 3, cin, cout), jnp.float32, -bound, bound)
        b = jax.random.uniform(k2, (cout,), jnp.float32, -bound, bound)
        return w, b

    ks = jax.random.split(key, 4)
    return {
        "conv1": conv_init(ks[0], in_channels, out_channels),
        "conv2": conv_init(ks[1], out_channels, out_channels // 2),
        "conv3": conv_init(ks[2], out_channels // 2, out_channels),
        "skip":  conv_init(ks[3], in_channels, out_channels),
    }


# ---------------------------------------------------------------------------
# Pure-JAX reference (for in-script verification)
# ---------------------------------------------------------------------------
def _ref_conv(x, w, b, stride):
    y = lax.conv_general_dilated(
        x, w, window_strides=(stride, stride), padding=((1, 1), (1, 1)),
        dimension_numbers=("NHWC", "HWIO", "NHWC"))
    return y + b


def _ref_group_norm(x, groups=GN_GROUPS):
    n, h, w, c = x.shape
    cg = c // groups
    xr = x.reshape(n, h * w, groups, cg)
    mean = xr.mean(axis=(1, 3), keepdims=True)
    var = jnp.square(xr - mean).mean(axis=(1, 3), keepdims=True)
    return ((xr - mean) * lax.rsqrt(var + GN_EPS)).reshape(n, h, w, c)


def reference_forward(x_nchw, params, *, stride=2):
    x = jnp.transpose(x_nchw, (0, 2, 3, 1))
    w1, b1 = params["conv1"]; w2, b2 = params["conv2"]
    w3, b3 = params["conv3"]; ws, bs = params["skip"]
    out = _leaky(_ref_conv(x, w1, b1, 1))
    out = _ref_group_norm(out)
    out = _leaky(_ref_conv(out, w2, b2, 1))
    out = _ref_group_norm(out)
    out1 = _ref_conv(x, ws, bs, stride)
    out = _leaky(_ref_conv(out, w3, b3, stride)) + out1
    return jnp.transpose(out, (0, 3, 1, 2))


# ---------------------------------------------------------------------------
if __name__ == "__main__":
    key = jax.random.PRNGKey(0)
    k_x, k_p = jax.random.split(key)

    # batch=4, in_channels=3, 16x16 spatial: each grid step packs 2 samples on
    # the lane axis (lane-dense 128-wide output block) and the grid keeps 2
    # parallel steps (one per v7x TensorCore).
    x = jax.random.normal(k_x, (4, 3, 16, 16), jnp.float32)      # NCHW
    params = init_params(k_p, in_channels=3, out_channels=32)

    fwd = jax.jit(functools.partial(strided_resnet_forward, stride=2))
    out = jax.block_until_ready(fwd(x, params))
    assert out.shape == (4, 32, 8, 8), out.shape

    ref = jax.block_until_ready(reference_forward(x, params, stride=2))
    assert jnp.allclose(out, ref, rtol=1e-4, atol=1e-4), (
        float(jnp.max(jnp.abs(out - ref))))

    print("KERNEL_OK")
</pallas_src>

<mosaic_0001>
module attributes {stable_mosaic.version = 11 : i64} {
  func.func @_fused_resnet_kernel(%arg0: i32, %arg1: memref<1x8x512xf32, #tpu.memory_space<vmem>>, %arg2: memref<64x72xf32, #tpu.memory_space<vmem>>, %arg3: memref<64x1xf32, #tpu.memory_space<vmem>>, %arg4: memref<16x288xf32, #tpu.memory_space<vmem>>, %arg5: memref<16x1xf32, #tpu.memory_space<vmem>>, %arg6: memref<32x144xf32, #tpu.memory_space<vmem>>, %arg7: memref<32x1xf32, #tpu.memory_space<vmem>>, %arg8: memref<32x32xf32, #tpu.memory_space<vmem>>, %arg9: memref<16x16xf32, #tpu.memory_space<vmem>>, %arg10: memref<9x512xf32, #tpu.memory_space<vmem>>, %arg11: memref<512x128xf32, #tpu.memory_space<vmem>>, %arg12: memref<1x32x128xf32, #tpu.memory_space<vmem>>, %arg13: memref<288x512xf32, #tpu.memory_space<vmem>>, %arg14: memref<32x128xf32, #tpu.memory_space<vmem>>) attributes {dimension_semantics = [#tpu.dimension_semantics<parallel>], iteration_bounds = array<i64: 2>, scalar_prefetch = 0 : i64, scratch_operands = 2 : i64, tpu.core_type = #tpu.core_type<tc>, window_params = [{transform_indices = @transform_0, window_bounds = array<i64: 1, 8, 512>}, {pipeline_mode = #tpu.pipeline_mode<synchronous>, transform_indices = @transform_1, window_bounds = array<i64: 64, 72>}, {pipeline_mode = #tpu.pipeline_mode<synchronous>, transform_indices = @transform_2, window_bounds = array<i64: 64, 1>}, {pipeline_mode = #tpu.pipeline_mode<synchronous>, transform_indices = @transform_3, window_bounds = array<i64: 16, 288>}, {pipeline_mode = #tpu.pipeline_mode<synchronous>, transform_indices = @transform_4, window_bounds = array<i64: 16, 1>}, {pipeline_mode = #tpu.pipeline_mode<synchronous>, transform_indices = @transform_5, window_bounds = array<i64: 32, 144>}, {pipeline_mode = #tpu.pipeline_mode<synchronous>, transform_indices = @transform_6, window_bounds = array<i64: 32, 1>}, {pipeline_mode = #tpu.pipeline_mode<synchronous>, transform_indices = @transform_7, window_bounds = array<i64: 32, 32>}, {pipeline_mode = #tpu.pipeline_mode<synchronous>, transform_indices = @transform_8, window_bounds = array<i64: 16, 16>}, {pipeline_mode = #tpu.pipeline_mode<synchronous>, transform_indices = @transform_9, window_bounds = array<i64: 9, 512>}, {pipeline_mode = #tpu.pipeline_mode<synchronous>, transform_indices = @transform_10, window_bounds = array<i64: 512, 128>}, {transform_indices = @transform_11, window_bounds = array<i64: 1, 32, 128>}]} {
    %c0 = arith.constant 0 : index
    %c0_0 = arith.constant 0 : index
    %c0_1 = arith.constant 0 : index
    %0 = vector.load %arg1[%c0, %c0_0, %c0_1] : memref<1x8x512xf32, #tpu.memory_space<vmem>>, vector<1x8x512xf32>
    %1 = vector.shape_cast %0 : vector<1x8x512xf32> to vector<8x512xf32>
    %c17_i32 = arith.constant 17 : i32
    %2 = tpu.dynamic_rotate %1 by %c17_i32 dim 1 : vector<8x512xf32>, i32 -> vector<8x512xf32>
    %c0_2 = arith.constant 0 : index
    %c0_3 = arith.constant 0 : index
    %3 = vector.load %arg10[%c0_2, %c0_3] : memref<9x512xf32, #tpu.memory_space<vmem>>, vector<1x512xf32>
    %4 = vector.broadcast %3 : vector<1x512xf32> to vector<8x512xf32>
    %5 = arith.mulf %2, %4 : vector<8x512xf32>
    %c0_4 = arith.constant 0 : index
    %c0_5 = arith.constant 0 : index
    %6 = vector.load %arg13[%c0_4, %c0_5] : memref<288x512xf32, #tpu.memory_space<vmem>>, vector<8x512xf32>
    tpu.vector_store %arg13[%c0_4, %c0_5], %5 {strides = array<i32>} : memref<288x512xf32, #tpu.memory_space<vmem>>, vector<8x512xf32>,
    %c16_i32 = arith.constant 16 : i32
    %7 = tpu.dynamic_rotate %1 by %c16_i32 dim 1 : vector<8x512xf32>, i32 -> vector<8x512xf32>
    %c1 = arith.constant 1 : index
    %c0_6 = arith.constant 0 : index
    %8 = vector.load %arg10[%c1, %c0_6] : memref<9x512xf32, #tpu.memory_space<vmem>>, vector<1x512xf32>
    %9 = vector.broadcast %8 : vector<1x512xf32> to vector<8x512xf32>
    %10 = arith.mulf %7, %9 : vector<8x512xf32>
    %c8 = arith.constant 8 : index
    %c0_7 = arith.constant 0 : index
    %11 = vector.load %arg13[%c8, %c0_7] : memref<288x512xf32, #tpu.memory_space<vmem>>, vector<8x512xf32>
    tpu.vector_store %arg13[%c8, %c0_7], %10 {strides = array<i32>} : memref<288x512xf32, #tpu.memory_space<vmem>>, vector<8x512xf32>,
    %c15_i32 = arith.constant 15 : i32
    %12 = tpu.dynamic_rotate %1 by %c15_i32 dim 1 : vector<8x512xf32>, i32 -> vector<8x512xf32>
    %c2 = arith.constant 2 : index
    %c0_8 = arith.constant 0 : index
    %13 = vector.load %arg10[%c2, %c0_8] : memref<9x512xf32, #tpu.memory_space<vmem>>, vector<1x512xf32>
    %14 = vector.broadcast %13 : vector<1x512xf32> to vector<8x512xf32>
    %15 = arith.mulf %12, %14 : vector<8x512xf32>
    %c16 = arith.constant 16 : index
    %c0_9 = arith.constant 0 : index
    %16 = vector.load %arg13[%c16, %c0_9] : memref<288x512xf32, #tpu.memory_space<vmem>>, vector<8x512xf32>
    tpu.vector_store %arg13[%c16, %c0_9], %15 {strides = array<i32>} : memref<288x512xf32, #tpu.memory_space<vmem>>, vector<8x512xf32>,
    %c1_i32 = arith.constant 1 : i32
    %17 = tpu.dynamic_rotate %1 by %c1_i32 dim 1 : vector<8x512xf32>, i32 -> vector<8x512xf32>
    %c3 = arith.constant 3 : index
    %c0_10 = arith.constant 0 : index
    %18 = vector.load %arg10[%c3, %c0_10] : memref<9x512xf32, #tpu.memory_space<vmem>>, vector<1x512xf32>
    %19 = vector.broadcast %18 : vector<1x512xf32> to vector<8x512xf32>
    %20 = arith.mulf %17, %19 : vector<8x512xf32>
    %c24 = arith.constant 24 : index
    %c0_11 = arith.constant 0 : index
    %21 = vector.load %arg13[%c24, %c0_11] : memref<288x512xf32, #tpu.memory_space<vmem>>, vector<8x512xf32>
    tpu.vector_store %arg13[%c24, %c0_11], %20 {strides = array<i32>} : memref<288x512xf32, #tpu.memory_space<vmem>>, vector<8x512xf32>,
    %c32 = arith.constant 32 : index
    %c0_12 = arith.constant 0 : index
    %22 = vector.load %arg13[%c32, %c0_12] : memref<288x512xf32, #tpu.memory_space<vmem>>, vector<8x512xf32>
    tpu.vector_store %arg13[%c32, %c0_12], %1 {strides = array<i32>} : memref<288x512xf32, #tpu.memory_space<vmem>>, vector<8x512xf32>,
    %c511_i32 = arith.constant 511 : i32
    %23 = tpu.dynamic_rotate %1 by %c511_i32 dim 1 : vector<8x512xf32>, i32 -> vector<8x512xf32>
    %c5 = arith.constant 5 : index
    %c0_13 = arith.constant 0 : index
    %24 = vector.load %arg10[%c5, %c0_13] : memref<9x512xf32, #tpu.memory_space<vmem>>, vector<1x512xf32>
    %25 = vector.broadcast %24 : vector<1x512xf32> to vector<8x512xf32>
    %26 = arith.mulf %23, %25 : vector<8x512xf32>
    %c40 = arith.constant 40 : index
    %c0_14 = arith.constant 0 : index
    %27 = vector.load %arg13[%c40, %c0_14] : memref<288x512xf32, #tpu.memory_space<vmem>>, vector<8x512xf32>
    tpu.vector_store %arg13[%c40, %c0_14], %26 {strides = array<i32>} : memref<288x512xf32, #tpu.memory_space<vmem>>, vector<8x512xf32>,
    %c497_i32 = arith.constant 497 : i32
    %28 = tpu.dynamic_rotate %1 by %c497_i32 dim 1 : vector<8x512xf32>, i32 -> vector<8x512xf32>
    %c6 = arith.constant 6 : index
    %c0_15 = arith.constant 0 : index
    %29 = vector.load %arg10[%c6, %c0_15] : memref<9x512xf32, #tpu.memory_space<vmem>>, vector<1x512xf32>
    %30 = vector.broadcast %29 : vector<1x512xf32> to vector<8x512xf32>
    %31 = arith.mulf %28, %30 : vector<8x512xf32>
    %c48 = arith.constant 48 : index
    %c0_16 = arith.constant 0 : index
    %32 = vector.load %arg13[%c48, %c0_16] : memref<288x512xf32, #tpu.memory_space<vmem>>, vector<8x512xf32>
    tpu.vector_store %arg13[%c48, %c0_16], %31 {strides = array<i32>} : memref<288x512xf32, #tpu.memory_space<vmem>>, vector<8x512xf32>,
    %c496_i32 = arith.constant 496 : i32
    %33 = tpu.dynamic_rotate %1 by %c496_i32 dim 1 : vector<8x512xf32>, i32 -> vector<8x512xf32>
    %c7 = arith.constant 7 : index
    %c0_17 = arith.constant 0 : index
    %34 = vector.load %arg10[%c7, %c0_17] : memref<9x512xf32, #tpu.memory_space<vmem>>, vector<1x512xf32>
    %35 = vector.broadcast %34 : vector<1x512xf32> to vector<8x512xf32>
    %36 = arith.mulf %33, %35 : vector<8x512xf32>
    %c56 = arith.constant 56 : index
    %c0_18 = arith.constant 0 : index
    %37 = vector.load %arg13[%c56, %c0_18] : memref<288x512xf32, #tpu.memory_space<vmem>>, vector<8x512xf32>
    tpu.vector_store %arg13[%c56, %c0_18], %36 {strides = array<i32>} : memref<288x512xf32, #tpu.memory_space<vmem>>, vector<8x512xf32>,
    %c495_i32 = arith.constant 495 : i32
    %38 = tpu.dynamic_rotate %1 by %c495_i32 dim 1 : vector<8x512xf32>, i32 -> vector<8x512xf32>
    %c8_19 = arith.constant 8 : index
    %c0_20 = arith.constant 0 : index
    %39 = vector.load %arg10[%c8_19, %c0_20] : memref<9x512xf32, #tpu.memory_space<vmem>>, vector<1x512xf32>
    %40 = vector.broadcast %39 : vector<1x512xf32> to vector<8x512xf32>
    %41 = arith.mulf %38, %40 : vector<8x512xf32>
    %c64 = arith.constant 64 : index
    %c0_21 = arith.constant 0 : index
    %42 = vector.load %arg13[%c64, %c0_21] : memref<288x512xf32, #tpu.memory_space<vmem>>, vector<8x512xf32>
    tpu.vector_store %arg13[%c64, %c0_21], %41 {strides = array<i32>} : memref<288x512xf32, #tpu.memory_space<vmem>>, vector<8x512xf32>,
    %c0_22 = arith.constant 0 : index
    %c0_23 = arith.constant 0 : index
    %43 = vector.load %arg2[%c0_22, %c0_23] : memref<64x72xf32, #tpu.memory_space<vmem>>, vector<64x72xf32>
    %c0_24 = arith.constant 0 : index
    %c0_25 = arith.constant 0 : index
    %44 = vector.load %arg13[%c0_24, %c0_25] : memref<288x512xf32, #tpu.memory_space<vmem>>, vector<72x512xf32>
    %cst = arith.constant dense<0.000000e+00> : vector<64x512xf32>
    %45 = tpu.matmul %43, %44, %cst {dimension_numbers = #tpu.dot_dimension_numbers<[1], [0], [0], [1], [0, 0, 1, 1], [], []>} : vector<64x72xf32>, vector<72x512xf32>, vector<64x512xf32> -> vector<64x512xf32>
    %c0_26 = arith.constant 0 : index
    %c0_27 = arith.constant 0 : index
    %46 = vector.load %arg3[%c0_26, %c0_27] : memref<64x1xf32, #tpu.memory_space<vmem>>, vector<64x1xf32>
    %47 = vector.broadcast %46 : vector<64x1xf32> to vector<64x512xf32>
    %48 = arith.addf %45, %47 : vector<64x512xf32>
    %49 = vector.extract_strided_slice %48 {offsets = [32, 0], sizes = [32, 512], strides = [1, 1]} : vector<64x512xf32> to vector<32x512xf32>
    %c0_28 = arith.constant 0 : index
    %c0_29 = arith.constant 0 : index
    %50 = vector.load %arg11[%c0_28, %c0_29] : memref<512x128xf32, #tpu.memory_space<vmem>>, vector<512x128xf32>
    %cst_30 = arith.constant dense<0.000000e+00> : vector<32x128xf32>
    %51 = tpu.matmul %49, %50, %cst_30 {dimension_numbers = #tpu.dot_dimension_numbers<[1], [0], [0], [1], [0, 0, 1, 1], [], []>} : vector<32x512xf32>, vector<512x128xf32>, vector<32x128xf32> -> vector<32x128xf32>
    %c0_31 = arith.constant 0 : index
    %c0_32 = arith.constant 0 : index
    %52 = vector.load %arg14[%c0_31, %c0_32] : memref<32x128xf32, #tpu.memory_space<vmem>>, vector<32x128xf32>
    tpu.vector_store %arg14[%c0_31, %c0_32], %51 {strides = array<i32>} : memref<32x128xf32, #tpu.memory_space<vmem>>, vector<32x128xf32>,
    %53 = vector.extract_strided_slice %48 {offsets = [0, 0], sizes = [32, 512], strides = [1, 1]} : vector<64x512xf32> to vector<32x512xf32>
    %cst_33 = arith.constant 0.000000e+00 : f32
    %54 = vector.broadcast %cst_33 : f32 to vector<32x512xf32>
    %55 = arith.cmpf oge, %53, %54 : vector<32x512xf32>
    %cst_34 = arith.constant 0.00999999977 : f32
    %56 = vector.broadcast %cst_34 : f32 to vector<32x512xf32>
    %57 = arith.mulf %56, %53 : vector<32x512xf32>
    %58 = arith.select %55, %53, %57 : vector<32x512xi1>, vector<32x512xf32>
    %59 = vector.extract_strided_slice %58 {offsets = [0, 0], sizes = [32, 256], strides = [1, 1]} : vector<32x512xf32> to vector<32x256xf32>
    %c0_35 = arith.constant 0 : index
    %c0_36 = arith.constant 0 : index
    %60 = vector.load %arg8[%c0_35, %c0_36] : memref<32x32xf32, #tpu.memory_space<vmem>>, vector<32x32xf32>
    %cst_37 = arith.constant dense<0.000000e+00> : vector<32xf32>
    %61 = vector.multi_reduction <add>, %59, %cst_37 [1] : vector<32x256xf32> to vector<32xf32>
    %62 = vector.shape_cast %61 : vector<32xf32> to vector<32x1xf32>
    %cst_38 = arith.constant dense<0.000000e+00> : vector<32x1xf32>
    %63 = tpu.matmul %60, %62, %cst_38 {dimension_numbers = #tpu.dot_dimension_numbers<[1], [0], [0], [1], [0, 0, 1, 1], [], []>} : vector<32x32xf32>, vector<32x1xf32>, vector<32x1xf32> -> vector<32x1xf32>
    %64 = vector.broadcast %63 : vector<32x1xf32> to vector<32x256xf32>
    %65 = arith.subf %59, %64 : vector<32x256xf32>
    %c0_39 = arith.constant 0 : index
    %c0_40 = arith.constant 0 : index
    %66 = vector.load %arg8[%c0_39, %c0_40] : memref<32x32xf32, #tpu.memory_space<vmem>>, vector<32x32xf32>
    %67 = arith.mulf %65, %65 : vector<32x256xf32>
    %cst_41 = arith.constant dense<0.000000e+00> : vector<32xf32>
    %68 = vector.multi_reduction <add>, %67, %cst_41 [1] : vector<32x256xf32> to vector<32xf32>
    %69 = vector.shape_cast %68 : vector<32xf32> to vector<32x1xf32>
    %cst_42 = arith.constant dense<0.000000e+00> : vector<32x1xf32>
    %70 = tpu.matmul %66, %69, %cst_42 {dimension_numbers = #tpu.dot_dimension_numbers<[1], [0], [0], [1], [0, 0, 1, 1], [], []>} : vector<32x32xf32>, vector<32x1xf32>, vector<32x1xf32> -> vector<32x1xf32>
    %cst_43 = arith.constant 9.99999974E-6 : f32
    %71 = vector.broadcast %cst_43 : f32 to vector<32x1xf32>
    %72 = arith.addf %70, %71 : vector<32x1xf32>
    %73 = math.rsqrt %72 : vector<32x1xf32>
    %74 = vector.broadcast %73 : vector<32x1xf32> to vector<32x256xf32>
    %75 = arith.mulf %65, %74 : vector<32x256xf32>
    %76 = vector.extract_strided_slice %58 {offsets = [0, 256], sizes = [32, 256], strides = [1, 1]} : vector<32x512xf32> to vector<32x256xf32>
    %c0_44 = arith.constant 0 : index
    %c0_45 = arith.constant 0 : index
    %77 = vector.load %arg8[%c0_44, %c0_45] : memref<32x32xf32, #tpu.memory_space<vmem>>, vector<32x32xf32>
    %cst_46 = arith.constant dense<0.000000e+00> : vector<32xf32>
    %78 = vector.multi_reduction <add>, %76, %cst_46 [1] : vector<32x256xf32> to vector<32xf32>
    %79 = vector.shape_cast %78 : vector<32xf32> to vector<32x1xf32>
    %cst_47 = arith.constant dense<0.000000e+00> : vector<32x1xf32>
    %80 = tpu.matmul %77, %79, %cst_47 {dimension_numbers = #tpu.dot_dimension_numbers<[1], [0], [0], [1], [0, 0, 1, 1], [], []>} : vector<32x32xf32>, vector<32x1xf32>, vector<32x1xf32> -> vector<32x1xf32>
    %81 = vector.broadcast %80 : vector<32x1xf32> to vector<32x256xf32>
    %82 = arith.subf %76, %81 : vector<32x256xf32>
    %c0_48 = arith.constant 0 : index
    %c0_49 = arith.constant 0 : index
    %83 = vector.load %arg8[%c0_48, %c0_49] : memref<32x32xf32, #tpu.memory_space<vmem>>, vector<32x32xf32>
    %84 = arith.mulf %82, %82 : vector<32x256xf32>
    %cst_50 = arith.constant dense<0.000000e+00> : vector<32xf32>
    %85 = vector.multi_reduction <add>, %84, %cst_50 [1] : vector<32x256xf32> to vector<32xf32>
    %86 = vector.shape_cast %85 : vector<32xf32> to vector<32x1xf32>
    %cst_51 = arith.constant dense<0.000000e+00> : vector<32x1xf32>
    %87 = tpu.matmul %83, %86, %cst_51 {dimension_numbers = #tpu.dot_dimension_numbers<[1], [0], [0], [1], [0, 0, 1, 1], [], []>} : vector<32x32xf32>, vector<32x1xf32>, vector<32x1xf32> -> vector<32x1xf32>
    %cst_52 = arith.constant 9.99999974E-6 : f32
    %88 = vector.broadcast %cst_52 : f32 to vector<32x1xf32>
    %89 = arith.addf %87, %88 : vector<32x1xf32>
    %90 = math.rsqrt %89 : vector<32x1xf32>
    %91 = vector.broadcast %90 : vector<32x1xf32> to vector<32x256xf32>
    %92 = arith.mulf %82, %91 : vector<32x256xf32>
    %93 = tpu.concatenate %75, %92 in 1 : vector<32x256xf32>, vector<32x256xf32> -> vector<32x512xf32>
    %c17_i32_53 = arith.constant 17 : i32
    %94 = tpu.dynamic_rotate %93 by %c17_i32_53 dim 1 : vector<32x512xf32>, i32 -> vector<32x512xf32>
    %c0_54 = arith.constant 0 : index
    %c0_55 = arith.constant 0 : index
    %95 = vector.load %arg10[%c0_54, %c0_55] : memref<9x512xf32, #tpu.memory_space<vmem>>, vector<1x512xf32>
    %96 = vector.broadcast %95 : vector<1x512xf32> to vector<32x512xf32>
    %97 = arith.mulf %94, %96 : vector<32x512xf32>
    %c0_56 = arith.constant 0 : index
    %c0_57 = arith.constant 0 : index
    %98 = vector.load %arg13[%c0_56, %c0_57] : memref<288x512xf32, #tpu.memory_space<vmem>>, vector<32x512xf32>
    tpu.vector_store %arg13[%c0_56, %c0_57], %97 {strides = array<i32>} : memref<288x512xf32, #tpu.memory_space<vmem>>, vector<32x512xf32>,
    %c16_i32_58 = arith.constant 16 : i32
    %99 = tpu.dynamic_rotate %93 by %c16_i32_58 dim 1 : vector<32x512xf32>, i32 -> vector<32x512xf32>
    %c1_59 = arith.constant 1 : index
    %c0_60 = arith.constant 0 : index
    %100 = vector.load %arg10[%c1_59, %c0_60] : memref<9x512xf32, #tpu.memory_space<vmem>>, vector<1x512xf32>
    %101 = vector.broadcast %100 : vector<1x512xf32> to vector<32x512xf32>
    %102 = arith.mulf %99, %101 : vector<32x512xf32>
    %c32_61 = arith.constant 32 : index
    %c0_62 = arith.constant 0 : index
    %103 = vector.load %arg13[%c32_61, %c0_62] : memref<288x512xf32, #tpu.memory_space<vmem>>, vector<32x512xf32>
    tpu.vector_store %arg13[%c32_61, %c0_62], %102 {strides = array<i32>} : memref<288x512xf32, #tpu.memory_space<vmem>>, vector<32x512xf32>,
    %c15_i32_63 = arith.constant 15 : i32
    %104 = tpu.dynamic_rotate %93 by %c15_i32_63 dim 1 : vector<32x512xf32>, i32 -> vector<32x512xf32>
    %c2_64 = arith.constant 2 : index
    %c0_65 = arith.constant 0 : index
    %105 = vector.load %arg10[%c2_64, %c0_65] : memref<9x512xf32, #tpu.memory_space<vmem>>, vector<1x512xf32>
    %106 = vector.broadcast %105 : vector<1x512xf32> to vector<32x512xf32>
    %107 = arith.mulf %104, %106 : vector<32x512xf32>
    %c64_66 = arith.constant 64 : index
    %c0_67 = arith.constant 0 : index
    %108 = vector.load %arg13[%c64_66, %c0_67] : memref<288x512xf32, #tpu.memory_space<vmem>>, vector<32x512xf32>
    tpu.vector_store %arg13[%c64_66, %c0_67], %107 {strides = array<i32>} : memref<288x512xf32, #tpu.memory_space<vmem>>, vector<32x512xf32>,
    %c1_i32_68 = arith.constant 1 : i32
    %109 = tpu.dynamic_rotate %93 by %c1_i32_68 dim 1 : vector<32x512xf32>, i32 -> vector<32x512xf32>
    %c3_69 = arith.constant 3 : index
    %c0_70 = arith.constant 0 : index
    %110 = vector.load %arg10[%c3_69, %c0_70] : memref<9x512xf32, #tpu.memory_space<vmem>>, vector<1x512xf32>
    %111 = vector.broadcast %110 : vector<1x512xf32> to vector<32x512xf32>
    %112 = arith.mulf %109, %111 : vector<32x512xf32>
    %c96 = arith.constant 96 : index
    %c0_71 = arith.constant 0 : index
    %113 = vector.load %arg13[%c96, %c0_71] : memref<288x512xf32, #tpu.memory_space<vmem>>, vector<32x512xf32>
    tpu.vector_store %arg13[%c96, %c0_71], %112 {strides = array<i32>} : memref<288x512xf32, #tpu.memory_space<vmem>>, vector<32x512xf32>,
    %c128 = arith.constant 128 : index
    %c0_72 = arith.constant 0 : index
    %114 = vector.load %arg13[%c128, %c0_72] : memref<288x512xf32, #tpu.memory_space<vmem>>, vector<32x512xf32>
    tpu.vector_store %arg13[%c128, %c0_72], %93 {strides = array<i32>} : memref<288x512xf32, #tpu.memory_space<vmem>>, vector<32x512xf32>,
    %c511_i32_73 = arith.constant 511 : i32
    %115 = tpu.dynamic_rotate %93 by %c511_i32_73 dim 1 : vector<32x512xf32>, i32 -> vector<32x512xf32>
    %c5_74 = arith.constant 5 : index
    %c0_75 = arith.constant 0 : index
    %116 = vector.load %arg10[%c5_74, %c0_75] : memref<9x512xf32, #tpu.memory_space<vmem>>, vector<1x512xf32>
    %117 = vector.broadcast %116 : vector<1x512xf32> to vector<32x512xf32>
    %118 = arith.mulf %115, %117 : vector<32x512xf32>
    %c160 = arith.constant 160 : index
    %c0_76 = arith.constant 0 : index
    %119 = vector.load %arg13[%c160, %c0_76] : memref<288x512xf32, #tpu.memory_space<vmem>>, vector<32x512xf32>
    tpu.vector_store %arg13[%c160, %c0_76], %118 {strides = array<i32>} : memref<288x512xf32, #tpu.memory_space<vmem>>, vector<32x512xf32>,
    %c497_i32_77 = arith.constant 497 : i32
    %120 = tpu.dynamic_rotate %93 by %c497_i32_77 dim 1 : vector<32x512xf32>, i32 -> vector<32x512xf32>
    %c6_78 = arith.constant 6 : index
    %c0_79 = arith.constant 0 : index
    %121 = vector.load %arg10[%c6_78, %c0_79] : memref<9x512xf32, #tpu.memory_space<vmem>>, vector<1x512xf32>
    %122 = vector.broadcast %121 : vector<1x512xf32> to vector<32x512xf32>
    %123 = arith.mulf %120, %122 : vector<32x512xf32>
    %c192 = arith.constant 192 : index
    %c0_80 = arith.constant 0 : index
    %124 = vector.load %arg13[%c192, %c0_80] : memref<288x512xf32, #tpu.memory_space<vmem>>, vector<32x512xf32>
    tpu.vector_store %arg13[%c192, %c0_80], %123 {strides = array<i32>} : memref<288x512xf32, #tpu.memory_space<vmem>>, vector<32x512xf32>,
    %c496_i32_81 = arith.constant 496 : i32
    %125 = tpu.dynamic_rotate %93 by %c496_i32_81 dim 1 : vector<32x512xf32>, i32 -> vector<32x512xf32>
    %c7_82 = arith.constant 7 : index
    %c0_83 = arith.constant 0 : index
    %126 = vector.load %arg10[%c7_82, %c0_83] : memref<9x512xf32, #tpu.memory_space<vmem>>, vector<1x512xf32>
    %127 = vector.broadcast %126 : vector<1x512xf32> to vector<32x512xf32>
    %128 = arith.mulf %125, %127 : vector<32x512xf32>
    %c224 = arith.constant 224 : index
    %c0_84 = arith.constant 0 : index
    %129 = vector.load %arg13[%c224, %c0_84] : memref<288x512xf32, #tpu.memory_space<vmem>>, vector<32x512xf32>
    tpu.vector_store %arg13[%c224, %c0_84], %128 {strides = array<i32>} : memref<288x512xf32, #tpu.memory_space<vmem>>, vector<32x512xf32>,
    %c495_i32_85 = arith.constant 495 : i32
    %130 = tpu.dynamic_rotate %93 by %c495_i32_85 dim 1 : vector<32x512xf32>, i32 -> vector<32x512xf32>
    %c8_86 = arith.constant 8 : index
    %c0_87 = arith.constant 0 : index
    %131 = vector.load %arg10[%c8_86, %c0_87] : memref<9x512xf32, #tpu.memory_space<vmem>>, vector<1x512xf32>
    %132 = vector.broadcast %131 : vector<1x512xf32> to vector<32x512xf32>
    %133 = arith.mulf %130, %132 : vector<32x512xf32>
    %c256 = arith.constant 256 : index
    %c0_88 = arith.constant 0 : index
    %134 = vector.load %arg13[%c256, %c0_88] : memref<288x512xf32, #tpu.memory_space<vmem>>, vector<32x512xf32>
    tpu.vector_store %arg13[%c256, %c0_88], %133 {strides = array<i32>} : memref<288x512xf32, #tpu.memory_space<vmem>>, vector<32x512xf32>,
    %c0_89 = arith.constant 0 : index
    %c0_90 = arith.constant 0 : index
    %135 = vector.load %arg4[%c0_89, %c0_90] : memref<16x288xf32, #tpu.memory_space<vmem>>, vector<16x288xf32>
    %c0_91 = arith.constant 0 : index
    %c0_92 = arith.constant 0 : index
    %136 = vector.load %arg13[%c0_91, %c0_92] : memref<288x512xf32, #tpu.memory_space<vmem>>, vector<288x512xf32>
    %cst_93 = arith.constant dense<0.000000e+00> : vector<16x512xf32>
    %137 = tpu.matmul %135, %136, %cst_93 {dimension_numbers = #tpu.dot_dimension_numbers<[1], [0], [0], [1], [0, 0, 1, 1], [], []>} : vector<16x288xf32>, vector<288x512xf32>, vector<16x512xf32> -> vector<16x512xf32>
    %c0_94 = arith.constant 0 : index
    %c0_95 = arith.constant 0 : index
    %138 = vector.load %arg5[%c0_94, %c0_95] : memref<16x1xf32, #tpu.memory_space<vmem>>, vector<16x1xf32>
    %139 = vector.broadcast %138 : vector<16x1xf32> to vector<16x512xf32>
    %140 = arith.addf %137, %139 : vector<16x512xf32>
    %cst_96 = arith.constant 0.000000e+00 : f32
    %141 = vector.broadcast %cst_96 : f32 to vector<16x512xf32>
    %142 = arith.cmpf oge, %140, %141 : vector<16x512xf32>
    %cst_97 = arith.constant 0.00999999977 : f32
    %143 = vector.broadcast %cst_97 : f32 to vector<16x512xf32>
    %144 = arith.mulf %143, %140 : vector<16x512xf32>
    %145 = arith.select %142, %140, %144 : vector<16x512xi1>, vector<16x512xf32>
    %146 = vector.extract_strided_slice %145 {offsets = [0, 0], sizes = [16, 256], strides = [1, 1]} : vector<16x512xf32> to vector<16x256xf32>
    %c0_98 = arith.constant 0 : index
    %c0_99 = arith.constant 0 : index
    %147 = vector.load %arg9[%c0_98, %c0_99] : memref<16x16xf32, #tpu.memory_space<vmem>>, vector<16x16xf32>
    %cst_100 = arith.constant dense<0.000000e+00> : vector<16xf32>
    %148 = vector.multi_reduction <add>, %146, %cst_100 [1] : vector<16x256xf32> to vector<16xf32>
    %149 = vector.shape_cast %148 : vector<16xf32> to vector<16x1xf32>
    %cst_101 = arith.constant dense<0.000000e+00> : vector<16x1xf32>
    %150 = tpu.matmul %147, %149, %cst_101 {dimension_numbers = #tpu.dot_dimension_numbers<[1], [0], [0], [1], [0, 0, 1, 1], [], []>} : vector<16x16xf32>, vector<16x1xf32>, vector<16x1xf32> -> vector<16x1xf32>
    %151 = vector.broadcast %150 : vector<16x1xf32> to vector<16x256xf32>
    %152 = arith.subf %146, %151 : vector<16x256xf32>
    %c0_102 = arith.constant 0 : index
    %c0_103 = arith.constant 0 : index
    %153 = vector.load %arg9[%c0_102, %c0_103] : memref<16x16xf32, #tpu.memory_space<vmem>>, vector<16x16xf32>
    %154 = arith.mulf %152, %152 : vector<16x256xf32>
    %cst_104 = arith.constant dense<0.000000e+00> : vector<16xf32>
    %155 = vector.multi_reduction <add>, %154, %cst_104 [1] : vector<16x256xf32> to vector<16xf32>
    %156 = vector.shape_cast %155 : vector<16xf32> to vector<16x1xf32>
    %cst_105 = arith.constant dense<0.000000e+00> : vector<16x1xf32>
    %157 = tpu.matmul %153, %156, %cst_105 {dimension_numbers = #tpu.dot_dimension_numbers<[1], [0], [0], [1], [0, 0, 1, 1], [], []>} : vector<16x16xf32>, vector<16x1xf32>, vector<16x1xf32> -> vector<16x1xf32>
    %cst_106 = arith.constant 9.99999974E-6 : f32
    %158 = vector.broadcast %cst_106 : f32 to vector<16x1xf32>
    %159 = arith.addf %157, %158 : vector<16x1xf32>
    %160 = math.rsqrt %159 : vector<16x1xf32>
    %161 = vector.broadcast %160 : vector<16x1xf32> to vector<16x256xf32>
    %162 = arith.mulf %152, %161 : vector<16x256xf32>
    %163 = vector.extract_strided_slice %145 {offsets = [0, 256], sizes = [16, 256], strides = [1, 1]} : vector<16x512xf32> to vector<16x256xf32>
    %c0_107 = arith.constant 0 : index
    %c0_108 = arith.constant 0 : index
    %164 = vector.load %arg9[%c0_107, %c0_108] : memref<16x16xf32, #tpu.memory_space<vmem>>, vector<16x16xf32>
    %cst_109 = arith.constant dense<0.000000e+00> : vector<16xf32>
    %165 = vector.multi_reduction <add>, %163, %cst_109 [1] : vector<16x256xf32> to vector<16xf32>
    %166 = vector.shape_cast %165 : vector<16xf32> to vector<16x1xf32>
    %cst_110 = arith.constant dense<0.000000e+00> : vector<16x1xf32>
    %167 = tpu.matmul %164, %166, %cst_110 {dimension_numbers = #tpu.dot_dimension_numbers<[1], [0], [0], [1], [0, 0, 1, 1], [], []>} : vector<16x16xf32>, vector<16x1xf32>, vector<16x1xf32> -> vector<16x1xf32>
    %168 = vector.broadcast %167 : vector<16x1xf32> to vector<16x256xf32>
    %169 = arith.subf %163, %168 : vector<16x256xf32>
    %c0_111 = arith.constant 0 : index
    %c0_112 = arith.constant 0 : index
    %170 = vector.load %arg9[%c0_111, %c0_112] : memref<16x16xf32, #tpu.memory_space<vmem>>, vector<16x16xf32>
    %171 = arith.mulf %169, %169 : vector<16x256xf32>
    %cst_113 = arith.constant dense<0.000000e+00> : vector<16xf32>
    %172 = vector.multi_reduction <add>, %171, %cst_113 [1] : vector<16x256xf32> to vector<16xf32>
    %173 = vector.shape_cast %172 : vector<16xf32> to vector<16x1xf32>
    %cst_114 = arith.constant dense<0.000000e+00> : vector<16x1xf32>
    %174 = tpu.matmul %170, %173, %cst_114 {dimension_numbers = #tpu.dot_dimension_numbers<[1], [0], [0], [1], [0, 0, 1, 1], [], []>} : vector<16x16xf32>, vector<16x1xf32>, vector<16x1xf32> -> vector<16x1xf32>
    %cst_115 = arith.constant 9.99999974E-6 : f32
    %175 = vector.broadcast %cst_115 : f32 to vector<16x1xf32>
    %176 = arith.addf %174, %175 : vector<16x1xf32>
    %177 = math.rsqrt %176 : vector<16x1xf32>
    %178 = vector.broadcast %177 : vector<16x1xf32> to vector<16x256xf32>
    %179 = arith.mulf %169, %178 : vector<16x256xf32>
    %180 = tpu.concatenate %162, %179 in 1 : vector<16x256xf32>, vector<16x256xf32> -> vector<16x512xf32>
    %c17_i32_116 = arith.constant 17 : i32
    %181 = tpu.dynamic_rotate %180 by %c17_i32_116 dim 1 : vector<16x512xf32>, i32 -> vector<16x512xf32>
    %c0_117 = arith.constant 0 : index
    %c0_118 = arith.constant 0 : index
    %182 = vector.load %arg10[%c0_117, %c0_118] : memref<9x512xf32, #tpu.memory_space<vmem>>, vector<1x512xf32>
    %183 = vector.broadcast %182 : vector<1x512xf32> to vector<16x512xf32>
    %184 = arith.mulf %181, %183 : vector<16x512xf32>
    %c0_119 = arith.constant 0 : index
    %c0_120 = arith.constant 0 : index
    %185 = vector.load %arg13[%c0_119, %c0_120] : memref<288x512xf32, #tpu.memory_space<vmem>>, vector<16x512xf32>
    tpu.vector_store %arg13[%c0_119, %c0_120], %184 {strides = array<i32>} : memref<288x512xf32, #tpu.memory_space<vmem>>, vector<16x512xf32>,
    %c16_i32_121 = arith.constant 16 : i32
    %186 = tpu.dynamic_rotate %180 by %c16_i32_121 dim 1 : vector<16x512xf32>, i32 -> vector<16x512xf32>
    %c1_122 = arith.constant 1 : index
    %c0_123 = arith.constant 0 : index
    %187 = vector.load %arg10[%c1_122, %c0_123] : memref<9x512xf32, #tpu.memory_space<vmem>>, vector<1x512xf32>
    %188 = vector.broadcast %187 : vector<1x512xf32> to vector<16x512xf32>
    %189 = arith.mulf %186, %188 : vector<16x512xf32>
    %c16_124 = arith.constant 16 : index
    %c0_125 = arith.constant 0 : index
    %190 = vector.load %arg13[%c16_124, %c0_125] : memref<288x512xf32, #tpu.memory_space<vmem>>, vector<16x512xf32>
    tpu.vector_store %arg13[%c16_124, %c0_125], %189 {strides = array<i32>} : memref<288x512xf32, #tpu.memory_space<vmem>>, vector<16x512xf32>,
    %c15_i32_126 = arith.constant 15 : i32
    %191 = tpu.dynamic_rotate %180 by %c15_i32_126 dim 1 : vector<16x512xf32>, i32 -> vector<16x512xf32>
    %c2_127 = arith.constant 2 : index
    %c0_128 = arith.constant 0 : index
    %192 = vector.load %arg10[%c2_127, %c0_128] : memref<9x512xf32, #tpu.memory_space<vmem>>, vector<1x512xf32>
    %193 = vector.broadcast %192 : vector<1x512xf32> to vector<16x512xf32>
    %194 = arith.mulf %191, %193 : vector<16x512xf32>
    %c32_129 = arith.constant 32 : index
    %c0_130 = arith.constant 0 : index
    %195 = vector.load %arg13[%c32_129, %c0_130] : memref<288x512xf32, #tpu.memory_space<vmem>>, vector<16x512xf32>
    tpu.vector_store %arg13[%c32_129, %c0_130], %194 {strides = array<i32>} : memref<288x512xf32, #tpu.memory_space<vmem>>, vector<16x512xf32>,
    %c1_i32_131 = arith.constant 1 : i32
    %196 = tpu.dynamic_rotate %180 by %c1_i32_131 dim 1 : vector<16x512xf32>, i32 -> vector<16x512xf32>
    %c3_132 = arith.constant 3 : index
    %c0_133 = arith.constant 0 : index
    %197 = vector.load %arg10[%c3_132, %c0_133] : memref<9x512xf32, #tpu.memory_space<vmem>>, vector<1x512xf32>
    %198 = vector.broadcast %197 : vector<1x512xf32> to vector<16x512xf32>
    %199 = arith.mulf %196, %198 : vector<16x512xf32>
    %c48_134 = arith.constant 48 : index
    %c0_135 = arith.constant 0 : index
    %200 = vector.load %arg13[%c48_134, %c0_135] : memref<288x512xf32, #tpu.memory_space<vmem>>, vector<16x512xf32>
    tpu.vector_store %arg13[%c48_134, %c0_135], %199 {strides = array<i32>} : memref<288x512xf32, #tpu.memory_space<vmem>>, vector<16x512xf32>,
    %c64_136 = arith.constant 64 : index
    %c0_137 = arith.constant 0 : index
    %201 = vector.load %arg13[%c64_136, %c0_137] : memref<288x512xf32, #tpu.memory_space<vmem>>, vector<16x512xf32>
    tpu.vector_store %arg13[%c64_136, %c0_137], %180 {strides = array<i32>} : memref<288x512xf32, #tpu.memory_space<vmem>>, vector<16x512xf32>,
    %c511_i32_138 = arith.constant 511 : i32
    %202 = tpu.dynamic_rotate %180 by %c511_i32_138 dim 1 : vector<16x512xf32>, i32 -> vector<16x512xf32>
    %c5_139 = arith.constant 5 : index
    %c0_140 = arith.constant 0 : index
    %203 = vector.load %arg10[%c5_139, %c0_140] : memref<9x512xf32, #tpu.memory_space<vmem>>, vector<1x512xf32>
    %204 = vector.broadcast %203 : vector<1x512xf32> to vector<16x512xf32>
    %205 = arith.mulf %202, %204 : vector<16x512xf32>
    %c80 = arith.constant 80 : index
    %c0_141 = arith.constant 0 : index
    %206 = vector.load %arg13[%c80, %c0_141] : memref<288x512xf32, #tpu.memory_space<vmem>>, vector<16x512xf32>
    tpu.vector_store %arg13[%c80, %c0_141], %205 {strides = array<i32>} : memref<288x512xf32, #tpu.memory_space<vmem>>, vector<16x512xf32>,
    %c497_i32_142 = arith.constant 497 : i32
    %207 = tpu.dynamic_rotate %180 by %c497_i32_142 dim 1 : vector<16x512xf32>, i32 -> vector<16x512xf32>
    %c6_143 = arith.constant 6 : index
    %c0_144 = arith.constant 0 : index
    %208 = vector.load %arg10[%c6_143, %c0_144] : memref<9x512xf32, #tpu.memory_space<vmem>>, vector<1x512xf32>
    %209 = vector.broadcast %208 : vector<1x512xf32> to vector<16x512xf32>
    %210 = arith.mulf %207, %209 : vector<16x512xf32>
    %c96_145 = arith.constant 96 : index
    %c0_146 = arith.constant 0 : index
    %211 = vector.load %arg13[%c96_145, %c0_146] : memref<288x512xf32, #tpu.memory_space<vmem>>, vector<16x512xf32>
    tpu.vector_store %arg13[%c96_145, %c0_146], %210 {strides = array<i32>} : memref<288x512xf32, #tpu.memory_space<vmem>>, vector<16x512xf32>,
    %c496_i32_147 = arith.constant 496 : i32
    %212 = tpu.dynamic_rotate %180 by %c496_i32_147 dim 1 : vector<16x512xf32>, i32 -> vector<16x512xf32>
    %c7_148 = arith.constant 7 : index
    %c0_149 = arith.constant 0 : index
    %213 = vector.load %arg10[%c7_148, %c0_149] : memref<9x512xf32, #tpu.memory_space<vmem>>, vector<1x512xf32>
    %214 = vector.broadcast %213 : vector<1x512xf32> to vector<16x512xf32>
    %215 = arith.mulf %212, %214 : vector<16x512xf32>
    %c112 = arith.constant 112 : index
    %c0_150 = arith.constant 0 : index
    %216 = vector.load %arg13[%c112, %c0_150] : memref<288x512xf32, #tpu.memory_space<vmem>>, vector<16x512xf32>
    tpu.vector_store %arg13[%c112, %c0_150], %215 {strides = array<i32>} : memref<288x512xf32, #tpu.memory_space<vmem>>, vector<16x512xf32>,
    %c495_i32_151 = arith.constant 495 : i32
    %217 = tpu.dynamic_rotate %180 by %c495_i32_151 dim 1 : vector<16x512xf32>, i32 -> vector<16x512xf32>
    %c8_152 = arith.constant 8 : index
    %c0_153 = arith.constant 0 : index
    %218 = vector.load %arg10[%c8_152, %c0_153] : memref<9x512xf32, #tpu.memory_space<vmem>>, vector<1x512xf32>
    %219 = vector.broadcast %218 : vector<1x512xf32> to vector<16x512xf32>
    %220 = arith.mulf %217, %219 : vector<16x512xf32>
    %c128_154 = arith.constant 128 : index
    %c0_155 = arith.constant 0 : index
    %221 = vector.load %arg13[%c128_154, %c0_155] : memref<288x512xf32, #tpu.memory_space<vmem>>, vector<16x512xf32>
    tpu.vector_store %arg13[%c128_154, %c0_155], %220 {strides = array<i32>} : memref<288x512xf32, #tpu.memory_space<vmem>>, vector<16x512xf32>,
    %c0_156 = arith.constant 0 : index
    %c0_157 = arith.constant 0 : index
    %222 = vector.load %arg6[%c0_156, %c0_157] : memref<32x144xf32, #tpu.memory_space<vmem>>, vector<32x144xf32>
    %c0_158 = arith.constant 0 : index
    %c0_159 = arith.constant 0 : index
    %223 = vector.load %arg13[%c0_158, %c0_159] : memref<288x512xf32, #tpu.memory_space<vmem>>, vector<144x512xf32>
    %cst_160 = arith.constant dense<0.000000e+00> : vector<32x512xf32>
    %224 = tpu.matmul %222, %223, %cst_160 {dimension_numbers = #tpu.dot_dimension_numbers<[1], [0], [0], [1], [0, 0, 1, 1], [], []>} : vector<32x144xf32>, vector<144x512xf32>, vector<32x512xf32> -> vector<32x512xf32>
    %c0_161 = arith.constant 0 : index
    %c0_162 = arith.constant 0 : index
    %225 = vector.load %arg7[%c0_161, %c0_162] : memref<32x1xf32, #tpu.memory_space<vmem>>, vector<32x1xf32>
    %226 = vector.broadcast %225 : vector<32x1xf32> to vector<32x512xf32>
    %227 = arith.addf %224, %226 : vector<32x512xf32>
    %cst_163 = arith.constant 0.000000e+00 : f32
    %228 = vector.broadcast %cst_163 : f32 to vector<32x512xf32>
    %229 = arith.cmpf oge, %227, %228 : vector<32x512xf32>
    %cst_164 = arith.constant 0.00999999977 : f32
    %230 = vector.broadcast %cst_164 : f32 to vector<32x512xf32>
    %231 = arith.mulf %230, %227 : vector<32x512xf32>
    %232 = arith.select %229, %227, %231 : vector<32x512xi1>, vector<32x512xf32>
    %c0_165 = arith.constant 0 : index
    %c0_166 = arith.constant 0 : index
    %233 = vector.load %arg11[%c0_165, %c0_166] : memref<512x128xf32, #tpu.memory_space<vmem>>, vector<512x128xf32>
    %cst_167 = arith.constant dense<0.000000e+00> : vector<32x128xf32>
    %234 = tpu.matmul %232, %233, %cst_167 {dimension_numbers = #tpu.dot_dimension_numbers<[1], [0], [0], [1], [0, 0, 1, 1], [], []>} : vector<32x512xf32>, vector<512x128xf32>, vector<32x128xf32> -> vector<32x128xf32>
    %c0_168 = arith.constant 0 : index
    %c0_169 = arith.constant 0 : index
    %235 = vector.load %arg14[%c0_168, %c0_169] : memref<32x128xf32, #tpu.memory_space<vmem>>, vector<32x128xf32>
    %236 = arith.addf %234, %235 : vector<32x128xf32>
    %c0_170 = arith.constant 0 : index
    %c0_171 = arith.constant 0 : index
    %c0_172 = arith.constant 0 : index
    %237 = vector.load %arg12[%c0_170, %c0_171, %c0_172] : memref<1x32x128xf32, #tpu.memory_space<vmem>>, vector<1x32x128xf32>
    %238 = vector.shape_cast %237 : vector<1x32x128xf32> to vector<32x128xf32>
    %239 = vector.shape_cast %236 : vector<32x128xf32> to vector<1x32x128xf32>
    tpu.vector_store %arg12[%c0_170, %c0_171, %c0_172], %239 {strides = array<i32>} : memref<1x32x128xf32, #tpu.memory_space<vmem>>, vector<1x32x128xf32>,
    return
  }
  func.func @transform_0(%arg0: i32) -> (i32, i32, i32) {
    %c0_i32 = arith.constant 0 : i32
    %c0_i32_0 = arith.constant 0 : i32
    %c0_i32_1 = arith.constant 0 : i32
    return %arg0, %c0_i32, %c0_i32_0 : i32, i32, i32
  }
  func.func @transform_1(%arg0: i32) -> (i32, i32) {
    %c0_i32 = arith.constant 0 : i32
    %c0_i32_0 = arith.constant 0 : i32
    %c0_i32_1 = arith.constant 0 : i32
    return %c0_i32, %c0_i32_0 : i32, i32
  }
  func.func @transform_2(%arg0: i32) -> (i32, i32) {
    %c0_i32 = arith.constant 0 : i32
    %c0_i32_0 = arith.constant 0 : i32
    %c0_i32_1 = arith.constant 0 : i32
    return %c0_i32, %c0_i32_0 : i32, i32
  }
  func.func @transform_3(%arg0: i32) -> (i32, i32) {
    %c0_i32 = arith.constant 0 : i32
    %c0_i32_0 = arith.constant 0 : i32
    %c0_i32_1 = arith.constant 0 : i32
    return %c0_i32, %c0_i32_0 : i32, i32
  }
  func.func @transform_4(%arg0: i32) -> (i32, i32) {
    %c0_i32 = arith.constant 0 : i32
    %c0_i32_0 = arith.constant 0 : i32
    %c0_i32_1 = arith.constant 0 : i32
    return %c0_i32, %c0_i32_0 : i32, i32
  }
  func.func @transform_5(%arg0: i32) -> (i32, i32) {
    %c0_i32 = arith.constant 0 : i32
    %c0_i32_0 = arith.constant 0 : i32
    %c0_i32_1 = arith.constant 0 : i32
    return %c0_i32, %c0_i32_0 : i32, i32
  }
  func.func @transform_6(%arg0: i32) -> (i32, i32) {
    %c0_i32 = arith.constant 0 : i32
    %c0_i32_0 = arith.constant 0 : i32
    %c0_i32_1 = arith.constant 0 : i32
    return %c0_i32, %c0_i32_0 : i32, i32
  }
  func.func @transform_7(%arg0: i32) -> (i32, i32) {
    %c0_i32 = arith.constant 0 : i32
    %c0_i32_0 = arith.constant 0 : i32
    %c0_i32_1 = arith.constant 0 : i32
    return %c0_i32, %c0_i32_0 : i32, i32
  }
  func.func @transform_8(%arg0: i32) -> (i32, i32) {
    %c0_i32 = arith.constant 0 : i32
    %c0_i32_0 = arith.constant 0 : i32
    %c0_i32_1 = arith.constant 0 : i32
    return %c0_i32, %c0_i32_0 : i32, i32
  }
  func.func @transform_9(%arg0: i32) -> (i32, i32) {
    %c0_i32 = arith.constant 0 : i32
    %c0_i32_0 = arith.constant 0 : i32
    %c0_i32_1 = arith.constant 0 : i32
    return %c0_i32, %c0_i32_0 : i32, i32
  }
  func.func @transform_10(%arg0: i32) -> (i32, i32) {
    %c0_i32 = arith.constant 0 : i32
    %c0_i32_0 = arith.constant 0 : i32
    %c0_i32_1 = arith.constant 0 : i32
    return %c0_i32, %c0_i32_0 : i32, i32
  }
  func.func @transform_11(%arg0: i32) -> (i32, i32, i32) {
    %c0_i32 = arith.constant 0 : i32
    %c0_i32_0 = arith.constant 0 : i32
    %c0_i32_1 = arith.constant 0 : i32
    return %arg0, %c0_i32, %c0_i32_0 : i32, i32, i32
  }
}

</mosaic_0001>

<llo_original>
// kernel: strided_resnet_forward.1
$region0: #{strided_resnet_forward.1}
  #allocation0 [shape = 'u32[]', space=smem, size = 0x4, offset = 0x4, fixed_abs, tag = 'smem constant byte address 0x4 - core index']
  #allocation1 [shape = 'u32[144,128]{1,0:T(1,128)}', space=vmem, size = 0x12000, scoped, tag = 'internal scratch']
  #allocation2 [shape = 'f32[288,512]{1,0:T(8,128)}', space=vmem, size = 0x90000, scoped, tag = 'scratch operand']
  #allocation3 [shape = 'f32[32,128]{1,0:T(8,128)}', space=vmem, size = 0x4000, scoped, tag = 'scratch operand']
  %s0 = inlined_call_operand.vmem [shape: f32[2,8,512], index: 0, kind: input, shape index: {}]
  %s1 = inlined_call_operand.vmem [shape: f32[64,72], index: 1, kind: input, shape index: {}]
  %s2 = inlined_call_operand.vmem [shape: f32[64,1], index: 2, kind: input, shape index: {}]
  %s3 = inlined_call_operand.vmem [shape: f32[16,288], index: 3, kind: input, shape index: {}]
  %s4 = inlined_call_operand.vmem [shape: f32[16,1], index: 4, kind: input, shape index: {}]
  %s5 = inlined_call_operand.vmem [shape: f32[32,144], index: 5, kind: input, shape index: {}]
  %s6 = inlined_call_operand.vmem [shape: f32[32,1], index: 6, kind: input, shape index: {}]
  %s7 = inlined_call_operand.vmem [shape: f32[32,32], index: 7, kind: input, shape index: {}]
  %s8 = inlined_call_operand.vmem [shape: f32[16,16], index: 8, kind: input, shape index: {}]
  %s9 = inlined_call_operand.vmem [shape: f32[9,512], index: 9, kind: input, shape index: {}]
  %s10 = inlined_call_operand.vmem [shape: f32[512,128], index: 10, kind: input, shape index: {}]
  %s11 = inlined_call_operand.vmem [shape: f32[2,32,128], index: 11, kind: output, shape index: {}]
  %s12 = sld [smem:[#allocation0]]
  $region77: #{strided_resnet_forward.1} parent=0
    _
  %s14 = ssub.s32 1, %s12
  %s15 = scalar_select 0, %s14, %s12
  loop: start=0, step=1, limit=4
  $region2: #{strided_resnet_forward.1} parent=0 // loop_pre_header
    _
  $region3: #{strided_resnet_forward.1} parent=0 // loop_header
    %s17 = sphi 0, %s21
    %p18 = scmp.ge.s32.totalorder %s17, 4
    %s27 = sphi 0, %s29
    %s30 = sphi 0, %s27
    %s31 = sphi 0, %s30
    %s47 = sphi 0, %s31
    %s51 = sphi 0, %s51
    %s53 = sphi 0, %s51
    %s54 = sphi 0, %s53
    %s68 = sphi 0, %s54
    %s72 = sphi 0, %s72
    %s74 = sphi 0, %s72
    %s75 = sphi 0, %s74
    %s89 = sphi 0, %s75
    %s93 = sphi 0, %s93
    %s95 = sphi 0, %s93
    %s96 = sphi 0, %s95
    %s110 = sphi 0, %s96
    %s114 = sphi 0, %s114
    %s116 = sphi 0, %s114
    %s117 = sphi 0, %s116
    %s131 = sphi 0, %s117
    %s135 = sphi 0, %s135
    %s137 = sphi 0, %s135
    %s138 = sphi 0, %s137
    %s152 = sphi 0, %s138
    %s156 = sphi 0, %s156
    %s158 = sphi 0, %s156
    %s159 = sphi 0, %s158
    %s173 = sphi 0, %s159
    %s177 = sphi 0, %s177
    %s179 = sphi 0, %s177
    %s180 = sphi 0, %s179
    %s194 = sphi 0, %s180
    %s198 = sphi 0, %s198
    %s200 = sphi 0, %s198
    %s201 = sphi 0, %s200
    %s215 = sphi 0, %s201
    %s219 = sphi 0, %s219
    %s221 = sphi 0, %s219
    %s222 = sphi 0, %s221
    %s236 = sphi 0, %s222
    %s240 = sphi 0, %s240
    %s242 = sphi 0, %s240
    %s243 = sphi 0, %s242
    %s257 = sphi 0, %s243
    %s263 = sphi 0, %s265
    %s266 = sphi 0, %s263
    %s267 = sphi 0, %s266
    %s283 = sphi 0, %s267
  $region4: #{strided_resnet_forward.1} parent=0 // loop_header_branch
    %20 = sbr.rel (%p18) target = $region8
  $region5: #{strided_resnet_forward.1} parent=0 // loop_body
    %s22 = ssub.s32 %s17, 1
    %s23 = ssub.s32 %s17, 2
    %s24 = sadd.s32 %s17, 1
    %s25 = ssub.s32 %s17, %s24
    %p26 = scmp.eq.s32.totalorder %s25, 0
    %s28 = sadd.s32 %s27, 1
    %s29 = scalar_select %p26, %s27, %s28
    %p32 = pneg %p26
    %p33 = scmp.eq.s32.totalorder %s17, 1
    %p34 = por %p32, %p33
    %p35 = scmp.ne.s32.totalorder %s27, %s30
    %p36 = scmp.eq.s32.totalorder %s17, 0
    %p37 = por %p35, %p36
    %p38 = scmp.ne.s32.totalorder %s27, %s30
    %p39 = scmp.eq.s32.totalorder %s22, 1
    %p40 = por %p38, %p39
    %p41 = scmp.ne.s32.totalorder %s30, %s31
    %p42 = scmp.eq.s32.totalorder %s22, 0
    %p43 = por %p41, %p42
    %p44 = scmp.ne.s32.totalorder %s30, %s31
    %p45 = scmp.eq.s32.totalorder %s23, 1
    %p46 = por %p44, %p45
    %p48 = scmp.ne.s32.totalorder %s31, %s47
    %p49 = scmp.eq.s32.totalorder %s23, 0
    %p50 = por %p48, %p49
    %s52 = sadd.s32 %s51, 1
    %p55 = scmp.eq.s32.totalorder %s17, 1
    %p56 = scmp.ne.s32.totalorder %s51, %s53
    %p57 = scmp.eq.s32.totalorder %s17, 0
    %p58 = por %p56, %p57
    %p59 = scmp.ne.s32.totalorder %s51, %s53
    %p60 = scmp.eq.s32.totalorder %s22, 1
    %p61 = por %p59, %p60
    %p62 = scmp.ne.s32.totalorder %s53, %s54
    %p63 = scmp.eq.s32.totalorder %s22, 0
    %p64 = por %p62, %p63
    %p65 = scmp.ne.s32.totalorder %s53, %s54
    %p66 = scmp.eq.s32.totalorder %s23, 1
    %p67 = por %p65, %p66
    %p69 = scmp.ne.s32.totalorder %s54, %s68
    %p70 = scmp.eq.s32.totalorder %s23, 0
    %p71 = por %p69, %p70
    %s73 = sadd.s32 %s72, 1
    %p76 = scmp.eq.s32.totalorder %s17, 1
    %p77 = scmp.ne.s32.totalorder %s72, %s74
    %p78 = scmp.eq.s32.totalorder %s17, 0
    %p79 = por %p77, %p78
    %p80 = scmp.ne.s32.totalorder %s72, %s74
    %p81 = scmp.eq.s32.totalorder %s22, 1
    %p82 = por %p80, %p81
    %p83 = scmp.ne.s32.totalorder %s74, %s75
    %p84 = scmp.eq.s32.totalorder %s22, 0
    %p85 = por %p83, %p84
    %p86 = scmp.ne.s32.totalorder %s74, %s75
    %p87 = scmp.eq.s32.totalorder %s23, 1
    %p88 = por %p86, %p87
    %p90 = scmp.ne.s32.totalorder %s75, %s89
    %p91 = scmp.eq.s32.totalorder %s23, 0
    %p92 = por %p90, %p91
    %s94 = sadd.s32 %s93, 1
    %p97 = scmp.eq.s32.totalorder %s17, 1
    %p98 = scmp.ne.s32.totalorder %s93, %s95
    %p99 = scmp.eq.s32.totalorder %s17, 0
    %p100 = por %p98, %p99
    %p101 = scmp.ne.s32.totalorder %s93, %s95
    %p102 = scmp.eq.s32.totalorder %s22, 1
    %p103 = por %p101, %p102
    %p104 = scmp.ne.s32.totalorder %s95, %s96
    %p105 = scmp.eq.s32.totalorder %s22, 0
    %p106 = por %p104, %p105
    %p107 = scmp.ne.s32.totalorder %s95, %s96
    %p108 = scmp.eq.s32.totalorder %s23, 1
    %p109 = por %p107, %p108
    %p111 = scmp.ne.s32.totalorder %s96, %s110
    %p112 = scmp.eq.s32.totalorder %s23, 0
    %p113 = por %p111, %p112
    %s115 = sadd.s32 %s114, 1
    %p118 = scmp.eq.s32.totalorder %s17, 1
    %p119 = scmp.ne.s32.totalorder %s114, %s116
    %p120 = scmp.eq.s32.totalorder %s17, 0
    %p121 = por %p119, %p120
    %p122 = scmp.ne.s32.totalorder %s114, %s116
    %p123 = scmp.eq.s32.totalorder %s22, 1
    %p124 = por %p122, %p123
    %p125 = scmp.ne.s32.totalorder %s116, %s117
    %p126 = scmp.eq.s32.totalorder %s22, 0
    %p127 = por %p125, %p126
    %p128 = scmp.ne.s32.totalorder %s116, %s117
    %p129 = scmp.eq.s32.totalorder %s23, 1
    %p130 = por %p128, %p129
    %p132 = scmp.ne.s32.totalorder %s117, %s131
    %p133 = scmp.eq.s32.totalorder %s23, 0
    %p134 = por %p132, %p133
    %s136 = sadd.s32 %s135, 1
    %p139 = scmp.eq.s32.totalorder %s17, 1
    %p140 = scmp.ne.s32.totalorder %s135, %s137
    %p141 = scmp.eq.s32.totalorder %s17, 0
    %p142 = por %p140, %p141
    %p143 = scmp.ne.s32.totalorder %s135, %s137
    %p144 = scmp.eq.s32.totalorder %s22, 1
    %p145 = por %p143, %p144
    %p146 = scmp.ne.s32.totalorder %s137, %s138
    %p147 = scmp.eq.s32.totalorder %s22, 0
    %p148 = por %p146, %p147
    %p149 = scmp.ne.s32.totalorder %s137, %s138
    %p150 = scmp.eq.s32.totalorder %s23, 1
    %p151 = por %p149, %p150
    %p153 = scmp.ne.s32.totalorder %s138, %s152
    %p154 = scmp.eq.s32.totalorder %s23, 0
    %p155 = por %p153, %p154
    %s157 = sadd.s32 %s156, 1
    %p160 = scmp.eq.s32.totalorder %s17, 1
    %p161 = scmp.ne.s32.totalorder %s156, %s158
    %p162 = scmp.eq.s32.totalorder %s17, 0
    %p163 = por %p161, %p162
    %p164 = scmp.ne.s32.totalorder %s156, %s158
    %p165 = scmp.eq.s32.totalorder %s22, 1
    %p166 = por %p164, %p165
    %p167 = scmp.ne.s32.totalorder %s158, %s159
    %p168 = scmp.eq.s32.totalorder %s22, 0
    %p169 = por %p167, %p168
    %p170 = scmp.ne.s32.totalorder %s158, %s159
    %p171 = scmp.eq.s32.totalorder %s23, 1
    %p172 = por %p170, %p171
    %p174 = scmp.ne.s32.totalorder %s159, %s173
    %p175 = scmp.eq.s32.totalorder %s23, 0
    %p176 = por %p174, %p175
    %s178 = sadd.s32 %s177, 1
    %p181 = scmp.eq.s32.totalorder %s17, 1
    %p182 = scmp.ne.s32.totalorder %s177, %s179
    %p183 = scmp.eq.s32.totalorder %s17, 0
    %p184 = por %p182, %p183
    %p185 = scmp.ne.s32.totalorder %s177, %s179
    %p186 = scmp.eq.s32.totalorder %s22, 1
    %p187 = por %p185, %p186
    %p188 = scmp.ne.s32.totalorder %s179, %s180
    %p189 = scmp.eq.s32.totalorder %s22, 0
    %p190 = por %p188, %p189
    %p191 = scmp.ne.s32.totalorder %s179, %s180
    %p192 = scmp.eq.s32.totalorder %s23, 1
    %p193 = por %p191, %p192
    %p195 = scmp.ne.s32.totalorder %s180, %s194
    %p196 = scmp.eq.s32.totalorder %s23, 0
    %p197 = por %p195, %p196
    %s199 = sadd.s32 %s198, 1
    %p202 = scmp.eq.s32.totalorder %s17, 1
    %p203 = scmp.ne.s32.totalorder %s198, %s200
    %p204 = scmp.eq.s32.totalorder %s17, 0
    %p205 = por %p203, %p204
    %p206 = scmp.ne.s32.totalorder %s198, %s200
    %p207 = scmp.eq.s32.totalorder %s22, 1
    %p208 = por %p206, %p207
    %p209 = scmp.ne.s32.totalorder %s200, %s201
    %p210 = scmp.eq.s32.totalorder %s22, 0
    %p211 = por %p209, %p210
    %p212 = scmp.ne.s32.totalorder %s200, %s201
    %p213 = scmp.eq.s32.totalorder %s23, 1
    %p214 = por %p212, %p213
    %p216 = scmp.ne.s32.totalorder %s201, %s215
    %p217 = scmp.eq.s32.totalorder %s23, 0
    %p218 = por %p216, %p217
    %s220 = sadd.s32 %s219, 1
    %p223 = scmp.eq.s32.totalorder %s17, 1
    %p224 = scmp.ne.s32.totalorder %s219, %s221
    %p225 = scmp.eq.s32.totalorder %s17, 0
    %p226 = por %p224, %p225
    %p227 = scmp.ne.s32.totalorder %s219, %s221
    %p228 = scmp.eq.s32.totalorder %s22, 1
    %p229 = por %p227, %p228
    %p230 = scmp.ne.s32.totalorder %s221, %s222
    %p231 = scmp.eq.s32.totalorder %s22, 0
    %p232 = por %p230, %p231
    %p233 = scmp.ne.s32.totalorder %s221, %s222
    %p234 = scmp.eq.s32.totalorder %s23, 1
    %p235 = por %p233, %p234
    %p237 = scmp.ne.s32.totalorder %s222, %s236
    %p238 = scmp.eq.s32.totalorder %s23, 0
    %p239 = por %p237, %p238
    %s241 = sadd.s32 %s240, 1
    %p244 = scmp.eq.s32.totalorder %s17, 1
    %p245 = scmp.ne.s32.totalorder %s240, %s242
    %p246 = scmp.eq.s32.totalorder %s17, 0
    %p247 = por %p245, %p246
    %p248 = scmp.ne.s32.totalorder %s240, %s242
    %p249 = scmp.eq.s32.totalorder %s22, 1
    %p250 = por %p248, %p249
    %p251 = scmp.ne.s32.totalorder %s242, %s243
    %p252 = scmp.eq.s32.totalorder %s22, 0
    %p253 = por %p251, %p252
    %p254 = scmp.ne.s32.totalorder %s242, %s243
    %p255 = scmp.eq.s32.totalorder %s23, 1
    %p256 = por %p254, %p255
    %p258 = scmp.ne.s32.totalorder %s243, %s257
    %p259 = scmp.eq.s32.totalorder %s23, 0
    %p260 = por %p258, %p259
    %s261 = ssub.s32 %s17, %s24
    %p262 = scmp.eq.s32.totalorder %s261, 0
    %s264 = sadd.s32 %s263, 1
    %s265 = scalar_select %p262, %s263, %s264
    %p268 = pneg %p262
    %p269 = scmp.eq.s32.totalorder %s17, 1
    %p270 = por %p268, %p269
    %p271 = scmp.ne.s32.totalorder %s263, %s266
    %p272 = scmp.eq.s32.totalorder %s17, 0
    %p273 = por %p271, %p272
    %p274 = scmp.ne.s32.totalorder %s263, %s266
    %p275 = scmp.eq.s32.totalorder %s22, 1
    %p276 = por %p274, %p275
    %p277 = scmp.ne.s32.totalorder %s266, %s267
    %p278 = scmp.eq.s32.totalorder %s22, 0
    %p279 = por %p277, %p278
    %p280 = scmp.ne.s32.totalorder %s266, %s267
    %p281 = scmp.eq.s32.totalorder %s23, 1
    %p282 = por %p280, %p281
    %p284 = scmp.ne.s32.totalorder %s267, %s283
    %p285 = scmp.eq.s32.totalorder %s23, 0
    %p286 = por %p284, %p285
    %p287 = scmp.le.s32.totalorder 1, %s17
    %p288 = scmp.lt.s32.totalorder %s17, 3
    %p289 = pnand %p287, %p288
    %p290 = pneg %p289
    // Predicated region
    $region9: #{strided_resnet_forward.1} parent=5 // pred_check
      _
    $region10: #{strided_resnet_forward.1} parent=5 // pred_check_branch
      %292 = sbr.rel (%p289) target = $region12
    $region11: #{strided_resnet_forward.1} parent=5 // pred_region
      %s293 = ssub.s32 %s17, 1
      // Predicated region
      $region13: #{strided_resnet_forward.1} parent=11 // pred_check
        %p294 = pneg %p64
      $region14: #{strided_resnet_forward.1} parent=11 // pred_check_branch
        %296 = sbr.rel (%p294) target = $region16
      $region15: #{strided_resnet_forward.1} parent=11 // pred_region
        _
      $region16: #{strided_resnet_forward.1} parent=11 // pred_fallthru
        _
      // Predicated region
      $region17: #{strided_resnet_forward.1} parent=11 // pred_check
        %p297 = pneg %p85
      $region18: #{strided_resnet_forward.1} parent=11 // pred_check_branch
        %299 = sbr.rel (%p297) target = $region20
      $region19: #{strided_resnet_forward.1} parent=11 // pred_region
        _
      $region20: #{strided_resnet_forward.1} parent=11 // pred_fallthru
        _
      // Predicated region
      $region21: #{strided_resnet_forward.1} parent=11 // pred_check
        %p300 = pneg %p106
      $region22: #{strided_resnet_forward.1} parent=11 // pred_check_branch
        %302 = sbr.rel (%p300) target = $region24
      $region23: #{strided_resnet_forward.1} parent=11 // pred_region
        _
      $region24: #{strided_resnet_forward.1} parent=11 // pred_fallthru
        _
      // Predicated region
      $region25: #{strided_resnet_forward.1} parent=11 // pred_check
        %p303 = pneg %p127
      $region26: #{strided_resnet_forward.1} parent=11 // pred_check_branch
        %305 = sbr.rel (%p303) target = $region28
      $region27: #{strided_resnet_forward.1} parent=11 // pred_region
        _
      $region28: #{strided_resnet_forward.1} parent=11 // pred_fallthru
        _
      // Predicated region
      $region29: #{strided_resnet_forward.1} parent=11 // pred_check
        %p306 = pneg %p148
      $region30: #{strided_resnet_forward.1} parent=11 // pred_check_branch
        %308 = sbr.rel (%p306) target = $region32
      $region31: #{strided_resnet_forward.1} parent=11 // pred_region
        _
      $region32: #{strided_resnet_forward.1} parent=11 // pred_fallthru
        _
      // Predicated region
      $region33: #{strided_resnet_forward.1} parent=11 // pred_check
        %p309 = pneg %p169
      $region34: #{strided_resnet_forward.1} parent=11 // pred_check_branch
        %311 = sbr.rel (%p309) target = $region36
      $region35: #{strided_resnet_forward.1} parent=11 // pred_region
        _
      $region36: #{strided_resnet_forward.1} parent=11 // pred_fallthru
        _
      // Predicated region
      $region37: #{strided_resnet_forward.1} parent=11 // pred_check
        %p312 = pneg %p190
      $region38: #{strided_resnet_forward.1} parent=11 // pred_check_branch
        %314 = sbr.rel (%p312) target = $region40
      $region39: #{strided_resnet_forward.1} parent=11 // pred_region
        _
      $region40: #{strided_resnet_forward.1} parent=11 // pred_fallthru
        _
      // Predicated region
      $region41: #{strided_resnet_forward.1} parent=11 // pred_check
        %p315 = pneg %p211
      $region42: #{strided_resnet_forward.1} parent=11 // pred_check_branch
        %317 = sbr.rel (%p315) target = $region44
      $region43: #{strided_resnet_forward.1} parent=11 // pred_region
        _
      $region44: #{strided_resnet_forward.1} parent=11 // pred_fallthru
        _
      // Predicated region
      $region45: #{strided_resnet_forward.1} parent=11 // pred_check
        %p318 = pneg %p232
      $region46: #{strided_resnet_forward.1} parent=11 // pred_check_branch
        %320 = sbr.rel (%p318) target = $region48
      $region47: #{strided_resnet_forward.1} parent=11 // pred_region
        _
      $region48: #{strided_resnet_forward.1} parent=11 // pred_fallthru
        _
      // Predicated region
      $region49: #{strided_resnet_forward.1} parent=11 // pred_check
        %p321 = pneg %p253
      $region50: #{strided_resnet_forward.1} parent=11 // pred_check_branch
        %323 = sbr.rel (%p321) target = $region52
      $region51: #{strided_resnet_forward.1} parent=11 // pred_region
        _
      $region52: #{strided_resnet_forward.1} parent=11 // pred_fallthru
        _
    $region12: #{strided_resnet_forward.1} parent=5 // pred_fallthru
      _
    %p324 = scmp.lt.s32.totalorder %s17, 2
    // Predicated region
    $region53: #{strided_resnet_forward.1} parent=5 // pred_check
      %p325 = pneg %p324
    $region54: #{strided_resnet_forward.1} parent=5 // pred_check_branch
      %327 = sbr.rel (%p325) target = $region56
    $region55: #{strided_resnet_forward.1} parent=5 // pred_region
      // Predicated region
      $region57: #{strided_resnet_forward.1} parent=55 // pred_check
        %p328 = pneg %p37
      $region58: #{strided_resnet_forward.1} parent=55 // pred_check_branch
        %330 = sbr.rel (%p328) target = $region60
      $region59: #{strided_resnet_forward.1} parent=55 // pred_region
        %p331 = scmp.lt.s32.totalorder %s17, 1
        %s332 = scalar_select %p331, %s17, 1
        %s333 = smul.addr %s332, 4
        %s334 = smul.addr %s333, 8
        %s335 = scalar_lea.vmem %s0, %s334
      $region60: #{strided_resnet_forward.1} parent=55 // pred_fallthru
        _
    $region56: #{strided_resnet_forward.1} parent=5 // pred_fallthru
      _
    %p336 = scmp.le.s32.totalorder 1, %s17
    %p337 = scmp.lt.s32.totalorder %s17, 3
    %p338 = pnand %p336, %p337
    %p339 = pneg %p338
    // Predicated region
    $region61: #{strided_resnet_forward.1} parent=5 // pred_check
      _
    $region62: #{strided_resnet_forward.1} parent=5 // pred_check_branch
      %341 = sbr.rel (%p338) target = $region64
    $region63: #{strided_resnet_forward.1} parent=5 // pred_region
      %s342 = ssub.s32 %s17, 1
      %p343 = scmp.lt.s32.totalorder %s22, 1
      %s344 = scalar_select %p343, %s22, 1
      %s345 = smul.addr %s344, 4
      %s346 = smul.addr %s345, 8
      %s347 = scalar_lea.vmem %s0, %s346
      %p348 = pneg %p43
      %p349 = pneg %p40
      %p350 = pneg %p64
      %p351 = pneg %p61
      %p352 = pneg %p85
      %p353 = pneg %p82
      %p354 = pneg %p106
      %p355 = pneg %p103
      %p356 = pneg %p127
      %p357 = pneg %p124
      %p358 = pneg %p148
      %p359 = pneg %p145
      %p360 = pneg %p169
      %p361 = pneg %p166
      %p362 = pneg %p190
      %p363 = pneg %p187
      %p364 = pneg %p211
      %p365 = pneg %p208
      %p366 = pneg %p232
      %p367 = pneg %p229
      %p368 = pneg %p253
      %p369 = pneg %p250
      %p370 = pneg %p279
      %p371 = pneg %p276
      %p372 = scmp.lt.s32.totalorder %s22, 1
      %s373 = scalar_select %p372, %s22, 1
      %s374 = smul.addr %s373, 4
      %s375 = smul.addr %s374, 8
      %s376 = scalar_lea.vmem %s11, %s375
      %p377 = scmp.lt.s32.totalorder %s22, 1
      %s378 = scalar_select %p377, %s22, 1
      %s379 = smul.addr %s378, 4
      %s380 = smul.addr %s379, 8
      %s381 = scalar_lea.vmem %s0, %s380
      %p382 = scmp.lt.s32.totalorder %s22, 1
      %s383 = scalar_select %p382, %s22, 1
      %s384 = smul.addr %s383, 4
      %s385 = smul.addr %s384, 8
      %s386 = scalar_lea.vmem %s11, %s385
      %v387 = vld [vmem:[%s381] sm:$0xff]
      %v388 = vld [vmem:[%s381 + $0x8] sm:$0xff]
      %v389 = vld [vmem:[%s381 + $0x10] sm:$0xff]
      %v390 = vld [vmem:[%s381 + $0x18] sm:$0xff]
      %391 = vrot.lane.b32.xlu0 %v387, 17
      %v392 = vpop.permute.xlu0 %391
      %393 = vrot.lane.b32.xlu0 %v388, 17
      %v394 = vpop.permute.xlu0 %393
      %395 = vrot.lane.b32.xlu0 %v389, 17
      %v396 = vpop.permute.xlu0 %395
      %397 = vrot.lane.b32.xlu0 %v390, 17
      %v398 = vpop.permute.xlu0 %397
      %v399 = vlaneseq
      %v400 = vand.u32 %v399, 127
      %vm401 = vcmp.lt.s32.totalorder %v400, 17
      %v402 = vsel %vm401, %v396, %v398
      %v403 = vsel %vm401, %v394, %v396
      %v404 = vsel %vm401, %v392, %v394
      %v405 = vsel %vm401, %v398, %v392
      %v406 = vld [vmem:[%s9] ss:$8 sm:$0xf]
      %v408 = vlaneseq
      %v409 = vshrl.u32 %v408, 7
      %v410 = vsub.s32 0, %v409
      %v411 = vrot.slane %v406, %v410
      %v412 = vlaneseq
      %v413 = vshrl.u32 %v412, 7
      %v414 = vsub.s32 1, %v413
      %v415 = vrot.slane %v406, %v414
      %v416 = vlaneseq
      %v417 = vshrl.u32 %v416, 7
      %v418 = vsub.s32 2, %v417
      %v419 = vrot.slane %v406, %v418
      %v420 = vlaneseq
      %v421 = vshrl.u32 %v420, 7
      %v422 = vsub.s32 3, %v421
      %v423 = vrot.slane %v406, %v422
      %v428 = vmul.f32 %v405, %v411
      %v429 = vmul.f32 %v404, %v415
      %v430 = vmul.f32 %v403, %v419
      %v431 = vmul.f32 %v402, %v423
      %432 = vst [vmem:[#allocation2] sm:$0xff] %v428
      %433 = vst [vmem:[#allocation2 + $0x8] sm:$0xff] %v429
      %434 = vst [vmem:[#allocation2 + $0x10] sm:$0xff] %v430
      %435 = vst [vmem:[#allocation2 + $0x18] sm:$0xff] %v431
      %436 = vrot.lane.b32.xlu0 %v387, 16
      %v437 = vpop.permute.xlu0 %436
      %438 = vrot.lane.b32.xlu0 %v388, 16
      %v439 = vpop.permute.xlu0 %438
      %440 = vrot.lane.b32.xlu0 %v389, 16
      %v441 = vpop.permute.xlu0 %440
      %442 = vrot.lane.b32.xlu0 %v390, 16
      %v443 = vpop.permute.xlu0 %442
      %vm444 = vcmp.lt.s32.totalorder %v400, 16
      %v445 = vsel %vm444, %v441, %v443
      %v446 = vsel %vm444, %v439, %v441
      %v447 = vsel %vm444, %v437, %v439
      %v448 = vsel %vm444, %v443, %v437
      %s449 = scalar_lea.vmem %s9, 1
      %v450 = vld [vmem:[%s449] ss:$8 sm:$0xf]
      %v452 = vlaneseq
      %v453 = vshrl.u32 %v452, 7
      %v454 = vsub.s32 0, %v453
      %v455 = vrot.slane %v450, %v454
      %v456 = vlaneseq
      %v457 = vshrl.u32 %v456, 7
      %v458 = vsub.s32 1, %v457
      %v459 = vrot.slane %v450, %v458
      %v460 = vlaneseq
      %v461 = vshrl.u32 %v460, 7
      %v462 = vsub.s32 2, %v461
      %v463 = vrot.slane %v450, %v462
      %v464 = vlaneseq
      %v465 = vshrl.u32 %v464, 7
      %v466 = vsub.s32 3, %v465
      %v467 = vrot.slane %v450, %v466
      %v472 = vmul.f32 %v448, %v455
      %v473 = vmul.f32 %v447, %v459
      %v474 = vmul.f32 %v446, %v463
      %v475 = vmul.f32 %v445, %v467
      %476 = vst [vmem:[#allocation2 + $0x20] sm:$0xff] %v472
      %477 = vst [vmem:[#allocation2 + $0x28] sm:$0xff] %v473
      %478 = vst [vmem:[#allocation2 + $0x30] sm:$0xff] %v474
      %479 = vst [vmem:[#allocation2 + $0x38] sm:$0xff] %v475
      %480 = vrot.lane.b32.xlu0 %v387, 15
      %v481 = vpop.permute.xlu0 %480
      %482 = vrot.lane.b32.xlu0 %v388, 15
      %v483 = vpop.permute.xlu0 %482
      %484 = vrot.lane.b32.xlu0 %v389, 15
      %v485 = vpop.permute.xlu0 %484
      %486 = vrot.lane.b32.xlu0 %v390, 15
      %v487 = vpop.permute.xlu0 %486
      %vm488 = vcmp.lt.s32.totalorder %v400, 15
      %v489 = vsel %vm488, %v485, %v487
      %v490 = vsel %vm488, %v483, %v485
      %v491 = vsel %vm488, %v481, %v483
      %v492 = vsel %vm488, %v487, %v481
      %s493 = scalar_lea.vmem %s9, 2
      %v494 = vld [vmem:[%s493] ss:$8 sm:$0xf]
      %v496 = vlaneseq
      %v497 = vshrl.u32 %v496, 7
      %v498 = vsub.s32 0, %v497
      %v499 = vrot.slane %v494, %v498
      %v500 = vlaneseq
      %v501 = vshrl.u32 %v500, 7
      %v502 = vsub.s32 1, %v501
      %v503 = vrot.slane %v494, %v502
      %v504 = vlaneseq
      %v505 = vshrl.u32 %v504, 7
      %v506 = vsub.s32 2, %v505
      %v507 = vrot.slane %v494, %v506
      %v508 = vlaneseq
      %v509 = vshrl.u32 %v508, 7
      %v510 = vsub.s32 3, %v509
      %v511 = vrot.slane %v494, %v510
      %v516 = vmul.f32 %v492, %v499
      %v517 = vmul.f32 %v491, %v503
      %v518 = vmul.f32 %v490, %v507
      %v519 = vmul.f32 %v489, %v511
      %520 = vst [vmem:[#allocation2 + $0x40] sm:$0xff] %v516
      %521 = vst [vmem:[#allocation2 + $0x48] sm:$0xff] %v517
      %522 = vst [vmem:[#allocation2 + $0x50] sm:$0xff] %v518
      %523 = vst [vmem:[#allocation2 + $0x58] sm:$0xff] %v519
      %524 = vrot.lane.b32.xlu0 %v387, 1
      %v525 = vpop.permute.xlu0 %524
      %526 = vrot.lane.b32.xlu0 %v388, 1
      %v527 = vpop.permute.xlu0 %526
      %528 = vrot.lane.b32.xlu0 %v389, 1
      %v529 = vpop.permute.xlu0 %528
      %530 = vrot.lane.b32.xlu0 %v390, 1
      %v531 = vpop.permute.xlu0 %530
      %vm532 = vcmp.lt.s32.totalorder %v400, 1
      %v533 = vsel %vm532, %v529, %v531
      %v534 = vsel %vm532, %v527, %v529
      %v535 = vsel %vm532, %v525, %v527
      %v536 = vsel %vm532, %v531, %v525
      %s537 = scalar_lea.vmem %s9, 3
      %v538 = vld [vmem:[%s537] ss:$8 sm:$0xf]
      %v540 = vlaneseq
      %v541 = vshrl.u32 %v540, 7
      %v542 = vsub.s32 0, %v541
      %v543 = vrot.slane %v538, %v542
      %v544 = vlaneseq
      %v545 = vshrl.u32 %v544, 7
      %v546 = vsub.s32 1, %v545
      %v547 = vrot.slane %v538, %v546
      %v548 = vlaneseq
      %v549 = vshrl.u32 %v548, 7
      %v550 = vsub.s32 2, %v549
      %v551 = vrot.slane %v538, %v550
      %v552 = vlaneseq
      %v553 = vshrl.u32 %v552, 7
      %v554 = vsub.s32 3, %v553
      %v555 = vrot.slane %v538, %v554
      %v560 = vmul.f32 %v536, %v543
      %v561 = vmul.f32 %v535, %v547
      %v562 = vmul.f32 %v534, %v551
      %v563 = vmul.f32 %v533, %v555
      %564 = vst [vmem:[#allocation2 + $0x60] sm:$0xff] %v560
      %565 = vst [vmem:[#allocation2 + $0x68] sm:$0xff] %v561
      %566 = vst [vmem:[#allocation2 + $0x70] sm:$0xff] %v562
      %567 = vst [vmem:[#allocation2 + $0x78] sm:$0xff] %v563
      %568 = vst [vmem:[#allocation2 + $0x80] sm:$0xff] %v387
      %569 = vst [vmem:[#allocation2 + $0x88] sm:$0xff] %v388
      %570 = vst [vmem:[#allocation2 + $0x90] sm:$0xff] %v389
      %571 = vst [vmem:[#allocation2 + $0x98] sm:$0xff] %v390
      %572 = vrot.lane.b32.xlu0 %v387, 127
      %v573 = vpop.permute.xlu0 %572
      %574 = vrot.lane.b32.xlu0 %v388, 127
      %v575 = vpop.permute.xlu0 %574
      %576 = vrot.lane.b32.xlu0 %v389, 127
      %v577 = vpop.permute.xlu0 %576
      %578 = vrot.lane.b32.xlu0 %v390, 127
      %v579 = vpop.permute.xlu0 %578
      %vm580 = vcmp.lt.s32.totalorder %v400, 127
      %v581 = vsel %vm580, %v577, %v579
      %v582 = vsel %vm580, %v575, %v577
      %v583 = vsel %vm580, %v573, %v575
      %v584 = vsel %vm580, %v579, %v573
      %s585 = scalar_lea.vmem %s9, 5
      %v586 = vld [vmem:[%s585] ss:$8 sm:$0xf]
      %v588 = vlaneseq
      %v589 = vshrl.u32 %v588, 7
      %v590 = vsub.s32 0, %v589
      %v591 = vrot.slane %v586, %v590
      %v592 = vlaneseq
      %v593 = vshrl.u32 %v592, 7
      %v594 = vsub.s32 1, %v593
      %v595 = vrot.slane %v586, %v594
      %v596 = vlaneseq
      %v597 = vshrl.u32 %v596, 7
      %v598 = vsub.s32 2, %v597
      %v599 = vrot.slane %v586, %v598
      %v600 = vlaneseq
      %v601 = vshrl.u32 %v600, 7
      %v602 = vsub.s32 3, %v601
      %v603 = vrot.slane %v586, %v602
      %v608 = vmul.f32 %v583, %v591
      %v609 = vmul.f32 %v582, %v595
      %v610 = vmul.f32 %v581, %v599
      %v611 = vmul.f32 %v584, %v603
      %612 = vst [vmem:[#allocation2 + $0xa0] sm:$0xff] %v608
      %613 = vst [vmem:[#allocation2 + $0xa8] sm:$0xff] %v609
      %614 = vst [vmem:[#allocation2 + $0xb0] sm:$0xff] %v610
      %615 = vst [vmem:[#allocation2 + $0xb8] sm:$0xff] %v611
      %616 = vrot.lane.b32.xlu0 %v387, 113
      %v617 = vpop.permute.xlu0 %616
      %618 = vrot.lane.b32.xlu0 %v388, 113
      %v619 = vpop.permute.xlu0 %618
      %620 = vrot.lane.b32.xlu0 %v389, 113
      %v621 = vpop.permute.xlu0 %620
      %622 = vrot.lane.b32.xlu0 %v390, 113
      %v623 = vpop.permute.xlu0 %622
      %vm624 = vcmp.lt.s32.totalorder %v400, 113
      %v625 = vsel %vm624, %v621, %v623
      %v626 = vsel %vm624, %v619, %v621
      %v627 = vsel %vm624, %v617, %v619
      %v628 = vsel %vm624, %v623, %v617
      %s629 = scalar_lea.vmem %s9, 6
      %v630 = vld [vmem:[%s629] ss:$8 sm:$0xf]
      %v632 = vlaneseq
      %v633 = vshrl.u32 %v632, 7
      %v634 = vsub.s32 0, %v633
      %v635 = vrot.slane %v630, %v634
      %v636 = vlaneseq
      %v637 = vshrl.u32 %v636, 7
      %v638 = vsub.s32 1, %v637
      %v639 = vrot.slane %v630, %v638
      %v640 = vlaneseq
      %v641 = vshrl.u32 %v640, 7
      %v642 = vsub.s32 2, %v641
      %v643 = vrot.slane %v630, %v642
      %v644 = vlaneseq
      %v645 = vshrl.u32 %v644, 7
      %v646 = vsub.s32 3, %v645
      %v647 = vrot.slane %v630, %v646
      %v652 = vmul.f32 %v627, %v635
      %v653 = vmul.f32 %v626, %v639
      %v654 = vmul.f32 %v625, %v643
      %v655 = vmul.f32 %v628, %v647
      %656 = vst [vmem:[#allocation2 + $0xc0] sm:$0xff] %v652
      %657 = vst [vmem:[#allocation2 + $0xc8] sm:$0xff] %v653
      %658 = vst [vmem:[#allocation2 + $0xd0] sm:$0xff] %v654
      %659 = vst [vmem:[#allocation2 + $0xd8] sm:$0xff] %v655
      %660 = vrot.lane.b32.xlu0 %v387, 112
      %v661 = vpop.permute.xlu0 %660
      %662 = vrot.lane.b32.xlu0 %v388, 112
      %v663 = vpop.permute.xlu0 %662
      %664 = vrot.lane.b32.xlu0 %v389, 112
      %v665 = vpop.permute.xlu0 %664
      %666 = vrot.lane.b32.xlu0 %v390, 112
      %v667 = vpop.permute.xlu0 %666
      %vm668 = vcmp.lt.s32.totalorder %v400, 112
      %v669 = vsel %vm668, %v665, %v667
      %v670 = vsel %vm668, %v663, %v665
      %v671 = vsel %vm668, %v661, %v663
      %v672 = vsel %vm668, %v667, %v661
      %s673 = scalar_lea.vmem %s9, 7
      %v674 = vld [vmem:[%s673] ss:$8 sm:$0xf]
      %v676 = vlaneseq
      %v677 = vshrl.u32 %v676, 7
      %v678 = vsub.s32 0, %v677
      %v679 = vrot.slane %v674, %v678
      %v680 = vlaneseq
      %v681 = vshrl.u32 %v680, 7
      %v682 = vsub.s32 1, %v681
      %v683 = vrot.slane %v674, %v682
      %v684 = vlaneseq
      %v685 = vshrl.u32 %v684, 7
      %v686 = vsub.s32 2, %v685
      %v687 = vrot.slane %v674, %v686
      %v688 = vlaneseq
      %v689 = vshrl.u32 %v688, 7
      %v690 = vsub.s32 3, %v689
      %v691 = vrot.slane %v674, %v690
      %v696 = vmul.f32 %v671, %v679
      %v697 = vmul.f32 %v670, %v683
      %v698 = vmul.f32 %v669, %v687
      %v699 = vmul.f32 %v672, %v691
      %700 = vst [vmem:[#allocation2 + $0xe0] sm:$0xff] %v696
      %701 = vst [vmem:[#allocation2 + $0xe8] sm:$0xff] %v697
      %702 = vst [vmem:[#allocation2 + $0xf0] sm:$0xff] %v698
      %703 = vst [vmem:[#allocation2 + $0xf8] sm:$0xff] %v699
      %704 = vrot.lane.b32.xlu0 %v387, 111
      %v705 = vpop.permute.xlu0 %704
      %706 = vrot.lane.b32.xlu0 %v388, 111
      %v707 = vpop.permute.xlu0 %706
      %708 = vrot.lane.b32.xlu0 %v389, 111
      %v709 = vpop.permute.xlu0 %708
      %710 = vrot.lane.b32.xlu0 %v390, 111
      %v711 = vpop.permute.xlu0 %710
      %vm712 = vcmp.lt.s32.totalorder %v400, 111
      %v713 = vsel %vm712, %v709, %v711
      %v714 = vsel %vm712, %v707, %v709
      %v715 = vsel %vm712, %v705, %v707
      %v716 = vsel %vm712, %v711, %v705
      %s717 = scalar_lea.vmem %s9, 32
      %v718 = vld [vmem:[%s717] ss:$8 sm:$0xf]
      %v720 = vlaneseq
      %v721 = vshrl.u32 %v720, 7
      %v722 = vsub.s32 0, %v721
      %v723 = vrot.slane %v718, %v722
      %v724 = vlaneseq
      %v725 = vshrl.u32 %v724, 7
      %v726 = vsub.s32 1, %v725
      %v727 = vrot.slane %v718, %v726
      %v728 = vlaneseq
      %v729 = vshrl.u32 %v728, 7
      %v730 = vsub.s32 2, %v729
      %v731 = vrot.slane %v718, %v730
      %v732 = vlaneseq
      %v733 = vshrl.u32 %v732, 7
      %v734 = vsub.s32 3, %v733
      %v735 = vrot.slane %v718, %v734
      %v740 = vmul.f32 %v715, %v723
      %v741 = vmul.f32 %v714, %v727
      %v742 = vmul.f32 %v713, %v731
      %v743 = vmul.f32 %v716, %v735
      %744 = vst [vmem:[#allocation2 + $0x100] sm:$0xff] %v740
      %745 = vst [vmem:[#allocation2 + $0x108] sm:$0xff] %v741
      %746 = vst [vmem:[#allocation2 + $0x110] sm:$0xff] %v742
      %747 = vst [vmem:[#allocation2 + $0x118] sm:$0xff] %v743
      %v748 = vld [vmem:[%s1] sm:$0xff]
      %v749 = vld [vmem:[%s1 + $0x8] sm:$0xff]
      %v750 = vld [vmem:[%s1 + $0x10] sm:$0xff]
      %v751 = vld [vmem:[%s1 + $0x18] sm:$0xff]
      %v752 = vld [vmem:[%s1 + $0x20] sm:$0xff]
      %v753 = vld [vmem:[%s1 + $0x28] sm:$0xff]
      %v754 = vld [vmem:[%s1 + $0x30] sm:$0xff]
      %v755 = vld [vmem:[%s1 + $0x38] sm:$0xff]
      %v756 = vld [vmem:[#allocation2] sm:$0xff]
      %v757 = vld [vmem:[#allocation2 + $0x8] sm:$0xff]
      %v758 = vld [vmem:[#allocation2 + $0x10] sm:$0xff]
      %v759 = vld [vmem:[#allocation2 + $0x18] sm:$0xff]
      %v760 = vld [vmem:[#allocation2 + $0x20] sm:$0xff]
      %v761 = vld [vmem:[#allocation2 + $0x28] sm:$0xff]
      %v762 = vld [vmem:[#allocation2 + $0x30] sm:$0xff]
      %v763 = vld [vmem:[#allocation2 + $0x38] sm:$0xff]
      %v764 = vld [vmem:[#allocation2 + $0x40] sm:$0xff]
      %v765 = vld [vmem:[#allocation2 + $0x48] sm:$0xff]
      %v766 = vld [vmem:[#allocation2 + $0x50] sm:$0xff]
      %v767 = vld [vmem:[#allocation2 + $0x58] sm:$0xff]
      %v768 = vld [vmem:[#allocation2 + $0x60] sm:$0xff]
      %v769 = vld [vmem:[#allocation2 + $0x68] sm:$0xff]
      %v770 = vld [vmem:[#allocation2 + $0x70] sm:$0xff]
      %v771 = vld [vmem:[#allocation2 + $0x78] sm:$0xff]
      %v772 = vld [vmem:[#allocation2 + $0x80] sm:$0xff]
      %v773 = vld [vmem:[#allocation2 + $0x88] sm:$0xff]
      %v774 = vld [vmem:[#allocation2 + $0x90] sm:$0xff]
      %v775 = vld [vmem:[#allocation2 + $0x98] sm:$0xff]
      %v776 = vld [vmem:[#allocation2 + $0xa0] sm:$0xff]
      %v777 = vld [vmem:[#allocation2 + $0xa8] sm:$0xff]
      %v778 = vld [vmem:[#allocation2 + $0xb0] sm:$0xff]
      %v779 = vld [vmem:[#allocation2 + $0xb8] sm:$0xff]
      %v780 = vld [vmem:[#allocation2 + $0xc0] sm:$0xff]
      %v781 = vld [vmem:[#allocation2 + $0xc8] sm:$0xff]
      %v782 = vld [vmem:[#allocation2 + $0xd0] sm:$0xff]
      %v783 = vld [vmem:[#allocation2 + $0xd8] sm:$0xff]
      %v784 = vld [vmem:[#allocation2 + $0xe0] sm:$0xff]
      %v785 = vld [vmem:[#allocation2 + $0xe8] sm:$0xff]
      %v786 = vld [vmem:[#allocation2 + $0xf0] sm:$0xff]
      %v787 = vld [vmem:[#allocation2 + $0xf8] sm:$0xff]
      %v788 = vld [vmem:[#allocation2 + $0x100] sm:$0xff]
      %v789 = vld [vmem:[#allocation2 + $0x108] sm:$0xff]
      %v790 = vld [vmem:[#allocation2 + $0x110] sm:$0xff]
      %v791 = vld [vmem:[#allocation2 + $0x118] sm:$0xff]
      %v792 = vld [vmem:[%s2] sm:$0xff]
      %v793 = vld [vmem:[%s2 + $0x8] sm:$0xff]
      %v794 = vld [vmem:[%s2 + $0x10] sm:$0xff]
      %v795 = vld [vmem:[%s2 + $0x18] sm:$0xff]
      %v796 = vld [vmem:[%s2 + $0x20] sm:$0xff]
      %v797 = vld [vmem:[%s2 + $0x28] sm:$0xff]
      %v798 = vld [vmem:[%s2 + $0x30] sm:$0xff]
      %v799 = vld [vmem:[%s2 + $0x38] sm:$0xff]
      %801 = vset.pattern.permute.xlu0 0
      %802 = vperm.xlu0 %801, %v792
      %v803 = vpop.permute.xlu0 %802
      %806 = vset.pattern.permute.xlu0 0
      %807 = vperm.xlu0 %806, %v793
      %v808 = vpop.permute.xlu0 %807
      %811 = vset.pattern.permute.xlu0 0
      %812 = vperm.xlu0 %811, %v794
      %v813 = vpop.permute.xlu0 %812
      %816 = vset.pattern.permute.xlu0 0
      %817 = vperm.xlu0 %816, %v795
      %v818 = vpop.permute.xlu0 %817
      %821 = vset.pattern.permute.xlu0 0
      %822 = vperm.xlu0 %821, %v796
      %v823 = vpop.permute.xlu0 %822
      %826 = vset.pattern.permute.xlu0 0
      %827 = vperm.xlu0 %826, %v797
      %v828 = vpop.permute.xlu0 %827
      %831 = vset.pattern.permute.xlu0 0
      %832 = vperm.xlu0 %831, %v798
      %v833 = vpop.permute.xlu0 %832
      %836 = vset.pattern.permute.xlu0 0
      %837 = vperm.xlu0 %836, %v799
      %v838 = vpop.permute.xlu0 %837
      %vm840 = vcmask 588800
      %v842 = vsel %vm840, %v748, 0
      %v845 = vsel %vm840, %v749, 0
      %v848 = vsel %vm840, %v750, 0
      %v851 = vsel %vm840, %v751, 0
      %v854 = vsel %vm840, %v752, 0
      %v857 = vsel %vm840, %v753, 0
      %v860 = vsel %vm840, %v754, 0
      %v863 = vsel %vm840, %v755, 0
      %865 = vmatprep.subr.mxu0 %v757
      %866 = vmatpush1.msra.mxu0 %v756
      %867 = vmatprep.subr.mxu0 %v761
      %868 = vmatpush1.msra.mxu0 %v760
      %869 = vmatprep.subr.mxu0 %v765
      %870 = vmatpush1.msra.mxu0 %v764
      %871 = vmatprep.subr.mxu0 %v769
      %872 = vmatpush1.msra.mxu0 %v768
      %873 = vmatprep.subr.mxu0 %v773
      %874 = vmatpush1.msra.mxu0 %v772
      %875 = vmatprep.subr.mxu0 %v777
      %876 = vmatpush1.msra.mxu0 %v776
      %877 = vmatprep.subr.mxu0 %v781
      %878 = vmatpush1.msra.mxu0 %v780
      %879 = vmatprep.subr.mxu0 %v785
      %880 = vmatpush1.msra.mxu0 %v784
      %881 = vmatprep.subr.mxu0 %v789
      %882 = vmatpush1.msra.mxu0 %v788
      %883 = vmatprep.subr.mxu0 0.0
      %884 = vmatpush1.msra.mxu0 0.0
      %885 = vmatprep.subr.mxu0 0.0
      %886 = vmatpush1.msra.mxu0 0.0
      %887 = vmatprep.subr.mxu0 0.0
      %888 = vmatpush1.msra.mxu0 0.0
      %889 = vmatprep.subr.mxu0 0.0
      %890 = vmatpush1.msra.mxu0 0.0
      %891 = vmatprep.subr.mxu0 0.0
      %892 = vmatpush1.msra.mxu0 0.0
      %893 = vmatprep.subr.mxu0 0.0
      %894 = vmatpush1.msra.mxu0 0.0
      %895 = vmatprep.subr.mxu0 0.0
      %896 = vmatpush1.msra.mxu0 0.0
      %897 = vmatprep.subr.mxu0 0.0
      %898 = vmatpush1.msra.mxu0 0.0
      %899 = vmatprep.subr.mxu0 0.0
      %900 = vmatpush1.msra.mxu0 0.0
      %901 = vmatprep.subr.mxu0 0.0
      %902 = vmatpush1.msra.mxu0 0.0
      %903 = vmatprep.subr.mxu0 0.0
      %904 = vmatpush1.msra.mxu0 0.0
      %905 = vmatprep.subr.mxu0 0.0
      %906 = vmatpush1.msra.mxu0 0.0
      %907 = vmatprep.subr.mxu0 0.0
      %908 = vmatpush1.msra.mxu0 0.0
      %909 = vmatprep.subr.mxu0 0.0
      %910 = vmatpush1.msra.mxu0 0.0
      %911 = vmatprep.subr.mxu0 0.0
      %912 = vmatpush1.msra.mxu0 0.0
      %913 = vmatprep.subr.mxu0 0.0
      %914 = vmatpush1.msra.mxu0 0.0
      %915 = vmatprep.subr.mxu0 0.0
      %916 = vmatpush1.msra.mxu0 0.0
      %917 = vmatprep.subr.mxu0 0.0
      %918 = vmatpush1.msra.mxu0 0.0
      %919 = vmatprep.subr.mxu0 0.0
      %920 = vmatpush1.msra.mxu0 0.0
      %921 = vmatprep.subr.mxu0 0.0
      %922 = vmatpush1.msra.mxu0 0.0
      %923 = vmatprep.subr.mxu0 0.0
      %924 = vmatpush1.msra.mxu0 0.0
      %925 = vmatprep.subr.mxu0 0.0
      %926 = vmatpush1.msra.mxu0 0.0
      %927 = vmatprep.subr.mxu0 0.0
      %928 = vmatpush1.msra.mxu0 0.0
      %929 = vmatprep.mubr.f32.mxu0 0.0
      %930 = vmatmul.mubr.f32.gmra.mrb[0].mxu0 %v842
      %v931 = vpop.f32.mrb[0].mxu0
      %v932 = vadd.f32 %v803, %v931
      %v933 = vpop.f32.mrb[0].mxu0
      %v934 = vadd.f32 %v803, %v933
      %935 = vmatprep.mubr.f32.mxu0 0.0
      %936 = vmatmul.mubr.f32.gmra.mrb[0].mxu0 %v845
      %v937 = vpop.f32.mrb[0].mxu0
      %v938 = vadd.f32 %v808, %v937
      %v939 = vpop.f32.mrb[0].mxu0
      %v940 = vadd.f32 %v808, %v939
      %941 = vmatprep.mubr.f32.mxu0 0.0
      %942 = vmatmul.mubr.f32.gmra.mrb[0].mxu0 %v848
      %v943 = vpop.f32.mrb[0].mxu0
      %v944 = vadd.f32 %v813, %v943
      %v945 = vpop.f32.mrb[0].mxu0
      %v946 = vadd.f32 %v813, %v945
      %947 = vmatprep.mubr.f32.mxu0 0.0
      %948 = vmatmul.mubr.f32.gmra.mrb[0].mxu0 %v851
      %v949 = vpop.f32.mrb[0].mxu0
      %v950 = vadd.f32 %v818, %v949
      %v951 = vpop.f32.mrb[0].mxu0
      %v952 = vadd.f32 %v818, %v951
      %953 = vmatprep.mubr.f32.mxu0 0.0
      %954 = vmatmul.mubr.f32.gmra.mrb[0].mxu0 %v854
      %v955 = vpop.f32.mrb[0].mxu0
      %v956 = vadd.f32 %v823, %v955
      %v957 = vpop.f32.mrb[0].mxu0
      %v958 = vadd.f32 %v823, %v957
      %959 = vmatprep.mubr.f32.mxu0 0.0
      %960 = vmatmul.mubr.f32.gmra.mrb[0].mxu0 %v857
      %v961 = vpop.f32.mrb[0].mxu0
      %v962 = vadd.f32 %v828, %v961
      %v963 = vpop.f32.mrb[0].mxu0
      %v964 = vadd.f32 %v828, %v963
      %965 = vmatprep.mubr.f32.mxu0 0.0
      %966 = vmatmul.mubr.f32.gmra.mrb[0].mxu0 %v860
      %v967 = vpop.f32.mrb[0].mxu0
      %v968 = vadd.f32 %v833, %v967
      %v969 = vpop.f32.mrb[0].mxu0
      %v970 = vadd.f32 %v833, %v969
      %971 = vmatprep.mubr.f32.mxu0 0.0
      %972 = vmatmul.mubr.f32.gmra.mrb[0].mxu0 %v863
      %v973 = vpop.f32.mrb[0].mxu0
      %v974 = vadd.f32 %v838, %v973
      %v975 = vpop.f32.mrb[0].mxu0
      %v976 = vadd.f32 %v838, %v975
      %977 = vdwg.mxu0
      %978 = vmatprep.subr.mxu0 %v759
      %979 = vmatpush1.msra.mxu0 %v758
      %980 = vmatprep.subr.mxu0 %v763
      %981 = vmatpush1.msra.mxu0 %v762
      %982 = vmatprep.subr.mxu0 %v767
      %983 = vmatpush1.msra.mxu0 %v766
      %984 = vmatprep.subr.mxu0 %v771
      %985 = vmatpush1.msra.mxu0 %v770
      %986 = vmatprep.subr.mxu0 %v775
      %987 = vmatpush1.msra.mxu0 %v774
      %988 = vmatprep.subr.mxu0 %v779
      %989 = vmatpush1.msra.mxu0 %v778
      %990 = vmatprep.subr.mxu0 %v783
      %991 = vmatpush1.msra.mxu0 %v782
      %992 = vmatprep.subr.mxu0 %v787
      %993 = vmatpush1.msra.mxu0 %v786
      %994 = vmatprep.subr.mxu0 %v791
      %995 = vmatpush1.msra.mxu0 %v790
      %996 = vmatprep.subr.mxu0 0.0
      %997 = vmatpush1.msra.mxu0 0.0
      %998 = vmatprep.subr.mxu0 0.0
      %999 = vmatpush1.msra.mxu0 0.0
      %1000 = vmatprep.subr.mxu0 0.0
      %1001 = vmatpush1.msra.mxu0 0.0
      %1002 = vmatprep.subr.mxu0 0.0
      %1003 = vmatpush1.msra.mxu0 0.0
      %1004 = vmatprep.subr.mxu0 0.0
      %1005 = vmatpush1.msra.mxu0 0.0
      %1006 = vmatprep.subr.mxu0 0.0
      %1007 = vmatpush1.msra.mxu0 0.0
      %1008 = vmatprep.subr.mxu0 0.0
      %1009 = vmatpush1.msra.mxu0 0.0
      %1010 = vmatprep.subr.mxu0 0.0
      %1011 = vmatpush1.msra.mxu0 0.0
      %1012 = vmatprep.subr.mxu0 0.0
      %1013 = vmatpush1.msra.mxu0 0.0
      %1014 = vmatprep.subr.mxu0 0.0
      %1015 = vmatpush1.msra.mxu0 0.0
      %1016 = vmatprep.subr.mxu0 0.0
      %1017 = vmatpush1.msra.mxu0 0.0
      %1018 = vmatprep.subr.mxu0 0.0
      %1019 = vmatpush1.msra.mxu0 0.0
      %1020 = vmatprep.subr.mxu0 0.0
      %1021 = vmatpush1.msra.mxu0 0.0
      %1022 = vmatprep.subr.mxu0 0.0
      %1023 = vmatpush1.msra.mxu0 0.0
      %1024 = vmatprep.subr.mxu0 0.0
      %1025 = vmatpush1.msra.mxu0 0.0
      %1026 = vmatprep.subr.mxu0 0.0
      %1027 = vmatpush1.msra.mxu0 0.0
      %1028 = vmatprep.subr.mxu0 0.0
      %1029 = vmatpush1.msra.mxu0 0.0
      %1030 = vmatprep.subr.mxu0 0.0
      %1031 = vmatpush1.msra.mxu0 0.0
      %1032 = vmatprep.subr.mxu0 0.0
      %1033 = vmatpush1.msra.mxu0 0.0
      %1034 = vmatprep.subr.mxu0 0.0
      %1035 = vmatpush1.msra.mxu0 0.0
      %1036 = vmatprep.subr.mxu0 0.0
      %1037 = vmatpush1.msra.mxu0 0.0
      %1038 = vmatprep.subr.mxu0 0.0
      %1039 = vmatpush1.msra.mxu0 0.0
      %1040 = vmatprep.subr.mxu0 0.0
      %1041 = vmatpush1.msra.mxu0 0.0
      %1042 = vmatprep.mubr.f32.mxu0 0.0
      %1043 = vmatmul.mubr.f32.gmra.mrb[0].mxu0 %v842
      %v1044 = vpop.f32.mrb[0].mxu0
      %v1045 = vadd.f32 %v803, %v1044
      %v1046 = vpop.f32.mrb[0].mxu0
      %v1047 = vadd.f32 %v803, %v1046
      %1048 = vmatprep.mubr.f32.mxu0 0.0
      %1049 = vmatmul.mubr.f32.gmra.mrb[0].mxu0 %v845
      %v1050 = vpop.f32.mrb[0].mxu0
      %v1051 = vadd.f32 %v808, %v1050
      %v1052 = vpop.f32.mrb[0].mxu0
      %v1053 = vadd.f32 %v808, %v1052
      %1054 = vmatprep.mubr.f32.mxu0 0.0
      %1055 = vmatmul.mubr.f32.gmra.mrb[0].mxu0 %v848
      %v1056 = vpop.f32.mrb[0].mxu0
      %v1057 = vadd.f32 %v813, %v1056
      %v1058 = vpop.f32.mrb[0].mxu0
      %v1059 = vadd.f32 %v813, %v1058
      %1060 = vmatprep.mubr.f32.mxu0 0.0
      %1061 = vmatmul.mubr.f32.gmra.mrb[0].mxu0 %v851
      %v1062 = vpop.f32.mrb[0].mxu0
      %v1063 = vadd.f32 %v818, %v1062
      %v1064 = vpop.f32.mrb[0].mxu0
      %v1065 = vadd.f32 %v818, %v1064
      %1066 = vmatprep.mubr.f32.mxu0 0.0
      %1067 = vmatmul.mubr.f32.gmra.mrb[0].mxu0 %v854
      %v1068 = vpop.f32.mrb[0].mxu0
      %v1069 = vadd.f32 %v823, %v1068
      %v1070 = vpop.f32.mrb[0].mxu0
      %v1071 = vadd.f32 %v823, %v1070
      %1072 = vmatprep.mubr.f32.mxu0 0.0
      %1073 = vmatmul.mubr.f32.gmra.mrb[0].mxu0 %v857
      %v1074 = vpop.f32.mrb[0].mxu0
      %v1075 = vadd.f32 %v828, %v1074
      %v1076 = vpop.f32.mrb[0].mxu0
      %v1077 = vadd.f32 %v828, %v1076
      %1078 = vmatprep.mubr.f32.mxu0 0.0
      %1079 = vmatmul.mubr.f32.gmra.mrb[0].mxu0 %v860
      %v1080 = vpop.f32.mrb[0].mxu0
      %v1081 = vadd.f32 %v833, %v1080
      %v1082 = vpop.f32.mrb[0].mxu0
      %v1083 = vadd.f32 %v833, %v1082
      %1084 = vmatprep.mubr.f32.mxu0 0.0
      %1085 = vmatmul.mubr.f32.gmra.mrb[0].mxu0 %v863
      %v1086 = vpop.f32.mrb[0].mxu0
      %v1087 = vadd.f32 %v838, %v1086
      %v1088 = vpop.f32.mrb[0].mxu0
      %v1089 = vadd.f32 %v838, %v1088
      %1090 = vdwg.mxu0
      %v1091 = vld [vmem:[%s10] sm:$0xff]
      %v1092 = vld [vmem:[%s10 + $0x8] sm:$0xff]
      %v1093 = vld [vmem:[%s10 + $0x10] sm:$0xff]
      %v1094 = vld [vmem:[%s10 + $0x18] sm:$0xff]
      %v1095 = vld [vmem:[%s10 + $0x20] sm:$0xff]
      %v1096 = vld [vmem:[%s10 + $0x28] sm:$0xff]
      %v1097 = vld [vmem:[%s10 + $0x30] sm:$0xff]
      %v1098 = vld [vmem:[%s10 + $0x38] sm:$0xff]
      %v1099 = vld [vmem:[%s10 + $0x40] sm:$0xff]
      %v1100 = vld [vmem:[%s10 + $0x48] sm:$0xff]
      %v1101 = vld [vmem:[%s10 + $0x50] sm:$0xff]
      %v1102 = vld [vmem:[%s10 + $0x58] sm:$0xff]
      %v1103 = vld [vmem:[%s10 + $0x60] sm:$0xff]
      %v1104 = vld [vmem:[%s10 + $0x68] sm:$0xff]
      %v1105 = vld [vmem:[%s10 + $0x70] sm:$0xff]
      %v1106 = vld [vmem:[%s10 + $0x78] sm:$0xff]
      %v1107 = vld [vmem:[%s10 + $0x80] sm:$0xff]
      %v1108 = vld [vmem:[%s10 + $0x88] sm:$0xff]
      %v1109 = vld [vmem:[%s10 + $0x90] sm:$0xff]
      %v1110 = vld [vmem:[%s10 + $0x98] sm:$0xff]
      %v1111 = vld [vmem:[%s10 + $0xa0] sm:$0xff]
      %v1112 = vld [vmem:[%s10 + $0xa8] sm:$0xff]
      %v1113 = vld [vmem:[%s10 + $0xb0] sm:$0xff]
      %v1114 = vld [vmem:[%s10 + $0xb8] sm:$0xff]
      %v1115 = vld [vmem:[%s10 + $0xc0] sm:$0xff]
      %v1116 = vld [vmem:[%s10 + $0xc8] sm:$0xff]
      %v1117 = vld [vmem:[%s10 + $0xd0] sm:$0xff]
      %v1118 = vld [vmem:[%s10 + $0xd8] sm:$0xff]
      %v1119 = vld [vmem:[%s10 + $0xe0] sm:$0xff]
      %v1120 = vld [vmem:[%s10 + $0xe8] sm:$0xff]
      %v1121 = vld [vmem:[%s10 + $0xf0] sm:$0xff]
      %v1122 = vld [vmem:[%s10 + $0xf8] sm:$0xff]
      %v1123 = vld [vmem:[%s10 + $0x100] sm:$0xff]
      %v1124 = vld [vmem:[%s10 + $0x108] sm:$0xff]
      %v1125 = vld [vmem:[%s10 + $0x110] sm:$0xff]
      %v1126 = vld [vmem:[%s10 + $0x118] sm:$0xff]
      %v1127 = vld [vmem:[%s10 + $0x120] sm:$0xff]
      %v1128 = vld [vmem:[%s10 + $0x128] sm:$0xff]
      %v1129 = vld [vmem:[%s10 + $0x130] sm:$0xff]
      %v1130 = vld [vmem:[%s10 + $0x138] sm:$0xff]
      %v1131 = vld [vmem:[%s10 + $0x140] sm:$0xff]
      %v1132 = vld [vmem:[%s10 + $0x148] sm:$0xff]
      %v1133 = vld [vmem:[%s10 + $0x150] sm:$0xff]
      %v1134 = vld [vmem:[%s10 + $0x158] sm:$0xff]
      %v1135 = vld [vmem:[%s10 + $0x160] sm:$0xff]
      %v1136 = vld [vmem:[%s10 + $0x168] sm:$0xff]
      %v1137 = vld [vmem:[%s10 + $0x170] sm:$0xff]
      %v1138 = vld [vmem:[%s10 + $0x178] sm:$0xff]
      %v1139 = vld [vmem:[%s10 + $0x180] sm:$0xff]
      %v1140 = vld [vmem:[%s10 + $0x188] sm:$0xff]
      %v1141 = vld [vmem:[%s10 + $0x190] sm:$0xff]
      %v1142 = vld [vmem:[%s10 + $0x198] sm:$0xff]
      %v1143 = vld [vmem:[%s10 + $0x1a0] sm:$0xff]
      %v1144 = vld [vmem:[%s10 + $0x1a8] sm:$0xff]
      %v1145 = vld [vmem:[%s10 + $0x1b0] sm:$0xff]
      %v1146 = vld [vmem:[%s10 + $0x1b8] sm:$0xff]
      %v1147 = vld [vmem:[%s10 + $0x1c0] sm:$0xff]
      %v1148 = vld [vmem:[%s10 + $0x1c8] sm:$0xff]
      %v1149 = vld [vmem:[%s10 + $0x1d0] sm:$0xff]
      %v1150 = vld [vmem:[%s10 + $0x1d8] sm:$0xff]
      %v1151 = vld [vmem:[%s10 + $0x1e0] sm:$0xff]
      %v1152 = vld [vmem:[%s10 + $0x1e8] sm:$0xff]
      %v1153 = vld [vmem:[%s10 + $0x1f0] sm:$0xff]
      %v1154 = vld [vmem:[%s10 + $0x1f8] sm:$0xff]
      %1155 = vmatprep.subr.mxu0 0.0
      %1156 = vmatpush1.msra.mxu0 %v1091
      %1157 = vmatprep.subr.mxu0 0.0
      %1158 = vmatpush1.msra.mxu0 %v1092
      %1159 = vmatprep.subr.mxu0 0.0
      %1160 = vmatpush1.msra.mxu0 %v1093
      %1161 = vmatprep.subr.mxu0 0.0
      %1162 = vmatpush1.msra.mxu0 %v1094
      %1163 = vmatprep.subr.mxu0 0.0
      %1164 = vmatpush1.msra.mxu0 %v1095
      %1165 = vmatprep.subr.mxu0 0.0
      %1166 = vmatpush1.msra.mxu0 %v1096
      %1167 = vmatprep.subr.mxu0 0.0
      %1168 = vmatpush1.msra.mxu0 %v1097
      %1169 = vmatprep.subr.mxu0 0.0
      %1170 = vmatpush1.msra.mxu0 %v1098
      %1171 = vmatprep.subr.mxu0 0.0
      %1172 = vmatpush1.msra.mxu0 %v1099
      %1173 = vmatprep.subr.mxu0 0.0
      %1174 = vmatpush1.msra.mxu0 %v1100
      %1175 = vmatprep.subr.mxu0 0.0
      %1176 = vmatpush1.msra.mxu0 %v1101
      %1177 = vmatprep.subr.mxu0 0.0
      %1178 = vmatpush1.msra.mxu0 %v1102
      %1179 = vmatprep.subr.mxu0 0.0
      %1180 = vmatpush1.msra.mxu0 %v1103
      %1181 = vmatprep.subr.mxu0 0.0
      %1182 = vmatpush1.msra.mxu0 %v1104
      %1183 = vmatprep.subr.mxu0 0.0
      %1184 = vmatpush1.msra.mxu0 %v1105
      %1185 = vmatprep.subr.mxu0 0.0
      %1186 = vmatpush1.msra.mxu0 %v1106
      %1187 = vmatprep.subr.mxu0 0.0
      %1188 = vmatpush1.msra.mxu0 %v1107
      %1189 = vmatprep.subr.mxu0 0.0
      %1190 = vmatpush1.msra.mxu0 %v1108
      %1191 = vmatprep.subr.mxu0 0.0
      %1192 = vmatpush1.msra.mxu0 %v1109
      %1193 = vmatprep.subr.mxu0 0.0
      %1194 = vmatpush1.msra.mxu0 %v1110
      %1195 = vmatprep.subr.mxu0 0.0
      %1196 = vmatpush1.msra.mxu0 %v1111
      %1197 = vmatprep.subr.mxu0 0.0
      %1198 = vmatpush1.msra.mxu0 %v1112
      %1199 = vmatprep.subr.mxu0 0.0
      %1200 = vmatpush1.msra.mxu0 %v1113
      %1201 = vmatprep.subr.mxu0 0.0
      %1202 = vmatpush1.msra.mxu0 %v1114
      %1203 = vmatprep.subr.mxu0 0.0
      %1204 = vmatpush1.msra.mxu0 %v1115
      %1205 = vmatprep.subr.mxu0 0.0
      %1206 = vmatpush1.msra.mxu0 %v1116
      %1207 = vmatprep.subr.mxu0 0.0
      %1208 = vmatpush1.msra.mxu0 %v1117
      %1209 = vmatprep.subr.mxu0 0.0
      %1210 = vmatpush1.msra.mxu0 %v1118
      %1211 = vmatprep.subr.mxu0 0.0
      %1212 = vmatpush1.msra.mxu0 %v1119
      %1213 = vmatprep.subr.mxu0 0.0
      %1214 = vmatpush1.msra.mxu0 %v1120
      %1215 = vmatprep.subr.mxu0 0.0
      %1216 = vmatpush1.msra.mxu0 %v1121
      %1217 = vmatprep.subr.mxu0 0.0
      %1218 = vmatpush1.msra.mxu0 %v1122
      %1219 = vmatprep.mubr.f32.mxu0 %v958
      %1220 = vmatmul.mubr.f32.gmra.mrb[0].mxu0 %v956
      %v1221 = vpop.f32.mrb[0].mxu0
      %v1222 = vadd.f32 0.0, %v1221
      %v1223 = vpop.f32.mrb[0].mxu0
      %1224 = vmatprep.mubr.f32.mxu0 %v964
      %1225 = vmatmul.mubr.f32.gmra.mrb[0].mxu0 %v962
      %v1226 = vpop.f32.mrb[0].mxu0
      %v1227 = vadd.f32 0.0, %v1226
      %v1228 = vpop.f32.mrb[0].mxu0
      %1229 = vmatprep.mubr.f32.mxu0 %v970
      %1230 = vmatmul.mubr.f32.gmra.mrb[0].mxu0 %v968
      %v1231 = vpop.f32.mrb[0].mxu0
      %v1232 = vadd.f32 0.0, %v1231
      %v1233 = vpop.f32.mrb[0].mxu0
      %1234 = vmatprep.mubr.f32.mxu0 %v976
      %1235 = vmatmul.mubr.f32.gmra.mrb[0].mxu0 %v974
      %v1236 = vpop.f32.mrb[0].mxu0
      %v1237 = vadd.f32 0.0, %v1236
      %v1238 = vpop.f32.mrb[0].mxu0
      %1239 = vdwg.mxu0
      %1240 = vmatprep.subr.mxu0 0.0
      %1241 = vmatpush1.msra.mxu0 %v1123
      %1242 = vmatprep.subr.mxu0 0.0
      %1243 = vmatpush1.msra.mxu0 %v1124
      %1244 = vmatprep.subr.mxu0 0.0
      %1245 = vmatpush1.msra.mxu0 %v1125
      %1246 = vmatprep.subr.mxu0 0.0
      %1247 = vmatpush1.msra.mxu0 %v1126
      %1248 = vmatprep.subr.mxu0 0.0
      %1249 = vmatpush1.msra.mxu0 %v1127
      %1250 = vmatprep.subr.mxu0 0.0
      %1251 = vmatpush1.msra.mxu0 %v1128
      %1252 = vmatprep.subr.mxu0 0.0
      %1253 = vmatpush1.msra.mxu0 %v1129
      %1254 = vmatprep.subr.mxu0 0.0
      %1255 = vmatpush1.msra.mxu0 %v1130
      %1256 = vmatprep.subr.mxu0 0.0
      %1257 = vmatpush1.msra.mxu0 %v1131
      %1258 = vmatprep.subr.mxu0 0.0
      %1259 = vmatpush1.msra.mxu0 %v1132
      %1260 = vmatprep.subr.mxu0 0.0
      %1261 = vmatpush1.msra.mxu0 %v1133
      %1262 = vmatprep.subr.mxu0 0.0
      %1263 = vmatpush1.msra.mxu0 %v1134
      %1264 = vmatprep.subr.mxu0 0.0
      %1265 = vmatpush1.msra.mxu0 %v1135
      %1266 = vmatprep.subr.mxu0 0.0
      %1267 = vmatpush1.msra.mxu0 %v1136
      %1268 = vmatprep.subr.mxu0 0.0
      %1269 = vmatpush1.msra.mxu0 %v1137
      %1270 = vmatprep.subr.mxu0 0.0
      %1271 = vmatpush1.msra.mxu0 %v1138
      %1272 = vmatprep.subr.mxu0 0.0
      %1273 = vmatpush1.msra.mxu0 %v1139
      %1274 = vmatprep.subr.mxu0 0.0
      %1275 = vmatpush1.msra.mxu0 %v1140
      %1276 = vmatprep.subr.mxu0 0.0
      %1277 = vmatpush1.msra.mxu0 %v1141
      %1278 = vmatprep.subr.mxu0 0.0
      %1279 = vmatpush1.msra.mxu0 %v1142
      %1280 = vmatprep.subr.mxu0 0.0
      %1281 = vmatpush1.msra.mxu0 %v1143
      %1282 = vmatprep.subr.mxu0 0.0
      %1283 = vmatpush1.msra.mxu0 %v1144
      %1284 = vmatprep.subr.mxu0 0.0
      %1285 = vmatpush1.msra.mxu0 %v1145
      %1286 = vmatprep.subr.mxu0 0.0
      %1287 = vmatpush1.msra.mxu0 %v1146
      %1288 = vmatprep.subr.mxu0 0.0
      %1289 = vmatpush1.msra.mxu0 %v1147
      %1290 = vmatprep.subr.mxu0 0.0
      %1291 = vmatpush1.msra.mxu0 %v1148
      %1292 = vmatprep.subr.mxu0 0.0
      %1293 = vmatpush1.msra.mxu0 %v1149
      %1294 = vmatprep.subr.mxu0 0.0
      %1295 = vmatpush1.msra.mxu0 %v1150
      %1296 = vmatprep.subr.mxu0 0.0
      %1297 = vmatpush1.msra.mxu0 %v1151
      %1298 = vmatprep.subr.mxu0 0.0
      %1299 = vmatpush1.msra.mxu0 %v1152
      %1300 = vmatprep.subr.mxu0 0.0
      %1301 = vmatpush1.msra.mxu0 %v1153
      %1302 = vmatprep.subr.mxu0 0.0
      %1303 = vmatpush1.msra.mxu0 %v1154
      %1304 = vmatprep.mubr.f32.mxu0 %v1071
      %1305 = vmatmul.mubr.f32.gmra.mrb[0].mxu0 %v1069
      %v1306 = vpop.f32.mrb[0].mxu0
      %v1307 = vadd.f32 %v1222, %v1306
      %v1308 = vpop.f32.mrb[0].mxu0
      %1309 = vmatprep.mubr.f32.mxu0 %v1077
      %1310 = vmatmul.mubr.f32.gmra.mrb[0].mxu0 %v1075
      %v1311 = vpop.f32.mrb[0].mxu0
      %v1312 = vadd.f32 %v1227, %v1311
      %v1313 = vpop.f32.mrb[0].mxu0
      %1314 = vmatprep.mubr.f32.mxu0 %v1083
      %1315 = vmatmul.mubr.f32.gmra.mrb[0].mxu0 %v1081
      %v1316 = vpop.f32.mrb[0].mxu0
      %v1317 = vadd.f32 %v1232, %v1316
      %v1318 = vpop.f32.mrb[0].mxu0
      %1319 = vmatprep.mubr.f32.mxu0 %v1089
      %1320 = vmatmul.mubr.f32.gmra.mrb[0].mxu0 %v1087
      %v1321 = vpop.f32.mrb[0].mxu0
      %v1322 = vadd.f32 %v1237, %v1321
      %v1323 = vpop.f32.mrb[0].mxu0
      %1324 = vdwg.mxu0
      %1325 = vst [vmem:[#allocation3] sm:$0xff] %v1307
      %1326 = vst [vmem:[#allocation3 + $0x8] sm:$0xff] %v1312
      %1327 = vst [vmem:[#allocation3 + $0x10] sm:$0xff] %v1317
      %1328 = vst [vmem:[#allocation3 + $0x18] sm:$0xff] %v1322
      %vm1329 = vcmp.ge.f32.partialorder %v932, 0.0
      %vm1330 = vcmp.ge.f32.partialorder %v934, 0.0
      %vm1331 = vcmp.ge.f32.partialorder %v1045, 0.0
      %vm1332 = vcmp.ge.f32.partialorder %v1047, 0.0
      %vm1333 = vcmp.ge.f32.partialorder %v938, 0.0
      %vm1334 = vcmp.ge.f32.partialorder %v940, 0.0
      %vm1335 = vcmp.ge.f32.partialorder %v1051, 0.0
      %vm1336 = vcmp.ge.f32.partialorder %v1053, 0.0
      %vm1337 = vcmp.ge.f32.partialorder %v944, 0.0
      %vm1338 = vcmp.ge.f32.partialorder %v946, 0.0
      %vm1339 = vcmp.ge.f32.partialorder %v1057, 0.0
      %vm1340 = vcmp.ge.f32.partialorder %v1059, 0.0
      %vm1341 = vcmp.ge.f32.partialorder %v950, 0.0
      %vm1342 = vcmp.ge.f32.partialorder %v952, 0.0
      %vm1343 = vcmp.ge.f32.partialorder %v1063, 0.0
      %vm1344 = vcmp.ge.f32.partialorder %v1065, 0.0
      %v1345 = vmul.f32 %v932, 0.01
      %v1346 = vmul.f32 %v934, 0.01
      %v1347 = vmul.f32 %v1045, 0.01
      %v1348 = vmul.f32 %v1047, 0.01
      %v1349 = vmul.f32 %v938, 0.01
      %v1350 = vmul.f32 %v940, 0.01
      %v1351 = vmul.f32 %v1051, 0.01
      %v1352 = vmul.f32 %v1053, 0.01
      %v1353 = vmul.f32 %v944, 0.01
      %v1354 = vmul.f32 %v946, 0.01
      %v1355 = vmul.f32 %v1057, 0.01
      %v1356 = vmul.f32 %v1059, 0.01
      %v1357 = vmul.f32 %v950, 0.01
      %v1358 = vmul.f32 %v952, 0.01
      %v1359 = vmul.f32 %v1063, 0.01
      %v1360 = vmul.f32 %v1065, 0.01
      %v1361 = vsel %vm1329, %v932, %v1345
      %v1362 = vsel %vm1330, %v934, %v1346
      %v1363 = vsel %vm1331, %v1045, %v1347
      %v1364 = vsel %vm1332, %v1047, %v1348
      %v1365 = vsel %vm1333, %v938, %v1349
      %v1366 = vsel %vm1334, %v940, %v1350
      %v1367 = vsel %vm1335, %v1051, %v1351
      %v1368 = vsel %vm1336, %v1053, %v1352
      %v1369 = vsel %vm1337, %v944, %v1353
      %v1370 = vsel %vm1338, %v946, %v1354
      %v1371 = vsel %vm1339, %v1057, %v1355
      %v1372 = vsel %vm1340, %v1059, %v1356
      %v1373 = vsel %vm1341, %v950, %v1357
      %v1374 = vsel %vm1342, %v952, %v1358
      %v1375 = vsel %vm1343, %v1063, %v1359
      %v1376 = vsel %vm1344, %v1065, %v1360
      %v1377 = vld [vmem:[%s7] sm:$0xff]
      %v1378 = vld [vmem:[%s7 + $0x8] sm:$0xff]
      %v1379 = vld [vmem:[%s7 + $0x10] sm:$0xff]
      %v1380 = vld [vmem:[%s7 + $0x18] sm:$0xff]
      %v1381 = vadd.f32 %v1361, %v1362
      %1382 = vadd.xlane.f32.xlu0 %v1381
      %v1383 = vpop.xlane.xlu0 %1382
      %v1384 = vadd.f32 %v1365, %v1366
      %1385 = vadd.xlane.f32.xlu0 %v1384
      %v1386 = vpop.xlane.xlu0 %1385
      %v1387 = vadd.f32 %v1369, %v1370
      %1388 = vadd.xlane.f32.xlu0 %v1387
      %v1389 = vpop.xlane.xlu0 %1388
      %v1390 = vadd.f32 %v1373, %v1374
      %1391 = vadd.xlane.f32.xlu0 %v1390
      %v1392 = vpop.xlane.xlu0 %1391
      %vm1393 = vcmask 261120
      %v1395 = vsel %vm1393, %v1377, 0
      %v1398 = vsel %vm1393, %v1378, 0
      %v1401 = vsel %vm1393, %v1379, 0
      %v1404 = vsel %vm1393, %v1380, 0
      %1406 = vmatprep.subr.mxu0 0.0
      %1407 = vmatpush1.msra.mxu0 %v1383
      %1408 = vmatprep.subr.mxu0 0.0
      %1409 = vmatpush1.msra.mxu0 %v1386
      %1410 = vmatprep.subr.mxu0 0.0
      %1411 = vmatpush1.msra.mxu0 %v1389
      %1412 = vmatprep.subr.mxu0 0.0
      %1413 = vmatpush1.msra.mxu0 %v1392
      %1414 = vmatprep.subr.mxu0 0.0
      %1415 = vmatpush1.msra.mxu0 0.0
      %1416 = vmatprep.subr.mxu0 0.0
      %1417 = vmatpush1.msra.mxu0 0.0
      %1418 = vmatprep.subr.mxu0 0.0
      %1419 = vmatpush1.msra.mxu0 0.0
      %1420 = vmatprep.subr.mxu0 0.0
      %1421 = vmatpush1.msra.mxu0 0.0
      %1422 = vmatprep.subr.mxu0 0.0
      %1423 = vmatpush1.msra.mxu0 0.0
      %1424 = vmatprep.subr.mxu0 0.0
      %1425 = vmatpush1.msra.mxu0 0.0
      %1426 = vmatprep.subr.mxu0 0.0
      %1427 = vmatpush1.msra.mxu0 0.0
      %1428 = vmatprep.subr.mxu0 0.0
      %1429 = vmatpush1.msra.mxu0 0.0
      %1430 = vmatprep.subr.mxu0 0.0
      %1431 = vmatpush1.msra.mxu0 0.0
      %1432 = vmatprep.subr.mxu0 0.0
      %1433 = vmatpush1.msra.mxu0 0.0
      %1434 = vmatprep.subr.mxu0 0.0
      %1435 = vmatpush1.msra.mxu0 0.0
      %1436 = vmatprep.subr.mxu0 0.0
      %1437 = vmatpush1.msra.mxu0 0.0
      %1438 = vmatprep.subr.mxu0 0.0
      %1439 = vmatpush1.msra.mxu0 0.0
      %1440 = vmatprep.subr.mxu0 0.0
      %1441 = vmatpush1.msra.mxu0 0.0
      %1442 = vmatprep.subr.mxu0 0.0
      %1443 = vmatpush1.msra.mxu0 0.0
      %1444 = vmatprep.subr.mxu0 0.0
      %1445 = vmatpush1.msra.mxu0 0.0
      %1446 = vmatprep.subr.mxu0 0.0
      %1447 = vmatpush1.msra.mxu0 0.0
      %1448 = vmatprep.subr.mxu0 0.0
      %1449 = vmatpush1.msra.mxu0 0.0
      %1450 = vmatprep.subr.mxu0 0.0
      %1451 = vmatpush1.msra.mxu0 0.0
      %1452 = vmatprep.subr.mxu0 0.0
      %1453 = vmatpush1.msra.mxu0 0.0
      %1454 = vmatprep.subr.mxu0 0.0
      %1455 = vmatpush1.msra.mxu0 0.0
      %1456 = vmatprep.subr.mxu0 0.0
      %1457 = vmatpush1.msra.mxu0 0.0
      %1458 = vmatprep.subr.mxu0 0.0
      %1459 = vmatpush1.msra.mxu0 0.0
      %1460 = vmatprep.subr.mxu0 0.0
      %1461 = vmatpush1.msra.mxu0 0.0
      %1462 = vmatprep.subr.mxu0 0.0
      %1463 = vmatpush1.msra.mxu0 0.0
      %1464 = vmatprep.subr.mxu0 0.0
      %1465 = vmatpush1.msra.mxu0 0.0
      %1466 = vmatprep.subr.mxu0 0.0
      %1467 = vmatpush1.msra.mxu0 0.0
      %1468 = vmatprep.subr.mxu0 0.0
      %1469 = vmatpush1.msra.mxu0 0.0
      %1470 = vmatprep.mubr.f32.mxu0 0.0
      %1471 = vmatmul.mubr.f32.gmra.mrb[0].mxu0 %v1395
      %v1472 = vpop.f32.mrb[0].mxu0
      %v1473 = vadd.f32 0.0, %v1472
      %v1474 = vpop.f32.mrb[0].mxu0
      %1475 = vmatprep.mubr.f32.mxu0 0.0
      %1476 = vmatmul.mubr.f32.gmra.mrb[0].mxu0 %v1398
      %v1477 = vpop.f32.mrb[0].mxu0
      %v1478 = vadd.f32 0.0, %v1477
      %v1479 = vpop.f32.mrb[0].mxu0
      %1480 = vmatprep.mubr.f32.mxu0 0.0
      %1481 = vmatmul.mubr.f32.gmra.mrb[0].mxu0 %v1401
      %v1482 = vpop.f32.mrb[0].mxu0
      %v1483 = vadd.f32 0.0, %v1482
      %v1484 = vpop.f32.mrb[0].mxu0
      %1485 = vmatprep.mubr.f32.mxu0 0.0
      %1486 = vmatmul.mubr.f32.gmra.mrb[0].mxu0 %v1404
      %v1487 = vpop.f32.mrb[0].mxu0
      %v1488 = vadd.f32 0.0, %v1487
      %v1489 = vpop.f32.mrb[0].mxu0
      %1490 = vdwg.mxu0
      %1492 = vset.pattern.permute.xlu0 0
      %1493 = vperm.xlu0 %1492, %v1473
      %v1494 = vpop.permute.xlu0 %1493
      %1497 = vset.pattern.permute.xlu0 0
      %1498 = vperm.xlu0 %1497, %v1478
      %v1499 = vpop.permute.xlu0 %1498
      %1502 = vset.pattern.permute.xlu0 0
      %1503 = vperm.xlu0 %1502, %v1483
      %v1504 = vpop.permute.xlu0 %1503
      %1507 = vset.pattern.permute.xlu0 0
      %1508 = vperm.xlu0 %1507, %v1488
      %v1509 = vpop.permute.xlu0 %1508
      %v1511 = vsub.f32 %v1361, %v1494
      %v1512 = vsub.f32 %v1362, %v1494
      %v1513 = vsub.f32 %v1365, %v1499
      %v1514 = vsub.f32 %v1366, %v1499
      %v1515 = vsub.f32 %v1369, %v1504
      %v1516 = vsub.f32 %v1370, %v1504
      %v1517 = vsub.f32 %v1373, %v1509
      %v1518 = vsub.f32 %v1374, %v1509
      %v1519 = vmul.f32 %v1511, %v1511
      %v1520 = vmul.f32 %v1512, %v1512
      %v1521 = vmul.f32 %v1513, %v1513
      %v1522 = vmul.f32 %v1514, %v1514
      %v1523 = vmul.f32 %v1515, %v1515
      %v1524 = vmul.f32 %v1516, %v1516
      %v1525 = vmul.f32 %v1517, %v1517
      %v1526 = vmul.f32 %v1518, %v1518
      %v1527 = vadd.f32 %v1519, %v1520
      %1528 = vadd.xlane.f32.xlu0 %v1527
      %v1529 = vpop.xlane.xlu0 %1528
      %v1530 = vadd.f32 %v1521, %v1522
      %1531 = vadd.xlane.f32.xlu0 %v1530
      %v1532 = vpop.xlane.xlu0 %1531
      %v1533 = vadd.f32 %v1523, %v1524
      %1534 = vadd.xlane.f32.xlu0 %v1533
      %v1535 = vpop.xlane.xlu0 %1534
      %v1536 = vadd.f32 %v1525, %v1526
      %1537 = vadd.xlane.f32.xlu0 %v1536
      %v1538 = vpop.xlane.xlu0 %1537
      %1539 = vmatprep.subr.mxu0 0.0
      %1540 = vmatpush1.msra.mxu0 %v1529
      %1541 = vmatprep.subr.mxu0 0.0
      %1542 = vmatpush1.msra.mxu0 %v1532
      %1543 = vmatprep.subr.mxu0 0.0
      %1544 = vmatpush1.msra.mxu0 %v1535
      %1545 = vmatprep.subr.mxu0 0.0
      %1546 = vmatpush1.msra.mxu0 %v1538
      %1547 = vmatprep.subr.mxu0 0.0
      %1548 = vmatpush1.msra.mxu0 0.0
      %1549 = vmatprep.subr.mxu0 0.0
      %1550 = vmatpush1.msra.mxu0 0.0
      %1551 = vmatprep.subr.mxu0 0.0
      %1552 = vmatpush1.msra.mxu0 0.0
      %1553 = vmatprep.subr.mxu0 0.0
      %1554 = vmatpush1.msra.mxu0 0.0
      %1555 = vmatprep.subr.mxu0 0.0
      %1556 = vmatpush1.msra.mxu0 0.0
      %1557 = vmatprep.subr.mxu0 0.0
      %1558 = vmatpush1.msra.mxu0 0.0
      %1559 = vmatprep.subr.mxu0 0.0
      %1560 = vmatpush1.msra.mxu0 0.0
      %1561 = vmatprep.subr.mxu0 0.0
      %1562 = vmatpush1.msra.mxu0 0.0
      %1563 = vmatprep.subr.mxu0 0.0
      %1564 = vmatpush1.msra.mxu0 0.0
      %1565 = vmatprep.subr.mxu0 0.0
      %1566 = vmatpush1.msra.mxu0 0.0
      %1567 = vmatprep.subr.mxu0 0.0
      %1568 = vmatpush1.msra.mxu0 0.0
      %1569 = vmatprep.subr.mxu0 0.0
      %1570 = vmatpush1.msra.mxu0 0.0
      %1571 = vmatprep.subr.mxu0 0.0
      %1572 = vmatpush1.msra.mxu0 0.0
      %1573 = vmatprep.subr.mxu0 0.0
      %1574 = vmatpush1.msra.mxu0 0.0
      %1575 = vmatprep.subr.mxu0 0.0
      %1576 = vmatpush1.msra.mxu0 0.0
      %1577 = vmatprep.subr.mxu0 0.0
      %1578 = vmatpush1.msra.mxu0 0.0
      %1579 = vmatprep.subr.mxu0 0.0
      %1580 = vmatpush1.msra.mxu0 0.0
      %1581 = vmatprep.subr.mxu0 0.0
      %1582 = vmatpush1.msra.mxu0 0.0
      %1583 = vmatprep.subr.mxu0 0.0
      %1584 = vmatpush1.msra.mxu0 0.0
      %1585 = vmatprep.subr.mxu0 0.0
      %1586 = vmatpush1.msra.mxu0 0.0
      %1587 = vmatprep.subr.mxu0 0.0
      %1588 = vmatpush1.msra.mxu0 0.0
      %1589 = vmatprep.subr.mxu0 0.0
      %1590 = vmatpush1.msra.mxu0 0.0
      %1591 = vmatprep.subr.mxu0 0.0
      %1592 = vmatpush1.msra.mxu0 0.0
      %1593 = vmatprep.subr.mxu0 0.0
      %1594 = vmatpush1.msra.mxu0 0.0
      %1595 = vmatprep.subr.mxu0 0.0
      %1596 = vmatpush1.msra.mxu0 0.0
      %1597 = vmatprep.subr.mxu0 0.0
      %1598 = vmatpush1.msra.mxu0 0.0
      %1599 = vmatprep.subr.mxu0 0.0
      %1600 = vmatpush1.msra.mxu0 0.0
      %1601 = vmatprep.subr.mxu0 0.0
      %1602 = vmatpush1.msra.mxu0 0.0
      %1603 = vmatprep.mubr.f32.mxu0 0.0
      %1604 = vmatmul.mubr.f32.gmra.mrb[0].mxu0 %v1395
      %v1605 = vpop.f32.mrb[0].mxu0
      %v1606 = vadd.f32 1e-05, %v1605
      %v1607 = vpop.f32.mrb[0].mxu0
      %1608 = vmatprep.mubr.f32.mxu0 0.0
      %1609 = vmatmul.mubr.f32.gmra.mrb[0].mxu0 %v1398
      %v1610 = vpop.f32.mrb[0].mxu0
      %v1611 = vadd.f32 1e-05, %v1610
      %v1612 = vpop.f32.mrb[0].mxu0
      %1613 = vmatprep.mubr.f32.mxu0 0.0
      %1614 = vmatmul.mubr.f32.gmra.mrb[0].mxu0 %v1401
      %v1615 = vpop.f32.mrb[0].mxu0
      %v1616 = vadd.f32 1e-05, %v1615
      %v1617 = vpop.f32.mrb[0].mxu0
      %1618 = vmatprep.mubr.f32.mxu0 0.0
      %1619 = vmatmul.mubr.f32.gmra.mrb[0].mxu0 %v1404
      %v1620 = vpop.f32.mrb[0].mxu0
      %v1621 = vadd.f32 1e-05, %v1620
      %v1622 = vpop.f32.mrb[0].mxu0
      %1623 = vdwg.mxu0
      %v1624 = vrsqrt.pop %v1606
      %v1625 = vrsqrt.pop %v1611
      %v1626 = vrsqrt.pop %v1616
      %v1627 = vrsqrt.pop %v1621
      %1629 = vset.pattern.permute.xlu0 0
      %1630 = vperm.xlu0 %1629, %v1624
      %v1631 = vpop.permute.xlu0 %1630
      %1634 = vset.pattern.permute.xlu0 0
      %1635 = vperm.xlu0 %1634, %v1625
      %v1636 = vpop.permute.xlu0 %1635
      %1639 = vset.pattern.permute.xlu0 0
      %1640 = vperm.xlu0 %1639, %v1626
      %v1641 = vpop.permute.xlu0 %1640
      %1644 = vset.pattern.permute.xlu0 0
      %1645 = vperm.xlu0 %1644, %v1627
      %v1646 = vpop.permute.xlu0 %1645
      %v1648 = vmul.f32 %v1511, %v1631
      %v1649 = vmul.f32 %v1512, %v1631
      %v1650 = vmul.f32 %v1513, %v1636
      %v1651 = vmul.f32 %v1514, %v1636
      %v1652 = vmul.f32 %v1515, %v1641
      %v1653 = vmul.f32 %v1516, %v1641
      %v1654 = vmul.f32 %v1517, %v1646
      %v1655 = vmul.f32 %v1518, %v1646
      %v1656 = vadd.f32 %v1363, %v1364
      %1657 = vadd.xlane.f32.xlu0 %v1656
      %v1658 = vpop.xlane.xlu0 %1657
      %v1659 = vadd.f32 %v1367, %v1368
      %1660 = vadd.xlane.f32.xlu0 %v1659
      %v1661 = vpop.xlane.xlu0 %1660
      %v1662 = vadd.f32 %v1371, %v1372
      %1663 = vadd.xlane.f32.xlu0 %v1662
      %v1664 = vpop.xlane.xlu0 %1663
      %v1665 = vadd.f32 %v1375, %v1376
      %1666 = vadd.xlane.f32.xlu0 %v1665
      %v1667 = vpop.xlane.xlu0 %1666
      %1668 = vmatprep.subr.mxu0 0.0
      %1669 = vmatpush1.msra.mxu0 %v1658
      %1670 = vmatprep.subr.mxu0 0.0
      %1671 = vmatpush1.msra.mxu0 %v1661
      %1672 = vmatprep.subr.mxu0 0.0
      %1673 = vmatpush1.msra.mxu0 %v1664
      %1674 = vmatprep.subr.mxu0 0.0
      %1675 = vmatpush1.msra.mxu0 %v1667
      %1676 = vmatprep.subr.mxu0 0.0
      %1677 = vmatpush1.msra.mxu0 0.0
      %1678 = vmatprep.subr.mxu0 0.0
      %1679 = vmatpush1.msra.mxu0 0.0
      %1680 = vmatprep.subr.mxu0 0.0
      %1681 = vmatpush1.msra.mxu0 0.0
      %1682 = vmatprep.subr.mxu0 0.0
      %1683 = vmatpush1.msra.mxu0 0.0
      %1684 = vmatprep.subr.mxu0 0.0
      %1685 = vmatpush1.msra.mxu0 0.0
      %1686 = vmatprep.subr.mxu0 0.0
      %1687 = vmatpush1.msra.mxu0 0.0
      %1688 = vmatprep.subr.mxu0 0.0
      %1689 = vmatpush1.msra.mxu0 0.0
      %1690 = vmatprep.subr.mxu0 0.0
      %1691 = vmatpush1.msra.mxu0 0.0
      %1692 = vmatprep.subr.mxu0 0.0
      %1693 = vmatpush1.msra.mxu0 0.0
      %1694 = vmatprep.subr.mxu0 0.0
      %1695 = vmatpush1.msra.mxu0 0.0
      %1696 = vmatprep.subr.mxu0 0.0
      %1697 = vmatpush1.msra.mxu0 0.0
      %1698 = vmatprep.subr.mxu0 0.0
      %1699 = vmatpush1.msra.mxu0 0.0
      %1700 = vmatprep.subr.mxu0 0.0
      %1701 = vmatpush1.msra.mxu0 0.0
      %1702 = vmatprep.subr.mxu0 0.0
      %1703 = vmatpush1.msra.mxu0 0.0
      %1704 = vmatprep.subr.mxu0 0.0
      %1705 = vmatpush1.msra.mxu0 0.0
      %1706 = vmatprep.subr.mxu0 0.0
      %1707 = vmatpush1.msra.mxu0 0.0
      %1708 = vmatprep.subr.mxu0 0.0
      %1709 = vmatpush1.msra.mxu0 0.0
      %1710 = vmatprep.subr.mxu0 0.0
      %1711 = vmatpush1.msra.mxu0 0.0
      %1712 = vmatprep.subr.mxu0 0.0
      %1713 = vmatpush1.msra.mxu0 0.0
      %1714 = vmatprep.subr.mxu0 0.0
      %1715 = vmatpush1.msra.mxu0 0.0
      %1716 = vmatprep.subr.mxu0 0.0
      %1717 = vmatpush1.msra.mxu0 0.0
      %1718 = vmatprep.subr.mxu0 0.0
      %1719 = vmatpush1.msra.mxu0 0.0
      %1720 = vmatprep.subr.mxu0 0.0
      %1721 = vmatpush1.msra.mxu0 0.0
      %1722 = vmatprep.subr.mxu0 0.0
      %1723 = vmatpush1.msra.mxu0 0.0
      %1724 = vmatprep.subr.mxu0 0.0
      %1725 = vmatpush1.msra.mxu0 0.0
      %1726 = vmatprep.subr.mxu0 0.0
      %1727 = vmatpush1.msra.mxu0 0.0
      %1728 = vmatprep.subr.mxu0 0.0
      %1729 = vmatpush1.msra.mxu0 0.0
      %1730 = vmatprep.subr.mxu0 0.0
      %1731 = vmatpush1.msra.mxu0 0.0
      %1732 = vmatprep.mubr.f32.mxu0 0.0
      %1733 = vmatmul.mubr.f32.gmra.mrb[0].mxu0 %v1395
      %v1734 = vpop.f32.mrb[0].mxu0
      %v1735 = vadd.f32 0.0, %v1734
      %v1736 = vpop.f32.mrb[0].mxu0
      %1737 = vmatprep.mubr.f32.mxu0 0.0
      %1738 = vmatmul.mubr.f32.gmra.mrb[0].mxu0 %v1398
      %v1739 = vpop.f32.mrb[0].mxu0
      %v1740 = vadd.f32 0.0, %v1739
      %v1741 = vpop.f32.mrb[0].mxu0
      %1742 = vmatprep.mubr.f32.mxu0 0.0
      %1743 = vmatmul.mubr.f32.gmra.mrb[0].mxu0 %v1401
      %v1744 = vpop.f32.mrb[0].mxu0
      %v1745 = vadd.f32 0.0, %v1744
      %v1746 = vpop.f32.mrb[0].mxu0
      %1747 = vmatprep.mubr.f32.mxu0 0.0
      %1748 = vmatmul.mubr.f32.gmra.mrb[0].mxu0 %v1404
      %v1749 = vpop.f32.mrb[0].mxu0
      %v1750 = vadd.f32 0.0, %v1749
      %v1751 = vpop.f32.mrb[0].mxu0
      %1752 = vdwg.mxu0
      %1754 = vset.pattern.permute.xlu0 0
      %1755 = vperm.xlu0 %1754, %v1735
      %v1756 = vpop.permute.xlu0 %1755
      %1759 = vset.pattern.permute.xlu0 0
      %1760 = vperm.xlu0 %1759, %v1740
      %v1761 = vpop.permute.xlu0 %1760
      %1764 = vset.pattern.permute.xlu0 0
      %1765 = vperm.xlu0 %1764, %v1745
      %v1766 = vpop.permute.xlu0 %1765
      %1769 = vset.pattern.permute.xlu0 0
      %1770 = vperm.xlu0 %1769, %v1750
      %v1771 = vpop.permute.xlu0 %1770
      %v1773 = vsub.f32 %v1363, %v1756
      %v1774 = vsub.f32 %v1364, %v1756
      %v1775 = vsub.f32 %v1367, %v1761
      %v1776 = vsub.f32 %v1368, %v1761
      %v1777 = vsub.f32 %v1371, %v1766
      %v1778 = vsub.f32 %v1372, %v1766
      %v1779 = vsub.f32 %v1375, %v1771
      %v1780 = vsub.f32 %v1376, %v1771
      %v1781 = vmul.f32 %v1773, %v1773
      %v1782 = vmul.f32 %v1774, %v1774
      %v1783 = vmul.f32 %v1775, %v1775
      %v1784 = vmul.f32 %v1776, %v1776
      %v1785 = vmul.f32 %v1777, %v1777
      %v1786 = vmul.f32 %v1778, %v1778
      %v1787 = vmul.f32 %v1779, %v1779
      %v1788 = vmul.f32 %v1780, %v1780
      %v1789 = vadd.f32 %v1781, %v1782
      %1790 = vadd.xlane.f32.xlu0 %v1789
      %v1791 = vpop.xlane.xlu0 %1790
      %v1792 = vadd.f32 %v1783, %v1784
      %1793 = vadd.xlane.f32.xlu0 %v1792
      %v1794 = vpop.xlane.xlu0 %1793
      %v1795 = vadd.f32 %v1785, %v1786
      %1796 = vadd.xlane.f32.xlu0 %v1795
      %v1797 = vpop.xlane.xlu0 %1796
      %v1798 = vadd.f32 %v1787, %v1788
      %1799 = vadd.xlane.f32.xlu0 %v1798
      %v1800 = vpop.xlane.xlu0 %1799
      %1801 = vmatprep.subr.mxu0 0.0
      %1802 = vmatpush1.msra.mxu0 %v1791
      %1803 = vmatprep.subr.mxu0 0.0
      %1804 = vmatpush1.msra.mxu0 %v1794
      %1805 = vmatprep.subr.mxu0 0.0
      %1806 = vmatpush1.msra.mxu0 %v1797
      %1807 = vmatprep.subr.mxu0 0.0
      %1808 = vmatpush1.msra.mxu0 %v1800
      %1809 = vmatprep.subr.mxu0 0.0
      %1810 = vmatpush1.msra.mxu0 0.0
      %1811 = vmatprep.subr.mxu0 0.0
      %1812 = vmatpush1.msra.mxu0 0.0
      %1813 = vmatprep.subr.mxu0 0.0
      %1814 = vmatpush1.msra.mxu0 0.0
      %1815 = vmatprep.subr.mxu0 0.0
      %1816 = vmatpush1.msra.mxu0 0.0
      %1817 = vmatprep.subr.mxu0 0.0
      %1818 = vmatpush1.msra.mxu0 0.0
      %1819 = vmatprep.subr.mxu0 0.0
      %1820 = vmatpush1.msra.mxu0 0.0
      %1821 = vmatprep.subr.mxu0 0.0
      %1822 = vmatpush1.msra.mxu0 0.0
      %1823 = vmatprep.subr.mxu0 0.0
      %1824 = vmatpush1.msra.mxu0 0.0
      %1825 = vmatprep.subr.mxu0 0.0
      %1826 = vmatpush1.msra.mxu0 0.0
      %1827 = vmatprep.subr.mxu0 0.0
      %1828 = vmatpush1.msra.mxu0 0.0
      %1829 = vmatprep.subr.mxu0 0.0
      %1830 = vmatpush1.msra.mxu0 0.0
      %1831 = vmatprep.subr.mxu0 0.0
      %1832 = vmatpush1.msra.mxu0 0.0
      %1833 = vmatprep.subr.mxu0 0.0
      %1834 = vmatpush1.msra.mxu0 0.0
      %1835 = vmatprep.subr.mxu0 0.0
      %1836 = vmatpush1.msra.mxu0 0.0
      %1837 = vmatprep.subr.mxu0 0.0
      %1838 = vmatpush1.msra.mxu0 0.0
      %1839 = vmatprep.subr.mxu0 0.0
      %1840 = vmatpush1.msra.mxu0 0.0
      %1841 = vmatprep.subr.mxu0 0.0
      %1842 = vmatpush1.msra.mxu0 0.0
      %1843 = vmatprep.subr.mxu0 0.0
      %1844 = vmatpush1.msra.mxu0 0.0
      %1845 = vmatprep.subr.mxu0 0.0
      %1846 = vmatpush1.msra.mxu0 0.0
      %1847 = vmatprep.subr.mxu0 0.0
      %1848 = vmatpush1.msra.mxu0 0.0
      %1849 = vmatprep.subr.mxu0 0.0
      %1850 = vmatpush1.msra.mxu0 0.0
      %1851 = vmatprep.subr.mxu0 0.0
      %1852 = vmatpush1.msra.mxu0 0.0
      %1853 = vmatprep.subr.mxu0 0.0
      %1854 = vmatpush1.msra.mxu0 0.0
      %1855 = vmatprep.subr.mxu0 0.0
      %1856 = vmatpush1.msra.mxu0 0.0
      %1857 = vmatprep.subr.mxu0 0.0
      %1858 = vmatpush1.msra.mxu0 0.0
      %1859 = vmatprep.subr.mxu0 0.0
      %1860 = vmatpush1.msra.mxu0 0.0
      %1861 = vmatprep.subr.mxu0 0.0
      %1862 = vmatpush1.msra.mxu0 0.0
      %1863 = vmatprep.subr.mxu0 0.0
      %1864 = vmatpush1.msra.mxu0 0.0
      %1865 = vmatprep.mubr.f32.mxu0 0.0
      %1866 = vmatmul.mubr.f32.gmra.mrb[0].mxu0 %v1395
      %v1867 = vpop.f32.mrb[0].mxu0
      %v1868 = vadd.f32 1e-05, %v1867
      %v1869 = vpop.f32.mrb[0].mxu0
      %1870 = vmatprep.mubr.f32.mxu0 0.0
      %1871 = vmatmul.mubr.f32.gmra.mrb[0].mxu0 %v1398
      %v1872 = vpop.f32.mrb[0].mxu0
      %v1873 = vadd.f32 1e-05, %v1872
      %v1874 = vpop.f32.mrb[0].mxu0
      %1875 = vmatprep.mubr.f32.mxu0 0.0
      %1876 = vmatmul.mubr.f32.gmra.mrb[0].mxu0 %v1401
      %v1877 = vpop.f32.mrb[0].mxu0
      %v1878 = vadd.f32 1e-05, %v1877
      %v1879 = vpop.f32.mrb[0].mxu0
      %1880 = vmatprep.mubr.f32.mxu0 0.0
      %1881 = vmatmul.mubr.f32.gmra.mrb[0].mxu0 %v1404
      %v1882 = vpop.f32.mrb[0].mxu0
      %v1883 = vadd.f32 1e-05, %v1882
      %v1884 = vpop.f32.mrb[0].mxu0
      %1885 = vdwg.mxu0
      %v1886 = vrsqrt.pop %v1868
      %v1887 = vrsqrt.pop %v1873
      %v1888 = vrsqrt.pop %v1878
      %v1889 = vrsqrt.pop %v1883
      %1891 = vset.pattern.permute.xlu0 0
      %1892 = vperm.xlu0 %1891, %v1886
      %v1893 = vpop.permute.xlu0 %1892
      %1896 = vset.pattern.permute.xlu0 0
      %1897 = vperm.xlu0 %1896, %v1887
      %v1898 = vpop.permute.xlu0 %1897
      %1901 = vset.pattern.permute.xlu0 0
      %1902 = vperm.xlu0 %1901, %v1888
      %v1903 = vpop.permute.xlu0 %1902
      %1906 = vset.pattern.permute.xlu0 0
      %1907 = vperm.xlu0 %1906, %v1889
      %v1908 = vpop.permute.xlu0 %1907
      %v1910 = vmul.f32 %v1773, %v1893
      %v1911 = vmul.f32 %v1774, %v1893
      %v1912 = vmul.f32 %v1775, %v1898
      %v1913 = vmul.f32 %v1776, %v1898
      %v1914 = vmul.f32 %v1777, %v1903
      %v1915 = vmul.f32 %v1778, %v1903
      %v1916 = vmul.f32 %v1779, %v1908
      %v1917 = vmul.f32 %v1780, %v1908
      %1918 = vrot.lane.b32.xlu0 %v1648, 17
      %v1919 = vpop.permute.xlu0 %1918
      %1920 = vrot.lane.b32.xlu0 %v1650, 17
      %v1921 = vpop.permute.xlu0 %1920
      %1922 = vrot.lane.b32.xlu0 %v1652, 17
      %v1923 = vpop.permute.xlu0 %1922
      %1924 = vrot.lane.b32.xlu0 %v1654, 17
      %v1925 = vpop.permute.xlu0 %1924
      %1926 = vrot.lane.b32.xlu0 %v1649, 17
      %v1927 = vpop.permute.xlu0 %1926
      %1928 = vrot.lane.b32.xlu0 %v1651, 17
      %v1929 = vpop.permute.xlu0 %1928
      %1930 = vrot.lane.b32.xlu0 %v1653, 17
      %v1931 = vpop.permute.xlu0 %1930
      %1932 = vrot.lane.b32.xlu0 %v1655, 17
      %v1933 = vpop.permute.xlu0 %1932
      %1934 = vrot.lane.b32.xlu0 %v1910, 17
      %v1935 = vpop.permute.xlu0 %1934
      %1936 = vrot.lane.b32.xlu0 %v1912, 17
      %v1937 = vpop.permute.xlu0 %1936
      %1938 = vrot.lane.b32.xlu0 %v1914, 17
      %v1939 = vpop.permute.xlu0 %1938
      %1940 = vrot.lane.b32.xlu0 %v1916, 17
      %v1941 = vpop.permute.xlu0 %1940
      %1942 = vrot.lane.b32.xlu0 %v1911, 17
      %v1943 = vpop.permute.xlu0 %1942
      %1944 = vrot.lane.b32.xlu0 %v1913, 17
      %v1945 = vpop.permute.xlu0 %1944
      %1946 = vrot.lane.b32.xlu0 %v1915, 17
      %v1947 = vpop.permute.xlu0 %1946
      %1948 = vrot.lane.b32.xlu0 %v1917, 17
      %v1949 = vpop.permute.xlu0 %1948
      %v1950 = vsel %vm401, %v1935, %v1943
      %v1951 = vsel %vm401, %v1937, %v1945
      %v1952 = vsel %vm401, %v1939, %v1947
      %v1953 = vsel %vm401, %v1941, %v1949
      %v1954 = vsel %vm401, %v1927, %v1935
      %v1955 = vsel %vm401, %v1929, %v1937
      %v1956 = vsel %vm401, %v1931, %v1939
      %v1957 = vsel %vm401, %v1933, %v1941
      %v1958 = vsel %vm401, %v1919, %v1927
      %v1959 = vsel %vm401, %v1921, %v1929
      %v1960 = vsel %vm401, %v1923, %v1931
      %v1961 = vsel %vm401, %v1925, %v1933
      %v1962 = vsel %vm401, %v1943, %v1919
      %v1963 = vsel %vm401, %v1945, %v1921
      %v1964 = vsel %vm401, %v1947, %v1923
      %v1965 = vsel %vm401, %v1949, %v1925
      %v1966 = vld [vmem:[%s9] ss:$8 sm:$0xf]
      %v1968 = vlaneseq
      %v1969 = vshrl.u32 %v1968, 7
      %v1970 = vsub.s32 0, %v1969
      %v1971 = vrot.slane %v1966, %v1970
      %v1972 = vlaneseq
      %v1973 = vshrl.u32 %v1972, 7
      %v1974 = vsub.s32 1, %v1973
      %v1975 = vrot.slane %v1966, %v1974
      %v1976 = vlaneseq
      %v1977 = vshrl.u32 %v1976, 7
      %v1978 = vsub.s32 2, %v1977
      %v1979 = vrot.slane %v1966, %v1978
      %v1980 = vlaneseq
      %v1981 = vshrl.u32 %v1980, 7
      %v1982 = vsub.s32 3, %v1981
      %v1983 = vrot.slane %v1966, %v1982
      %v1988 = vmul.f32 %v1962, %v1971
      %v1989 = vmul.f32 %v1958, %v1975
      %v1990 = vmul.f32 %v1954, %v1979
      %v1991 = vmul.f32 %v1950, %v1983
      %v1992 = vmul.f32 %v1963, %v1971
      %v1993 = vmul.f32 %v1959, %v1975
      %v1994 = vmul.f32 %v1955, %v1979
      %v1995 = vmul.f32 %v1951, %v1983
      %v1996 = vmul.f32 %v1964, %v1971
      %v1997 = vmul.f32 %v1960, %v1975
      %v1998 = vmul.f32 %v1956, %v1979
      %v1999 = vmul.f32 %v1952, %v1983
      %v2000 = vmul.f32 %v1965, %v1971
      %v2001 = vmul.f32 %v1961, %v1975
      %v2002 = vmul.f32 %v1957, %v1979
      %v2003 = vmul.f32 %v1953, %v1983
      %2004 = vst [vmem:[#allocation2] sm:$0xff] %v1988
      %2005 = vst [vmem:[#allocation2 + $0x8] sm:$0xff] %v1989
      %2006 = vst [vmem:[#allocation2 + $0x10] sm:$0xff] %v1990
      %2007 = vst [vmem:[#allocation2 + $0x18] sm:$0xff] %v1991
      %2008 = vst [vmem:[#allocation2 + $0x20] sm:$0xff] %v1992
      %2009 = vst [vmem:[#allocation2 + $0x28] sm:$0xff] %v1993
      %2010 = vst [vmem:[#allocation2 + $0x30] sm:$0xff] %v1994
      %2011 = vst [vmem:[#allocation2 + $0x38] sm:$0xff] %v1995
      %2012 = vst [vmem:[#allocation2 + $0x40] sm:$0xff] %v1996
      %2013 = vst [vmem:[#allocation2 + $0x48] sm:$0xff] %v1997
      %2014 = vst [vmem:[#allocation2 + $0x50] sm:$0xff] %v1998
      %2015 = vst [vmem:[#allocation2 + $0x58] sm:$0xff] %v1999
      %2016 = vst [vmem:[#allocation2 + $0x60] sm:$0xff] %v2000
      %2017 = vst [vmem:[#allocation2 + $0x68] sm:$0xff] %v2001
      %2018 = vst [vmem:[#allocation2 + $0x70] sm:$0xff] %v2002
      %2019 = vst [vmem:[#allocation2 + $0x78] sm:$0xff] %v2003
      %2020 = vrot.lane.b32.xlu0 %v1648, 16
      %v2021 = vpop.permute.xlu0 %2020
      %2022 = vrot.lane.b32.xlu0 %v1650, 16
      %v2023 = vpop.permute.xlu0 %2022
      %2024 = vrot.lane.b32.xlu0 %v1652, 16
      %v2025 = vpop.permute.xlu0 %2024
      %2026 = vrot.lane.b32.xlu0 %v1654, 16
      %v2027 = vpop.permute.xlu0 %2026
      %2028 = vrot.lane.b32.xlu0 %v1649, 16
      %v2029 = vpop.permute.xlu0 %2028
      %2030 = vrot.lane.b32.xlu0 %v1651, 16
      %v2031 = vpop.permute.xlu0 %2030
      %2032 = vrot.lane.b32.xlu0 %v1653, 16
      %v2033 = vpop.permute.xlu0 %2032
      %2034 = vrot.lane.b32.xlu0 %v1655, 16
      %v2035 = vpop.permute.xlu0 %2034
      %2036 = vrot.lane.b32.xlu0 %v1910, 16
      %v2037 = vpop.permute.xlu0 %2036
      %2038 = vrot.lane.b32.xlu0 %v1912, 16
      %v2039 = vpop.permute.xlu0 %2038
      %2040 = vrot.lane.b32.xlu0 %v1914, 16
      %v2041 = vpop.permute.xlu0 %2040
      %2042 = vrot.lane.b32.xlu0 %v1916, 16
      %v2043 = vpop.permute.xlu0 %2042
      %2044 = vrot.lane.b32.xlu0 %v1911, 16
      %v2045 = vpop.permute.xlu0 %2044
      %2046 = vrot.lane.b32.xlu0 %v1913, 16
      %v2047 = vpop.permute.xlu0 %2046
      %2048 = vrot.lane.b32.xlu0 %v1915, 16
      %v2049 = vpop.permute.xlu0 %2048
      %2050 = vrot.lane.b32.xlu0 %v1917, 16
      %v2051 = vpop.permute.xlu0 %2050
      %v2052 = vsel %vm444, %v2037, %v2045
      %v2053 = vsel %vm444, %v2039, %v2047
      %v2054 = vsel %vm444, %v2041, %v2049
      %v2055 = vsel %vm444, %v2043, %v2051
      %v2056 = vsel %vm444, %v2029, %v2037
      %v2057 = vsel %vm444, %v2031, %v2039
      %v2058 = vsel %vm444, %v2033, %v2041
      %v2059 = vsel %vm444, %v2035, %v2043
      %v2060 = vsel %vm444, %v2021, %v2029
      %v2061 = vsel %vm444, %v2023, %v2031
      %v2062 = vsel %vm444, %v2025, %v2033
      %v2063 = vsel %vm444, %v2027, %v2035
      %v2064 = vsel %vm444, %v2045, %v2021
      %v2065 = vsel %vm444, %v2047, %v2023
      %v2066 = vsel %vm444, %v2049, %v2025
      %v2067 = vsel %vm444, %v2051, %v2027
      %v2068 = vld [vmem:[%s449] ss:$8 sm:$0xf]
      %v2070 = vlaneseq
      %v2071 = vshrl.u32 %v2070, 7
      %v2072 = vsub.s32 0, %v2071
      %v2073 = vrot.slane %v2068, %v2072
      %v2074 = vlaneseq
      %v2075 = vshrl.u32 %v2074, 7
      %v2076 = vsub.s32 1, %v2075
      %v2077 = vrot.slane %v2068, %v2076
      %v2078 = vlaneseq
      %v2079 = vshrl.u32 %v2078, 7
      %v2080 = vsub.s32 2, %v2079
      %v2081 = vrot.slane %v2068, %v2080
      %v2082 = vlaneseq
      %v2083 = vshrl.u32 %v2082, 7
      %v2084 = vsub.s32 3, %v2083
      %v2085 = vrot.slane %v2068, %v2084
      %v2090 = vmul.f32 %v2064, %v2073
      %v2091 = vmul.f32 %v2060, %v2077
      %v2092 = vmul.f32 %v2056, %v2081
      %v2093 = vmul.f32 %v2052, %v2085
      %v2094 = vmul.f32 %v2065, %v2073
      %v2095 = vmul.f32 %v2061, %v2077
      %v2096 = vmul.f32 %v2057, %v2081
      %v2097 = vmul.f32 %v2053, %v2085
      %v2098 = vmul.f32 %v2066, %v2073
      %v2099 = vmul.f32 %v2062, %v2077
      %v2100 = vmul.f32 %v2058, %v2081
      %v2101 = vmul.f32 %v2054, %v2085
      %v2102 = vmul.f32 %v2067, %v2073
      %v2103 = vmul.f32 %v2063, %v2077
      %v2104 = vmul.f32 %v2059, %v2081
      %v2105 = vmul.f32 %v2055, %v2085
      %2106 = vst [vmem:[#allocation2 + $0x80] sm:$0xff] %v2090
      %2107 = vst [vmem:[#allocation2 + $0x88] sm:$0xff] %v2091
      %2108 = vst [vmem:[#allocation2 + $0x90] sm:$0xff] %v2092
      %2109 = vst [vmem:[#allocation2 + $0x98] sm:$0xff] %v2093
      %2110 = vst [vmem:[#allocation2 + $0xa0] sm:$0xff] %v2094
      %2111 = vst [vmem:[#allocation2 + $0xa8] sm:$0xff] %v2095
      %2112 = vst [vmem:[#allocation2 + $0xb0] sm:$0xff] %v2096
      %2113 = vst [vmem:[#allocation2 + $0xb8] sm:$0xff] %v2097
      %2114 = vst [vmem:[#allocation2 + $0xc0] sm:$0xff] %v2098
      %2115 = vst [vmem:[#allocation2 + $0xc8] sm:$0xff] %v2099
      %2116 = vst [vmem:[#allocation2 + $0xd0] sm:$0xff] %v2100
      %2117 = vst [vmem:[#allocation2 + $0xd8] sm:$0xff] %v2101
      %2118 = vst [vmem:[#allocation2 + $0xe0] sm:$0xff] %v2102
      %2119 = vst [vmem:[#allocation2 + $0xe8] sm:$0xff] %v2103
      %2120 = vst [vmem:[#allocation2 + $0xf0] sm:$0xff] %v2104
      %2121 = vst [vmem:[#allocation2 + $0xf8] sm:$0xff] %v2105
      %2122 = vrot.lane.b32.xlu0 %v1648, 15
      %v2123 = vpop.permute.xlu0 %2122
      %2124 = vrot.lane.b32.xlu0 %v1650, 15
      %v2125 = vpop.permute.xlu0 %2124
      %2126 = vrot.lane.b32.xlu0 %v1652, 15
      %v2127 = vpop.permute.xlu0 %2126
      %2128 = vrot.lane.b32.xlu0 %v1654, 15
      %v2129 = vpop.permute.xlu0 %2128
      %2130 = vrot.lane.b32.xlu0 %v1649, 15
      %v2131 = vpop.permute.xlu0 %2130
      %2132 = vrot.lane.b32.xlu0 %v1651, 15
      %v2133 = vpop.permute.xlu0 %2132
      %2134 = vrot.lane.b32.xlu0 %v1653, 15
      %v2135 = vpop.permute.xlu0 %2134
      %2136 = vrot.lane.b32.xlu0 %v1655, 15
      %v2137 = vpop.permute.xlu0 %2136
      %2138 = vrot.lane.b32.xlu0 %v1910, 15
      %v2139 = vpop.permute.xlu0 %2138
      %2140 = vrot.lane.b32.xlu0 %v1912, 15
      %v2141 = vpop.permute.xlu0 %2140
      %2142 = vrot.lane.b32.xlu0 %v1914, 15
      %v2143 = vpop.permute.xlu0 %2142
      %2144 = vrot.lane.b32.xlu0 %v1916, 15
      %v2145 = vpop.permute.xlu0 %2144
      %2146 = vrot.lane.b32.xlu0 %v1911, 15
      %v2147 = vpop.permute.xlu0 %2146
      %2148 = vrot.lane.b32.xlu0 %v1913, 15
      %v2149 = vpop.permute.xlu0 %2148
      %2150 = vrot.lane.b32.xlu0 %v1915, 15
      %v2151 = vpop.permute.xlu0 %2150
      %2152 = vrot.lane.b32.xlu0 %v1917, 15
      %v2153 = vpop.permute.xlu0 %2152
      %v2154 = vsel %vm488, %v2139, %v2147
      %v2155 = vsel %vm488, %v2141, %v2149
      %v2156 = vsel %vm488, %v2143, %v2151
      %v2157 = vsel %vm488, %v2145, %v2153
      %v2158 = vsel %vm488, %v2131, %v2139
      %v2159 = vsel %vm488, %v2133, %v2141
      %v2160 = vsel %vm488, %v2135, %v2143
      %v2161 = vsel %vm488, %v2137, %v2145
      %v2162 = vsel %vm488, %v2123, %v2131
      %v2163 = vsel %vm488, %v2125, %v2133
      %v2164 = vsel %vm488, %v2127, %v2135
      %v2165 = vsel %vm488, %v2129, %v2137
      %v2166 = vsel %vm488, %v2147, %v2123
      %v2167 = vsel %vm488, %v2149, %v2125
      %v2168 = vsel %vm488, %v2151, %v2127
      %v2169 = vsel %vm488, %v2153, %v2129
      %v2170 = vld [vmem:[%s493] ss:$8 sm:$0xf]
      %v2172 = vlaneseq
      %v2173 = vshrl.u32 %v2172, 7
      %v2174 = vsub.s32 0, %v2173
      %v2175 = vrot.slane %v2170, %v2174
      %v2176 = vlaneseq
      %v2177 = vshrl.u32 %v2176, 7
      %v2178 = vsub.s32 1, %v2177
      %v2179 = vrot.slane %v2170, %v2178
      %v2180 = vlaneseq
      %v2181 = vshrl.u32 %v2180, 7
      %v2182 = vsub.s32 2, %v2181
      %v2183 = vrot.slane %v2170, %v2182
      %v2184 = vlaneseq
      %v2185 = vshrl.u32 %v2184, 7
      %v2186 = vsub.s32 3, %v2185
      %v2187 = vrot.slane %v2170, %v2186
      %v2192 = vmul.f32 %v2166, %v2175
      %v2193 = vmul.f32 %v2162, %v2179
      %v2194 = vmul.f32 %v2158, %v2183
      %v2195 = vmul.f32 %v2154, %v2187
      %v2196 = vmul.f32 %v2167, %v2175
      %v2197 = vmul.f32 %v2163, %v2179
      %v2198 = vmul.f32 %v2159, %v2183
      %v2199 = vmul.f32 %v2155, %v2187
      %v2200 = vmul.f32 %v2168, %v2175
      %v2201 = vmul.f32 %v2164, %v2179
      %v2202 = vmul.f32 %v2160, %v2183
      %v2203 = vmul.f32 %v2156, %v2187
      %v2204 = vmul.f32 %v2169, %v2175
      %v2205 = vmul.f32 %v2165, %v2179
      %v2206 = vmul.f32 %v2161, %v2183
      %v2207 = vmul.f32 %v2157, %v2187
      %2208 = vst [vmem:[#allocation2 + $0x100] sm:$0xff] %v2192
      %2209 = vst [vmem:[#allocation2 + $0x108] sm:$0xff] %v2193
      %2210 = vst [vmem:[#allocation2 + $0x110] sm:$0xff] %v2194
      %2211 = vst [vmem:[#allocation2 + $0x118] sm:$0xff] %v2195
      %2212 = vst [vmem:[#allocation2 + $0x120] sm:$0xff] %v2196
      %2213 = vst [vmem:[#allocation2 + $0x128] sm:$0xff] %v2197
      %2214 = vst [vmem:[#allocation2 + $0x130] sm:$0xff] %v2198
      %2215 = vst [vmem:[#allocation2 + $0x138] sm:$0xff] %v2199
      %2216 = vst [vmem:[#allocation2 + $0x140] sm:$0xff] %v2200
      %2217 = vst [vmem:[#allocation2 + $0x148] sm:$0xff] %v2201
      %2218 = vst [vmem:[#allocation2 + $0x150] sm:$0xff] %v2202
      %2219 = vst [vmem:[#allocation2 + $0x158] sm:$0xff] %v2203
      %2220 = vst [vmem:[#allocation2 + $0x160] sm:$0xff] %v2204
      %2221 = vst [vmem:[#allocation2 + $0x168] sm:$0xff] %v2205
      %2222 = vst [vmem:[#allocation2 + $0x170] sm:$0xff] %v2206
      %2223 = vst [vmem:[#allocation2 + $0x178] sm:$0xff] %v2207
      %2224 = vrot.lane.b32.xlu0 %v1648, 1
      %v2225 = vpop.permute.xlu0 %2224
      %2226 = vrot.lane.b32.xlu0 %v1650, 1
      %v2227 = vpop.permute.xlu0 %2226
      %2228 = vrot.lane.b32.xlu0 %v1652, 1
      %v2229 = vpop.permute.xlu0 %2228
      %2230 = vrot.lane.b32.xlu0 %v1654, 1
      %v2231 = vpop.permute.xlu0 %2230
      %2232 = vrot.lane.b32.xlu0 %v1649, 1
      %v2233 = vpop.permute.xlu0 %2232
      %2234 = vrot.lane.b32.xlu0 %v1651, 1
      %v2235 = vpop.permute.xlu0 %2234
      %2236 = vrot.lane.b32.xlu0 %v1653, 1
      %v2237 = vpop.permute.xlu0 %2236
      %2238 = vrot.lane.b32.xlu0 %v1655, 1
      %v2239 = vpop.permute.xlu0 %2238
      %2240 = vrot.lane.b32.xlu0 %v1910, 1
      %v2241 = vpop.permute.xlu0 %2240
      %2242 = vrot.lane.b32.xlu0 %v1912, 1
      %v2243 = vpop.permute.xlu0 %2242
      %2244 = vrot.lane.b32.xlu0 %v1914, 1
      %v2245 = vpop.permute.xlu0 %2244
      %2246 = vrot.lane.b32.xlu0 %v1916, 1
      %v2247 = vpop.permute.xlu0 %2246
      %2248 = vrot.lane.b32.xlu0 %v1911, 1
      %v2249 = vpop.permute.xlu0 %2248
      %2250 = vrot.lane.b32.xlu0 %v1913, 1
      %v2251 = vpop.permute.xlu0 %2250
      %2252 = vrot.lane.b32.xlu0 %v1915, 1
      %v2253 = vpop.permute.xlu0 %2252
      %2254 = vrot.lane.b32.xlu0 %v1917, 1
      %v2255 = vpop.permute.xlu0 %2254
      %v2256 = vsel %vm532, %v2241, %v2249
      %v2257 = vsel %vm532, %v2243, %v2251
      %v2258 = vsel %vm532, %v2245, %v2253
      %v2259 = vsel %vm532, %v2247, %v2255
      %v2260 = vsel %vm532, %v2233, %v2241
      %v2261 = vsel %vm532, %v2235, %v2243
      %v2262 = vsel %vm532, %v2237, %v2245
      %v2263 = vsel %vm532, %v2239, %v2247
      %v2264 = vsel %vm532, %v2225, %v2233
      %v2265 = vsel %vm532, %v2227, %v2235
      %v2266 = vsel %vm532, %v2229, %v2237
      %v2267 = vsel %vm532, %v2231, %v2239
      %v2268 = vsel %vm532, %v2249, %v2225
      %v2269 = vsel %vm532, %v2251, %v2227
      %v2270 = vsel %vm532, %v2253, %v2229
      %v2271 = vsel %vm532, %v2255, %v2231
      %v2272 = vld [vmem:[%s537] ss:$8 sm:$0xf]
      %v2274 = vlaneseq
      %v2275 = vshrl.u32 %v2274, 7
      %v2276 = vsub.s32 0, %v2275
      %v2277 = vrot.slane %v2272, %v2276
      %v2278 = vlaneseq
      %v2279 = vshrl.u32 %v2278, 7
      %v2280 = vsub.s32 1, %v2279
      %v2281 = vrot.slane %v2272, %v2280
      %v2282 = vlaneseq
      %v2283 = vshrl.u32 %v2282, 7
      %v2284 = vsub.s32 2, %v2283
      %v2285 = vrot.slane %v2272, %v2284
      %v2286 = vlaneseq
      %v2287 = vshrl.u32 %v2286, 7
      %v2288 = vsub.s32 3, %v2287
      %v2289 = vrot.slane %v2272, %v2288
      %v2294 = vmul.f32 %v2268, %v2277
      %v2295 = vmul.f32 %v2264, %v2281
      %v2296 = vmul.f32 %v2260, %v2285
      %v2297 = vmul.f32 %v2256, %v2289
      %v2298 = vmul.f32 %v2269, %v2277
      %v2299 = vmul.f32 %v2265, %v2281
      %v2300 = vmul.f32 %v2261, %v2285
      %v2301 = vmul.f32 %v2257, %v2289
      %v2302 = vmul.f32 %v2270, %v2277
      %v2303 = vmul.f32 %v2266, %v2281
      %v2304 = vmul.f32 %v2262, %v2285
      %v2305 = vmul.f32 %v2258, %v2289
      %v2306 = vmul.f32 %v2271, %v2277
      %v2307 = vmul.f32 %v2267, %v2281
      %v2308 = vmul.f32 %v2263, %v2285
      %v2309 = vmul.f32 %v2259, %v2289
      %2310 = vst [vmem:[#allocation2 + $0x180] sm:$0xff] %v2294
      %2311 = vst [vmem:[#allocation2 + $0x188] sm:$0xff] %v2295
      %2312 = vst [vmem:[#allocation2 + $0x190] sm:$0xff] %v2296
      %2313 = vst [vmem:[#allocation2 + $0x198] sm:$0xff] %v2297
      %2314 = vst [vmem:[#allocation2 + $0x1a0] sm:$0xff] %v2298
      %2315 = vst [vmem:[#allocation2 + $0x1a8] sm:$0xff] %v2299
      %2316 = vst [vmem:[#allocation2 + $0x1b0] sm:$0xff] %v2300
      %2317 = vst [vmem:[#allocation2 + $0x1b8] sm:$0xff] %v2301
      %2318 = vst [vmem:[#allocation2 + $0x1c0] sm:$0xff] %v2302
      %2319 = vst [vmem:[#allocation2 + $0x1c8] sm:$0xff] %v2303
      %2320 = vst [vmem:[#allocation2 + $0x1d0] sm:$0xff] %v2304
      %2321 = vst [vmem:[#allocation2 + $0x1d8] sm:$0xff] %v2305
      %2322 = vst [vmem:[#allocation2 + $0x1e0] sm:$0xff] %v2306
      %2323 = vst [vmem:[#allocation2 + $0x1e8] sm:$0xff] %v2307
      %2324 = vst [vmem:[#allocation2 + $0x1f0] sm:$0xff] %v2308
      %2325 = vst [vmem:[#allocation2 + $0x1f8] sm:$0xff] %v2309
      %2326 = vst [vmem:[#allocation2 + $0x200] sm:$0xff] %v1648
      %2327 = vst [vmem:[#allocation2 + $0x208] sm:$0xff] %v1649
      %2328 = vst [vmem:[#allocation2 + $0x210] sm:$0xff] %v1910
      %2329 = vst [vmem:[#allocation2 + $0x218] sm:$0xff] %v1911
      %2330 = vst [vmem:[#allocation2 + $0x220] sm:$0xff] %v1650
      %2331 = vst [vmem:[#allocation2 + $0x228] sm:$0xff] %v1651
      %2332 = vst [vmem:[#allocation2 + $0x230] sm:$0xff] %v1912
      %2333 = vst [vmem:[#allocation2 + $0x238] sm:$0xff] %v1913
      %2334 = vst [vmem:[#allocation2 + $0x240] sm:$0xff] %v1652
      %2335 = vst [vmem:[#allocation2 + $0x248] sm:$0xff] %v1653
      %2336 = vst [vmem:[#allocation2 + $0x250] sm:$0xff] %v1914
      %2337 = vst [vmem:[#allocation2 + $0x258] sm:$0xff] %v1915
      %2338 = vst [vmem:[#allocation2 + $0x260] sm:$0xff] %v1654
      %2339 = vst [vmem:[#allocation2 + $0x268] sm:$0xff] %v1655
      %2340 = vst [vmem:[#allocation2 + $0x270] sm:$0xff] %v1916
      %2341 = vst [vmem:[#allocation2 + $0x278] sm:$0xff] %v1917
      %2342 = vrot.lane.b32.xlu0 %v1648, 127
      %v2343 = vpop.permute.xlu0 %2342
      %2344 = vrot.lane.b32.xlu0 %v1650, 127
      %v2345 = vpop.permute.xlu0 %2344
      %2346 = vrot.lane.b32.xlu0 %v1652, 127
      %v2347 = vpop.permute.xlu0 %2346
      %2348 = vrot.lane.b32.xlu0 %v1654, 127
      %v2349 = vpop.permute.xlu0 %2348
      %2350 = vrot.lane.b32.xlu0 %v1649, 127
      %v2351 = vpop.permute.xlu0 %2350
      %2352 = vrot.lane.b32.xlu0 %v1651, 127
      %v2353 = vpop.permute.xlu0 %2352
      %2354 = vrot.lane.b32.xlu0 %v1653, 127
      %v2355 = vpop.permute.xlu0 %2354
      %2356 = vrot.lane.b32.xlu0 %v1655, 127
      %v2357 = vpop.permute.xlu0 %2356
      %2358 = vrot.lane.b32.xlu0 %v1910, 127
      %v2359 = vpop.permute.xlu0 %2358
      %2360 = vrot.lane.b32.xlu0 %v1912, 127
      %v2361 = vpop.permute.xlu0 %2360
      %2362 = vrot.lane.b32.xlu0 %v1914, 127
      %v2363 = vpop.permute.xlu0 %2362
      %2364 = vrot.lane.b32.xlu0 %v1916, 127
      %v2365 = vpop.permute.xlu0 %2364
      %2366 = vrot.lane.b32.xlu0 %v1911, 127
      %v2367 = vpop.permute.xlu0 %2366
      %2368 = vrot.lane.b32.xlu0 %v1913, 127
      %v2369 = vpop.permute.xlu0 %2368
      %2370 = vrot.lane.b32.xlu0 %v1915, 127
      %v2371 = vpop.permute.xlu0 %2370
      %2372 = vrot.lane.b32.xlu0 %v1917, 127
      %v2373 = vpop.permute.xlu0 %2372
      %v2374 = vsel %vm580, %v2359, %v2367
      %v2375 = vsel %vm580, %v2361, %v2369
      %v2376 = vsel %vm580, %v2363, %v2371
      %v2377 = vsel %vm580, %v2365, %v2373
      %v2378 = vsel %vm580, %v2351, %v2359
      %v2379 = vsel %vm580, %v2353, %v2361
      %v2380 = vsel %vm580, %v2355, %v2363
      %v2381 = vsel %vm580, %v2357, %v2365
      %v2382 = vsel %vm580, %v2343, %v2351
      %v2383 = vsel %vm580, %v2345, %v2353
      %v2384 = vsel %vm580, %v2347, %v2355
      %v2385 = vsel %vm580, %v2349, %v2357
      %v2386 = vsel %vm580, %v2367, %v2343
      %v2387 = vsel %vm580, %v2369, %v2345
      %v2388 = vsel %vm580, %v2371, %v2347
      %v2389 = vsel %vm580, %v2373, %v2349
      %v2390 = vld [vmem:[%s585] ss:$8 sm:$0xf]
      %v2392 = vlaneseq
      %v2393 = vshrl.u32 %v2392, 7
      %v2394 = vsub.s32 0, %v2393
      %v2395 = vrot.slane %v2390, %v2394
      %v2396 = vlaneseq
      %v2397 = vshrl.u32 %v2396, 7
      %v2398 = vsub.s32 1, %v2397
      %v2399 = vrot.slane %v2390, %v2398
      %v2400 = vlaneseq
      %v2401 = vshrl.u32 %v2400, 7
      %v2402 = vsub.s32 2, %v2401
      %v2403 = vrot.slane %v2390, %v2402
      %v2404 = vlaneseq
      %v2405 = vshrl.u32 %v2404, 7
      %v2406 = vsub.s32 3, %v2405
      %v2407 = vrot.slane %v2390, %v2406
      %v2412 = vmul.f32 %v2382, %v2395
      %v2413 = vmul.f32 %v2378, %v2399
      %v2414 = vmul.f32 %v2374, %v2403
      %v2415 = vmul.f32 %v2386, %v2407
      %v2416 = vmul.f32 %v2383, %v2395
      %v2417 = vmul.f32 %v2379, %v2399
      %v2418 = vmul.f32 %v2375, %v2403
      %v2419 = vmul.f32 %v2387, %v2407
      %v2420 = vmul.f32 %v2384, %v2395
      %v2421 = vmul.f32 %v2380, %v2399
      %v2422 = vmul.f32 %v2376, %v2403
      %v2423 = vmul.f32 %v2388, %v2407
      %v2424 = vmul.f32 %v2385, %v2395
      %v2425 = vmul.f32 %v2381, %v2399
      %v2426 = vmul.f32 %v2377, %v2403
      %v2427 = vmul.f32 %v2389, %v2407
      %2428 = vst [vmem:[#allocation2 + $0x280] sm:$0xff] %v2412
      %2429 = vst [vmem:[#allocation2 + $0x288] sm:$0xff] %v2413
      %2430 = vst [vmem:[#allocation2 + $0x290] sm:$0xff] %v2414
      %2431 = vst [vmem:[#allocation2 + $0x298] sm:$0xff] %v2415
      %2432 = vst [vmem:[#allocation2 + $0x2a0] sm:$0xff] %v2416
      %2433 = vst [vmem:[#allocation2 + $0x2a8] sm:$0xff] %v2417
      %2434 = vst [vmem:[#allocation2 + $0x2b0] sm:$0xff] %v2418
      %2435 = vst [vmem:[#allocation2 + $0x2b8] sm:$0xff] %v2419
      %2436 = vst [vmem:[#allocation2 + $0x2c0] sm:$0xff] %v2420
      %2437 = vst [vmem:[#allocation2 + $0x2c8] sm:$0xff] %v2421
      %2438 = vst [vmem:[#allocation2 + $0x2d0] sm:$0xff] %v2422
      %2439 = vst [vmem:[#allocation2 + $0x2d8] sm:$0xff] %v2423
      %2440 = vst [vmem:[#allocation2 + $0x2e0] sm:$0xff] %v2424
      %2441 = vst [vmem:[#allocation2 + $0x2e8] sm:$0xff] %v2425
      %2442 = vst [vmem:[#allocation2 + $0x2f0] sm:$0xff] %v2426
      %2443 = vst [vmem:[#allocation2 + $0x2f8] sm:$0xff] %v2427
      %2444 = vrot.lane.b32.xlu0 %v1648, 113
      %v2445 = vpop.permute.xlu0 %2444
      %2446 = vrot.lane.b32.xlu0 %v1650, 113
      %v2447 = vpop.permute.xlu0 %2446
      %2448 = vrot.lane.b32.xlu0 %v1652, 113
      %v2449 = vpop.permute.xlu0 %2448
      %2450 = vrot.lane.b32.xlu0 %v1654, 113
      %v2451 = vpop.permute.xlu0 %2450
      %2452 = vrot.lane.b32.xlu0 %v1649, 113
      %v2453 = vpop.permute.xlu0 %2452
      %2454 = vrot.lane.b32.xlu0 %v1651, 113
      %v2455 = vpop.permute.xlu0 %2454
      %2456 = vrot.lane.b32.xlu0 %v1653, 113
      %v2457 = vpop.permute.xlu0 %2456
      %2458 = vrot.lane.b32.xlu0 %v1655, 113
      %v2459 = vpop.permute.xlu0 %2458
      %2460 = vrot.lane.b32.xlu0 %v1910, 113
      %v2461 = vpop.permute.xlu0 %2460
      %2462 = vrot.lane.b32.xlu0 %v1912, 113
      %v2463 = vpop.permute.xlu0 %2462
      %2464 = vrot.lane.b32.xlu0 %v1914, 113
      %v2465 = vpop.permute.xlu0 %2464
      %2466 = vrot.lane.b32.xlu0 %v1916, 113
      %v2467 = vpop.permute.xlu0 %2466
      %2468 = vrot.lane.b32.xlu0 %v1911, 113
      %v2469 = vpop.permute.xlu0 %2468
      %2470 = vrot.lane.b32.xlu0 %v1913, 113
      %v2471 = vpop.permute.xlu0 %2470
      %2472 = vrot.lane.b32.xlu0 %v1915, 113
      %v2473 = vpop.permute.xlu0 %2472
      %2474 = vrot.lane.b32.xlu0 %v1917, 113
      %v2475 = vpop.permute.xlu0 %2474
      %v2476 = vsel %vm624, %v2461, %v2469
      %v2477 = vsel %vm624, %v2463, %v2471
      %v2478 = vsel %vm624, %v2465, %v2473
      %v2479 = vsel %vm624, %v2467, %v2475
      %v2480 = vsel %vm624, %v2453, %v2461
      %v2481 = vsel %vm624, %v2455, %v2463
      %v2482 = vsel %vm624, %v2457, %v2465
      %v2483 = vsel %vm624, %v2459, %v2467
      %v2484 = vsel %vm624, %v2445, %v2453
      %v2485 = vsel %vm624, %v2447, %v2455
      %v2486 = vsel %vm624, %v2449, %v2457
      %v2487 = vsel %vm624, %v2451, %v2459
      %v2488 = vsel %vm624, %v2469, %v2445
      %v2489 = vsel %vm624, %v2471, %v2447
      %v2490 = vsel %vm624, %v2473, %v2449
      %v2491 = vsel %vm624, %v2475, %v2451
      %v2492 = vld [vmem:[%s629] ss:$8 sm:$0xf]
      %v2494 = vlaneseq
      %v2495 = vshrl.u32 %v2494, 7
      %v2496 = vsub.s32 0, %v2495
      %v2497 = vrot.slane %v2492, %v2496
      %v2498 = vlaneseq
      %v2499 = vshrl.u32 %v2498, 7
      %v2500 = vsub.s32 1, %v2499
      %v2501 = vrot.slane %v2492, %v2500
      %v2502 = vlaneseq
      %v2503 = vshrl.u32 %v2502, 7
      %v2504 = vsub.s32 2, %v2503
      %v2505 = vrot.slane %v2492, %v2504
      %v2506 = vlaneseq
      %v2507 = vshrl.u32 %v2506, 7
      %v2508 = vsub.s32 3, %v2507
      %v2509 = vrot.slane %v2492, %v2508
      %v2514 = vmul.f32 %v2484, %v2497
      %v2515 = vmul.f32 %v2480, %v2501
      %v2516 = vmul.f32 %v2476, %v2505
      %v2517 = vmul.f32 %v2488, %v2509
      %v2518 = vmul.f32 %v2485, %v2497
      %v2519 = vmul.f32 %v2481, %v2501
      %v2520 = vmul.f32 %v2477, %v2505
      %v2521 = vmul.f32 %v2489, %v2509
      %v2522 = vmul.f32 %v2486, %v2497
      %v2523 = vmul.f32 %v2482, %v2501
      %v2524 = vmul.f32 %v2478, %v2505
      %v2525 = vmul.f32 %v2490, %v2509
      %v2526 = vmul.f32 %v2487, %v2497
      %v2527 = vmul.f32 %v2483, %v2501
      %v2528 = vmul.f32 %v2479, %v2505
      %v2529 = vmul.f32 %v2491, %v2509
      %2530 = vst [vmem:[#allocation2 + $0x300] sm:$0xff] %v2514
      %2531 = vst [vmem:[#allocation2 + $0x308] sm:$0xff] %v2515
      %2532 = vst [vmem:[#allocation2 + $0x310] sm:$0xff] %v2516
      %2533 = vst [vmem:[#allocation2 + $0x318] sm:$0xff] %v2517
      %2534 = vst [vmem:[#allocation2 + $0x320] sm:$0xff] %v2518
      %2535 = vst [vmem:[#allocation2 + $0x328] sm:$0xff] %v2519
      %2536 = vst [vmem:[#allocation2 + $0x330] sm:$0xff] %v2520
      %2537 = vst [vmem:[#allocation2 + $0x338] sm:$0xff] %v2521
      %2538 = vst [vmem:[#allocation2 + $0x340] sm:$0xff] %v2522
      %2539 = vst [vmem:[#allocation2 + $0x348] sm:$0xff] %v2523
      %2540 = vst [vmem:[#allocation2 + $0x350] sm:$0xff] %v2524
      %2541 = vst [vmem:[#allocation2 + $0x358] sm:$0xff] %v2525
      %2542 = vst [vmem:[#allocation2 + $0x360] sm:$0xff] %v2526
      %2543 = vst [vmem:[#allocation2 + $0x368] sm:$0xff] %v2527
      %2544 = vst [vmem:[#allocation2 + $0x370] sm:$0xff] %v2528
      %2545 = vst [vmem:[#allocation2 + $0x378] sm:$0xff] %v2529
      %2546 = vrot.lane.b32.xlu0 %v1648, 112
      %v2547 = vpop.permute.xlu0 %2546
      %2548 = vrot.lane.b32.xlu0 %v1650, 112
      %v2549 = vpop.permute.xlu0 %2548
      %2550 = vrot.lane.b32.xlu0 %v1652, 112
      %v2551 = vpop.permute.xlu0 %2550
      %2552 = vrot.lane.b32.xlu0 %v1654, 112
      %v2553 = vpop.permute.xlu0 %2552
      %2554 = vrot.lane.b32.xlu0 %v1649, 112
      %v2555 = vpop.permute.xlu0 %2554
      %2556 = vrot.lane.b32.xlu0 %v1651, 112
      %v2557 = vpop.permute.xlu0 %2556
      %2558 = vrot.lane.b32.xlu0 %v1653, 112
      %v2559 = vpop.permute.xlu0 %2558
      %2560 = vrot.lane.b32.xlu0 %v1655, 112
      %v2561 = vpop.permute.xlu0 %2560
      %2562 = vrot.lane.b32.xlu0 %v1910, 112
      %v2563 = vpop.permute.xlu0 %2562
      %2564 = vrot.lane.b32.xlu0 %v1912, 112
      %v2565 = vpop.permute.xlu0 %2564
      %2566 = vrot.lane.b32.xlu0 %v1914, 112
      %v2567 = vpop.permute.xlu0 %2566
      %2568 = vrot.lane.b32.xlu0 %v1916, 112
      %v2569 = vpop.permute.xlu0 %2568
      %2570 = vrot.lane.b32.xlu0 %v1911, 112
      %v2571 = vpop.permute.xlu0 %2570
      %2572 = vrot.lane.b32.xlu0 %v1913, 112
      %v2573 = vpop.permute.xlu0 %2572
      %2574 = vrot.lane.b32.xlu0 %v1915, 112
      %v2575 = vpop.permute.xlu0 %2574
      %2576 = vrot.lane.b32.xlu0 %v1917, 112
      %v2577 = vpop.permute.xlu0 %2576
      %v2578 = vsel %vm668, %v2563, %v2571
      %v2579 = vsel %vm668, %v2565, %v2573
      %v2580 = vsel %vm668, %v2567, %v2575
      %v2581 = vsel %vm668, %v2569, %v2577
      %v2582 = vsel %vm668, %v2555, %v2563
      %v2583 = vsel %vm668, %v2557, %v2565
      %v2584 = vsel %vm668, %v2559, %v2567
      %v2585 = vsel %vm668, %v2561, %v2569
      %v2586 = vsel %vm668, %v2547, %v2555
      %v2587 = vsel %vm668, %v2549, %v2557
      %v2588 = vsel %vm668, %v2551, %v2559
      %v2589 = vsel %vm668, %v2553, %v2561
      %v2590 = vsel %vm668, %v2571, %v2547
      %v2591 = vsel %vm668, %v2573, %v2549
      %v2592 = vsel %vm668, %v2575, %v2551
      %v2593 = vsel %vm668, %v2577, %v2553
      %v2594 = vld [vmem:[%s673] ss:$8 sm:$0xf]
      %v2596 = vlaneseq
      %v2597 = vshrl.u32 %v2596, 7
      %v2598 = vsub.s32 0, %v2597
      %v2599 = vrot.slane %v2594, %v2598
      %v2600 = vlaneseq
      %v2601 = vshrl.u32 %v2600, 7
      %v2602 = vsub.s32 1, %v2601
      %v2603 = vrot.slane %v2594, %v2602
      %v2604 = vlaneseq
      %v2605 = vshrl.u32 %v2604, 7
      %v2606 = vsub.s32 2, %v2605
      %v2607 = vrot.slane %v2594, %v2606
      %v2608 = vlaneseq
      %v2609 = vshrl.u32 %v2608, 7
      %v2610 = vsub.s32 3, %v2609
      %v2611 = vrot.slane %v2594, %v2610
      %v2616 = vmul.f32 %v2586, %v2599
      %v2617 = vmul.f32 %v2582, %v2603
      %v2618 = vmul.f32 %v2578, %v2607
      %v2619 = vmul.f32 %v2590, %v2611
      %v2620 = vmul.f32 %v2587, %v2599
      %v2621 = vmul.f32 %v2583, %v2603
      %v2622 = vmul.f32 %v2579, %v2607
      %v2623 = vmul.f32 %v2591, %v2611
      %v2624 = vmul.f32 %v2588, %v2599
      %v2625 = vmul.f32 %v2584, %v2603
      %v2626 = vmul.f32 %v2580, %v2607
      %v2627 = vmul.f32 %v2592, %v2611
      %v2628 = vmul.f32 %v2589, %v2599
      %v2629 = vmul.f32 %v2585, %v2603
      %v2630 = vmul.f32 %v2581, %v2607
      %v2631 = vmul.f32 %v2593, %v2611
      %2632 = vst [vmem:[#allocation2 + $0x380] sm:$0xff] %v2616
      %2633 = vst [vmem:[#allocation2 + $0x388] sm:$0xff] %v2617
      %2634 = vst [vmem:[#allocation2 + $0x390] sm:$0xff] %v2618
      %2635 = vst [vmem:[#allocation2 + $0x398] sm:$0xff] %v2619
      %2636 = vst [vmem:[#allocation2 + $0x3a0] sm:$0xff] %v2620
      %2637 = vst [vmem:[#allocation2 + $0x3a8] sm:$0xff] %v2621
      %2638 = vst [vmem:[#allocation2 + $0x3b0] sm:$0xff] %v2622
      %2639 = vst [vmem:[#allocation2 + $0x3b8] sm:$0xff] %v2623
      %2640 = vst [vmem:[#allocation2 + $0x3c0] sm:$0xff] %v2624
      %2641 = vst [vmem:[#allocation2 + $0x3c8] sm:$0xff] %v2625
      %2642 = vst [vmem:[#allocation2 + $0x3d0] sm:$0xff] %v2626
      %2643 = vst [vmem:[#allocation2 + $0x3d8] sm:$0xff] %v2627
      %2644 = vst [vmem:[#allocation2 + $0x3e0] sm:$0xff] %v2628
      %2645 = vst [vmem:[#allocation2 + $0x3e8] sm:$0xff] %v2629
      %2646 = vst [vmem:[#allocation2 + $0x3f0] sm:$0xff] %v2630
      %2647 = vst [vmem:[#allocation2 + $0x3f8] sm:$0xff] %v2631
      %2648 = vrot.lane.b32.xlu0 %v1648, 111
      %v2649 = vpop.permute.xlu0 %2648
      %2650 = vrot.lane.b32.xlu0 %v1650, 111
      %v2651 = vpop.permute.xlu0 %2650
      %2652 = vrot.lane.b32.xlu0 %v1652, 111
      %v2653 = vpop.permute.xlu0 %2652
      %2654 = vrot.lane.b32.xlu0 %v1654, 111
      %v2655 = vpop.permute.xlu0 %2654
      %2656 = vrot.lane.b32.xlu0 %v1649, 111
      %v2657 = vpop.permute.xlu0 %2656
      %2658 = vrot.lane.b32.xlu0 %v1651, 111
      %v2659 = vpop.permute.xlu0 %2658
      %2660 = vrot.lane.b32.xlu0 %v1653, 111
      %v2661 = vpop.permute.xlu0 %2660
      %2662 = vrot.lane.b32.xlu0 %v1655, 111
      %v2663 = vpop.permute.xlu0 %2662
      %2664 = vrot.lane.b32.xlu0 %v1910, 111
      %v2665 = vpop.permute.xlu0 %2664
      %2666 = vrot.lane.b32.xlu0 %v1912, 111
      %v2667 = vpop.permute.xlu0 %2666
      %2668 = vrot.lane.b32.xlu0 %v1914, 111
      %v2669 = vpop.permute.xlu0 %2668
      %2670 = vrot.lane.b32.xlu0 %v1916, 111
      %v2671 = vpop.permute.xlu0 %2670
      %2672 = vrot.lane.b32.xlu0 %v1911, 111
      %v2673 = vpop.permute.xlu0 %2672
      %2674 = vrot.lane.b32.xlu0 %v1913, 111
      %v2675 = vpop.permute.xlu0 %2674
      %2676 = vrot.lane.b32.xlu0 %v1915, 111
      %v2677 = vpop.permute.xlu0 %2676
      %2678 = vrot.lane.b32.xlu0 %v1917, 111
      %v2679 = vpop.permute.xlu0 %2678
      %v2680 = vsel %vm712, %v2665, %v2673
      %v2681 = vsel %vm712, %v2667, %v2675
      %v2682 = vsel %vm712, %v2669, %v2677
      %v2683 = vsel %vm712, %v2671, %v2679
      %v2684 = vsel %vm712, %v2657, %v2665
      %v2685 = vsel %vm712, %v2659, %v2667
      %v2686 = vsel %vm712, %v2661, %v2669
      %v2687 = vsel %vm712, %v2663, %v2671
      %v2688 = vsel %vm712, %v2649, %v2657
      %v2689 = vsel %vm712, %v2651, %v2659
      %v2690 = vsel %vm712, %v2653, %v2661
      %v2691 = vsel %vm712, %v2655, %v2663
      %v2692 = vsel %vm712, %v2673, %v2649
      %v2693 = vsel %vm712, %v2675, %v2651
      %v2694 = vsel %vm712, %v2677, %v2653
      %v2695 = vsel %vm712, %v2679, %v2655
      %v2696 = vld [vmem:[%s717] ss:$8 sm:$0xf]
      %v2698 = vlaneseq
      %v2699 = vshrl.u32 %v2698, 7
      %v2700 = vsub.s32 0, %v2699
      %v2701 = vrot.slane %v2696, %v2700
      %v2702 = vlaneseq
      %v2703 = vshrl.u32 %v2702, 7
      %v2704 = vsub.s32 1, %v2703
      %v2705 = vrot.slane %v2696, %v2704
      %v2706 = vlaneseq
      %v2707 = vshrl.u32 %v2706, 7
      %v2708 = vsub.s32 2, %v2707
      %v2709 = vrot.slane %v2696, %v2708
      %v2710 = vlaneseq
      %v2711 = vshrl.u32 %v2710, 7
      %v2712 = vsub.s32 3, %v2711
      %v2713 = vrot.slane %v2696, %v2712
      %v2718 = vmul.f32 %v2688, %v2701
      %v2719 = vmul.f32 %v2684, %v2705
      %v2720 = vmul.f32 %v2680, %v2709
      %v2721 = vmul.f32 %v2692, %v2713
      %v2722 = vmul.f32 %v2689, %v2701
      %v2723 = vmul.f32 %v2685, %v2705
      %v2724 = vmul.f32 %v2681, %v2709
      %v2725 = vmul.f32 %v2693, %v2713
      %v2726 = vmul.f32 %v2690, %v2701
      %v2727 = vmul.f32 %v2686, %v2705
      %v2728 = vmul.f32 %v2682, %v2709
      %v2729 = vmul.f32 %v2694, %v2713
      %v2730 = vmul.f32 %v2691, %v2701
      %v2731 = vmul.f32 %v2687, %v2705
      %v2732 = vmul.f32 %v2683, %v2709
      %v2733 = vmul.f32 %v2695, %v2713
      %2734 = vst [vmem:[#allocation2 + $0x400] sm:$0xff] %v2718
      %2735 = vst [vmem:[#allocation2 + $0x408] sm:$0xff] %v2719
      %2736 = vst [vmem:[#allocation2 + $0x410] sm:$0xff] %v2720
      %2737 = vst [vmem:[#allocation2 + $0x418] sm:$0xff] %v2721
      %2738 = vst [vmem:[#allocation2 + $0x420] sm:$0xff] %v2722
      %2739 = vst [vmem:[#allocation2 + $0x428] sm:$0xff] %v2723
      %2740 = vst [vmem:[#allocation2 + $0x430] sm:$0xff] %v2724
      %2741 = vst [vmem:[#allocation2 + $0x438] sm:$0xff] %v2725
      %2742 = vst [vmem:[#allocation2 + $0x440] sm:$0xff] %v2726
      %2743 = vst [vmem:[#allocation2 + $0x448] sm:$0xff] %v2727
      %2744 = vst [vmem:[#allocation2 + $0x450] sm:$0xff] %v2728
      %2745 = vst [vmem:[#allocation2 + $0x458] sm:$0xff] %v2729
      %2746 = vst [vmem:[#allocation2 + $0x460] sm:$0xff] %v2730
      %2747 = vst [vmem:[#allocation2 + $0x468] sm:$0xff] %v2731
      %2748 = vst [vmem:[#allocation2 + $0x470] sm:$0xff] %v2732
      %2749 = vst [vmem:[#allocation2 + $0x478] sm:$0xff] %v2733
      %v2750 = vld [vmem:[%s3] sm:$0xff]
      %v2751 = vld [vmem:[%s3 + $0x8] sm:$0xff]
      %v2752 = vld [vmem:[%s3 + $0x10] sm:$0xff]
      %v2753 = vld [vmem:[%s3 + $0x18] sm:$0xff]
      %v2754 = vld [vmem:[%s3 + $0x20] sm:$0xff]
      %v2755 = vld [vmem:[%s3 + $0x28] sm:$0xff]
      %v2756 = vld [vmem:[#allocation2] sm:$0xff]
      %v2757 = vld [vmem:[#allocation2 + $0x8] sm:$0xff]
      %v2758 = vld [vmem:[#allocation2 + $0x10] sm:$0xff]
      %v2759 = vld [vmem:[#allocation2 + $0x18] sm:$0xff]
      %v2760 = vld [vmem:[#allocation2 + $0x20] sm:$0xff]
      %v2761 = vld [vmem:[#allocation2 + $0x28] sm:$0xff]
      %v2762 = vld [vmem:[#allocation2 + $0x30] sm:$0xff]
      %v2763 = vld [vmem:[#allocation2 + $0x38] sm:$0xff]
      %v2764 = vld [vmem:[#allocation2 + $0x40] sm:$0xff]
      %v2765 = vld [vmem:[#allocation2 + $0x48] sm:$0xff]
      %v2766 = vld [vmem:[#allocation2 + $0x50] sm:$0xff]
      %v2767 = vld [vmem:[#allocation2 + $0x58] sm:$0xff]
      %v2768 = vld [vmem:[#allocation2 + $0x60] sm:$0xff]
      %v2769 = vld [vmem:[#allocation2 + $0x68] sm:$0xff]
      %v2770 = vld [vmem:[#allocation2 + $0x70] sm:$0xff]
      %v2771 = vld [vmem:[#allocation2 + $0x78] sm:$0xff]
      %v2772 = vld [vmem:[#allocation2 + $0x80] sm:$0xff]
      %v2773 = vld [vmem:[#allocation2 + $0x88] sm:$0xff]
      %v2774 = vld [vmem:[#allocation2 + $0x90] sm:$0xff]
      %v2775 = vld [vmem:[#allocation2 + $0x98] sm:$0xff]
      %v2776 = vld [vmem:[#allocation2 + $0xa0] sm:$0xff]
      %v2777 = vld [vmem:[#allocation2 + $0xa8] sm:$0xff]
      %v2778 = vld [vmem:[#allocation2 + $0xb0] sm:$0xff]
      %v2779 = vld [vmem:[#allocation2 + $0xb8] sm:$0xff]
      %v2780 = vld [vmem:[#allocation2 + $0xc0] sm:$0xff]
      %v2781 = vld [vmem:[#allocation2 + $0xc8] sm:$0xff]
      %v2782 = vld [vmem:[#allocation2 + $0xd0] sm:$0xff]
      %v2783 = vld [vmem:[#allocation2 + $0xd8] sm:$0xff]
      %v2784 = vld [vmem:[#allocation2 + $0xe0] sm:$0xff]
      %v2785 = vld [vmem:[#allocation2 + $0xe8] sm:$0xff]
      %v2786 = vld [vmem:[#allocation2 + $0xf0] sm:$0xff]
      %v2787 = vld [vmem:[#allocation2 + $0xf8] sm:$0xff]
      %v2788 = vld [vmem:[#allocation2 + $0x100] sm:$0xff]
      %v2789 = vld [vmem:[#allocation2 + $0x108] sm:$0xff]
      %v2790 = vld [vmem:[#allocation2 + $0x110] sm:$0xff]
      %v2791 = vld [vmem:[#allocation2 + $0x118] sm:$0xff]
      %v2792 = vld [vmem:[#allocation2 + $0x120] sm:$0xff]
      %v2793 = vld [vmem:[#allocation2 + $0x128] sm:$0xff]
      %v2794 = vld [vmem:[#allocation2 + $0x130] sm:$0xff]
      %v2795 = vld [vmem:[#allocation2 + $0x138] sm:$0xff]
      %v2796 = vld [vmem:[#allocation2 + $0x140] sm:$0xff]
      %v2797 = vld [vmem:[#allocation2 + $0x148] sm:$0xff]
      %v2798 = vld [vmem:[#allocation2 + $0x150] sm:$0xff]
      %v2799 = vld [vmem:[#allocation2 + $0x158] sm:$0xff]
      %v2800 = vld [vmem:[#allocation2 + $0x160] sm:$0xff]
      %v2801 = vld [vmem:[#allocation2 + $0x168] sm:$0xff]
      %v2802 = vld [vmem:[#allocation2 + $0x170] sm:$0xff]
      %v2803 = vld [vmem:[#allocation2 + $0x178] sm:$0xff]
      %v2804 = vld [vmem:[#allocation2 + $0x180] sm:$0xff]
      %v2805 = vld [vmem:[#allocation2 + $0x188] sm:$0xff]
      %v2806 = vld [vmem:[#allocation2 + $0x190] sm:$0xff]
      %v2807 = vld [vmem:[#allocation2 + $0x198] sm:$0xff]
      %v2808 = vld [vmem:[#allocation2 + $0x1a0] sm:$0xff]
      %v2809 = vld [vmem:[#allocation2 + $0x1a8] sm:$0xff]
      %v2810 = vld [vmem:[#allocation2 + $0x1b0] sm:$0xff]
      %v2811 = vld [vmem:[#allocation2 + $0x1b8] sm:$0xff]
      %v2812 = vld [vmem:[#allocation2 + $0x1c0] sm:$0xff]
      %v2813 = vld [vmem:[#allocation2 + $0x1c8] sm:$0xff]
      %v2814 = vld [vmem:[#allocation2 + $0x1d0] sm:$0xff]
      %v2815 = vld [vmem:[#allocation2 + $0x1d8] sm:$0xff]
      %v2816 = vld [vmem:[#allocation2 + $0x1e0] sm:$0xff]
      %v2817 = vld [vmem:[#allocation2 + $0x1e8] sm:$0xff]
      %v2818 = vld [vmem:[#allocation2 + $0x1f0] sm:$0xff]
      %v2819 = vld [vmem:[#allocation2 + $0x1f8] sm:$0xff]
      %v2820 = vld [vmem:[#allocation2 + $0x200] sm:$0xff]
      %v2821 = vld [vmem:[#allocation2 + $0x208] sm:$0xff]
      %v2822 = vld [vmem:[#allocation2 + $0x210] sm:$0xff]
      %v2823 = vld [vmem:[#allocation2 + $0x218] sm:$0xff]
      %v2824 = vld [vmem:[#allocation2 + $0x220] sm:$0xff]
      %v2825 = vld [vmem:[#allocation2 + $0x228] sm:$0xff]
      %v2826 = vld [vmem:[#allocation2 + $0x230] sm:$0xff]
      %v2827 = vld [vmem:[#allocation2 + $0x238] sm:$0xff]
      %v2828 = vld [vmem:[#allocation2 + $0x240] sm:$0xff]
      %v2829 = vld [vmem:[#allocation2 + $0x248] sm:$0xff]
      %v2830 = vld [vmem:[#allocation2 + $0x250] sm:$0xff]
      %v2831 = vld [vmem:[#allocation2 + $0x258] sm:$0xff]
      %v2832 = vld [vmem:[#allocation2 + $0x260] sm:$0xff]
      %v2833 = vld [vmem:[#allocation2 + $0x268] sm:$0xff]
      %v2834 = vld [vmem:[#allocation2 + $0x270] sm:$0xff]
      %v2835 = vld [vmem:[#allocation2 + $0x278] sm:$0xff]
      %v2836 = vld [vmem:[#allocation2 + $0x280] sm:$0xff]
      %v2837 = vld [vmem:[#allocation2 + $0x288] sm:$0xff]
      %v2838 = vld [vmem:[#allocation2 + $0x290] sm:$0xff]
      %v2839 = vld [vmem:[#allocation2 + $0x298] sm:$0xff]
      %v2840 = vld [vmem:[#allocation2 + $0x2a0] sm:$0xff]
      %v2841 = vld [vmem:[#allocation2 + $0x2a8] sm:$0xff]
      %v2842 = vld [vmem:[#allocation2 + $0x2b0] sm:$0xff]
      %v2843 = vld [vmem:[#allocation2 + $0x2b8] sm:$0xff]
      %v2844 = vld [vmem:[#allocation2 + $0x2c0] sm:$0xff]
      %v2845 = vld [vmem:[#allocation2 + $0x2c8] sm:$0xff]
      %v2846 = vld [vmem:[#allocation2 + $0x2d0] sm:$0xff]
      %v2847 = vld [vmem:[#allocation2 + $0x2d8] sm:$0xff]
      %v2848 = vld [vmem:[#allocation2 + $0x2e0] sm:$0xff]
      %v2849 = vld [vmem:[#allocation2 + $0x2e8] sm:$0xff]
      %v2850 = vld [vmem:[#allocation2 + $0x2f0] sm:$0xff]
      %v2851 = vld [vmem:[#allocation2 + $0x2f8] sm:$0xff]
      %v2852 = vld [vmem:[#allocation2 + $0x300] sm:$0xff]
      %v2853 = vld [vmem:[#allocation2 + $0x308] sm:$0xff]
      %v2854 = vld [vmem:[#allocation2 + $0x310] sm:$0xff]
      %v2855 = vld [vmem:[#allocation2 + $0x318] sm:$0xff]
      %v2856 = vld [vmem:[#allocation2 + $0x320] sm:$0xff]
      %v2857 = vld [vmem:[#allocation2 + $0x328] sm:$0xff]
      %v2858 = vld [vmem:[#allocation2 + $0x330] sm:$0xff]
      %v2859 = vld [vmem:[#allocation2 + $0x338] sm:$0xff]
      %v2860 = vld [vmem:[#allocation2 + $0x340] sm:$0xff]
      %v2861 = vld [vmem:[#allocation2 + $0x348] sm:$0xff]
      %v2862 = vld [vmem:[#allocation2 + $0x350] sm:$0xff]
      %v2863 = vld [vmem:[#allocation2 + $0x358] sm:$0xff]
      %v2864 = vld [vmem:[#allocation2 + $0x360] sm:$0xff]
      %v2865 = vld [vmem:[#allocation2 + $0x368] sm:$0xff]
      %v2866 = vld [vmem:[#allocation2 + $0x370] sm:$0xff]
      %v2867 = vld [vmem:[#allocation2 + $0x378] sm:$0xff]
      %v2868 = vld [vmem:[#allocation2 + $0x380] sm:$0xff]
      %v2869 = vld [vmem:[#allocation2 + $0x388] sm:$0xff]
      %v2870 = vld [vmem:[#allocation2 + $0x390] sm:$0xff]
      %v2871 = vld [vmem:[#allocation2 + $0x398] sm:$0xff]
      %v2872 = vld [vmem:[#allocation2 + $0x3a0] sm:$0xff]
      %v2873 = vld [vmem:[#allocation2 + $0x3a8] sm:$0xff]
      %v2874 = vld [vmem:[#allocation2 + $0x3b0] sm:$0xff]
      %v2875 = vld [vmem:[#allocation2 + $0x3b8] sm:$0xff]
      %v2876 = vld [vmem:[#allocation2 + $0x3c0] sm:$0xff]
      %v2877 = vld [vmem:[#allocation2 + $0x3c8] sm:$0xff]
      %v2878 = vld [vmem:[#allocation2 + $0x3d0] sm:$0xff]
      %v2879 = vld [vmem:[#allocation2 + $0x3d8] sm:$0xff]
      %v2880 = vld [vmem:[#allocation2 + $0x3e0] sm:$0xff]
      %v2881 = vld [vmem:[#allocation2 + $0x3e8] sm:$0xff]
      %v2882 = vld [vmem:[#allocation2 + $0x3f0] sm:$0xff]
      %v2883 = vld [vmem:[#allocation2 + $0x3f8] sm:$0xff]
      %v2884 = vld [vmem:[#allocation2 + $0x400] sm:$0xff]
      %v2885 = vld [vmem:[#allocation2 + $0x408] sm:$0xff]
      %v2886 = vld [vmem:[#allocation2 + $0x410] sm:$0xff]
      %v2887 = vld [vmem:[#allocation2 + $0x418] sm:$0xff]
      %v2888 = vld [vmem:[#allocation2 + $0x420] sm:$0xff]
      %v2889 = vld [vmem:[#allocation2 + $0x428] sm:$0xff]
      %v2890 = vld [vmem:[#allocation2 + $0x430] sm:$0xff]
      %v2891 = vld [vmem:[#allocation2 + $0x438] sm:$0xff]
      %v2892 = vld [vmem:[#allocation2 + $0x440] sm:$0xff]
      %v2893 = vld [vmem:[#allocation2 + $0x448] sm:$0xff]
      %v2894 = vld [vmem:[#allocation2 + $0x450] sm:$0xff]
      %v2895 = vld [vmem:[#allocation2 + $0x458] sm:$0xff]
      %v2896 = vld [vmem:[#allocation2 + $0x460] sm:$0xff]
      %v2897 = vld [vmem:[#allocation2 + $0x468] sm:$0xff]
      %v2898 = vld [vmem:[#allocation2 + $0x470] sm:$0xff]
      %v2899 = vld [vmem:[#allocation2 + $0x478] sm:$0xff]
      %v2900 = vld [vmem:[%s4] sm:$0xff]
      %v2901 = vld [vmem:[%s4 + $0x8] sm:$0xff]
      %2903 = vset.pattern.permute.xlu0 0
      %2904 = vperm.xlu0 %2903, %v2900
      %v2905 = vpop.permute.xlu0 %2904
      %2908 = vset.pattern.permute.xlu0 0
      %2909 = vperm.xlu0 %2908, %v2901
      %v2910 = vpop.permute.xlu0 %2909
      %v2913 = vsel %vm1393, %v2752, 0
      %v2916 = vsel %vm1393, %v2755, 0
      %2918 = vmatprep.subr.mxu0 %v2757
      %2919 = vmatpush1.msra.mxu0 %v2756
      %2920 = vmatprep.subr.mxu0 %v2761
      %2921 = vmatpush1.msra.mxu0 %v2760
      %2922 = vmatprep.subr.mxu0 %v2765
      %2923 = vmatpush1.msra.mxu0 %v2764
      %2924 = vmatprep.subr.mxu0 %v2769
      %2925 = vmatpush1.msra.mxu0 %v2768
      %2926 = vmatprep.subr.mxu0 %v2773
      %2927 = vmatpush1.msra.mxu0 %v2772
      %2928 = vmatprep.subr.mxu0 %v2777
      %2929 = vmatpush1.msra.mxu0 %v2776
      %2930 = vmatprep.subr.mxu0 %v2781
      %2931 = vmatpush1.msra.mxu0 %v2780
      %2932 = vmatprep.subr.mxu0 %v2785
      %2933 = vmatpush1.msra.mxu0 %v2784
      %2934 = vmatprep.subr.mxu0 %v2789
      %2935 = vmatpush1.msra.mxu0 %v2788
      %2936 = vmatprep.subr.mxu0 %v2793
      %2937 = vmatpush1.msra.mxu0 %v2792
      %2938 = vmatprep.subr.mxu0 %v2797
      %2939 = vmatpush1.msra.mxu0 %v2796
      %2940 = vmatprep.subr.mxu0 %v2801
      %2941 = vmatpush1.msra.mxu0 %v2800
      %2942 = vmatprep.subr.mxu0 %v2805
      %2943 = vmatpush1.msra.mxu0 %v2804
      %2944 = vmatprep.subr.mxu0 %v2809
      %2945 = vmatpush1.msra.mxu0 %v2808
      %2946 = vmatprep.subr.mxu0 %v2813
      %2947 = vmatpush1.msra.mxu0 %v2812
      %2948 = vmatprep.subr.mxu0 %v2817
      %2949 = vmatpush1.msra.mxu0 %v2816
      %2950 = vmatprep.subr.mxu0 %v2821
      %2951 = vmatpush1.msra.mxu0 %v2820
      %2952 = vmatprep.subr.mxu0 %v2825
      %2953 = vmatpush1.msra.mxu0 %v2824
      %2954 = vmatprep.subr.mxu0 %v2829
      %2955 = vmatpush1.msra.mxu0 %v2828
      %2956 = vmatprep.subr.mxu0 %v2833
      %2957 = vmatpush1.msra.mxu0 %v2832
      %2958 = vmatprep.subr.mxu0 %v2837
      %2959 = vmatpush1.msra.mxu0 %v2836
      %2960 = vmatprep.subr.mxu0 %v2841
      %2961 = vmatpush1.msra.mxu0 %v2840
      %2962 = vmatprep.subr.mxu0 %v2845
      %2963 = vmatpush1.msra.mxu0 %v2844
      %2964 = vmatprep.subr.mxu0 %v2849
      %2965 = vmatpush1.msra.mxu0 %v2848
      %2966 = vmatprep.subr.mxu0 %v2853
      %2967 = vmatpush1.msra.mxu0 %v2852
      %2968 = vmatprep.subr.mxu0 %v2857
      %2969 = vmatpush1.msra.mxu0 %v2856
      %2970 = vmatprep.subr.mxu0 %v2861
      %2971 = vmatpush1.msra.mxu0 %v2860
      %2972 = vmatprep.subr.mxu0 %v2865
      %2973 = vmatpush1.msra.mxu0 %v2864
      %2974 = vmatprep.subr.mxu0 %v2869
      %2975 = vmatpush1.msra.mxu0 %v2868
      %2976 = vmatprep.subr.mxu0 %v2873
      %2977 = vmatpush1.msra.mxu0 %v2872
      %2978 = vmatprep.subr.mxu0 %v2877
      %2979 = vmatpush1.msra.mxu0 %v2876
      %2980 = vmatprep.subr.mxu0 %v2881
      %2981 = vmatpush1.msra.mxu0 %v2880
      %2982 = vmatprep.mubr.f32.mxu0 %v2751
      %2983 = vmatmul.mubr.f32.gmra.mrb[0].mxu0 %v2750
      %v2984 = vpop.f32.mrb[0].mxu0
      %v2985 = vadd.f32 %v2905, %v2984
      %v2986 = vpop.f32.mrb[0].mxu0
      %v2987 = vadd.f32 %v2905, %v2986
      %2988 = vmatprep.mubr.f32.mxu0 %v2754
      %2989 = vmatmul.mubr.f32.gmra.mrb[0].mxu0 %v2753
      %v2990 = vpop.f32.mrb[0].mxu0
      %v2991 = vadd.f32 %v2910, %v2990
      %v2992 = vpop.f32.mrb[0].mxu0
      %v2993 = vadd.f32 %v2910, %v2992
      %2994 = vdwg.mxu0
      %2995 = vmatprep.subr.mxu0 %v2885
      %2996 = vmatpush1.msra.mxu0 %v2884
      %2997 = vmatprep.subr.mxu0 %v2889
      %2998 = vmatpush1.msra.mxu0 %v2888
      %2999 = vmatprep.subr.mxu0 %v2893
      %3000 = vmatpush1.msra.mxu0 %v2892
      %3001 = vmatprep.subr.mxu0 %v2897
      %3002 = vmatpush1.msra.mxu0 %v2896
      %3003 = vmatprep.subr.mxu0 0.0
      %3004 = vmatpush1.msra.mxu0 0.0
      %3005 = vmatprep.subr.mxu0 0.0
      %3006 = vmatpush1.msra.mxu0 0.0
      %3007 = vmatprep.subr.mxu0 0.0
      %3008 = vmatpush1.msra.mxu0 0.0
      %3009 = vmatprep.subr.mxu0 0.0
      %3010 = vmatpush1.msra.mxu0 0.0
      %3011 = vmatprep.subr.mxu0 0.0
      %3012 = vmatpush1.msra.mxu0 0.0
      %3013 = vmatprep.subr.mxu0 0.0
      %3014 = vmatpush1.msra.mxu0 0.0
      %3015 = vmatprep.subr.mxu0 0.0
      %3016 = vmatpush1.msra.mxu0 0.0
      %3017 = vmatprep.subr.mxu0 0.0
      %3018 = vmatpush1.msra.mxu0 0.0
      %3019 = vmatprep.subr.mxu0 0.0
      %3020 = vmatpush1.msra.mxu0 0.0
      %3021 = vmatprep.subr.mxu0 0.0
      %3022 = vmatpush1.msra.mxu0 0.0
      %3023 = vmatprep.subr.mxu0 0.0
      %3024 = vmatpush1.msra.mxu0 0.0
      %3025 = vmatprep.subr.mxu0 0.0
      %3026 = vmatpush1.msra.mxu0 0.0
      %3027 = vmatprep.subr.mxu0 0.0
      %3028 = vmatpush1.msra.mxu0 0.0
      %3029 = vmatprep.subr.mxu0 0.0
      %3030 = vmatpush1.msra.mxu0 0.0
      %3031 = vmatprep.subr.mxu0 0.0
      %3032 = vmatpush1.msra.mxu0 0.0
      %3033 = vmatprep.subr.mxu0 0.0
      %3034 = vmatpush1.msra.mxu0 0.0
      %3035 = vmatprep.subr.mxu0 0.0
      %3036 = vmatpush1.msra.mxu0 0.0
      %3037 = vmatprep.subr.mxu0 0.0
      %3038 = vmatpush1.msra.mxu0 0.0
      %3039 = vmatprep.subr.mxu0 0.0
      %3040 = vmatpush1.msra.mxu0 0.0
      %3041 = vmatprep.subr.mxu0 0.0
      %3042 = vmatpush1.msra.mxu0 0.0
      %3043 = vmatprep.subr.mxu0 0.0
      %3044 = vmatpush1.msra.mxu0 0.0
      %3045 = vmatprep.subr.mxu0 0.0
      %3046 = vmatpush1.msra.mxu0 0.0
      %3047 = vmatprep.subr.mxu0 0.0
      %3048 = vmatpush1.msra.mxu0 0.0
      %3049 = vmatprep.subr.mxu0 0.0
      %3050 = vmatpush1.msra.mxu0 0.0
      %3051 = vmatprep.subr.mxu0 0.0
      %3052 = vmatpush1.msra.mxu0 0.0
      %3053 = vmatprep.subr.mxu0 0.0
      %3054 = vmatpush1.msra.mxu0 0.0
      %3055 = vmatprep.subr.mxu0 0.0
      %3056 = vmatpush1.msra.mxu0 0.0
      %3057 = vmatprep.subr.mxu0 0.0
      %3058 = vmatpush1.msra.mxu0 0.0
      %3059 = vmatprep.mubr.f32.mxu0 0.0
      %3060 = vmatmul.mubr.f32.gmra.mrb[0].mxu0 %v2913
      %v3061 = vpop.f32.mrb[0].mxu0
      %v3062 = vadd.f32 %v2985, %v3061
      %v3063 = vpop.f32.mrb[0].mxu0
      %v3064 = vadd.f32 %v2987, %v3063
      %3065 = vmatprep.mubr.f32.mxu0 0.0
      %3066 = vmatmul.mubr.f32.gmra.mrb[0].mxu0 %v2916
      %v3067 = vpop.f32.mrb[0].mxu0
      %v3068 = vadd.f32 %v2991, %v3067
      %v3069 = vpop.f32.mrb[0].mxu0
      %v3070 = vadd.f32 %v2993, %v3069
      %3071 = vdwg.mxu0
      %3072 = vmatprep.subr.mxu0 %v2759
      %3073 = vmatpush1.msra.mxu0 %v2758
      %3074 = vmatprep.subr.mxu0 %v2763
      %3075 = vmatpush1.msra.mxu0 %v2762
      %3076 = vmatprep.subr.mxu0 %v2767
      %3077 = vmatpush1.msra.mxu0 %v2766
      %3078 = vmatprep.subr.mxu0 %v2771
      %3079 = vmatpush1.msra.mxu0 %v2770
      %3080 = vmatprep.subr.mxu0 %v2775
      %3081 = vmatpush1.msra.mxu0 %v2774
      %3082 = vmatprep.subr.mxu0 %v2779
      %3083 = vmatpush1.msra.mxu0 %v2778
      %3084 = vmatprep.subr.mxu0 %v2783
      %3085 = vmatpush1.msra.mxu0 %v2782
      %3086 = vmatprep.subr.mxu0 %v2787
      %3087 = vmatpush1.msra.mxu0 %v2786
      %3088 = vmatprep.subr.mxu0 %v2791
      %3089 = vmatpush1.msra.mxu0 %v2790
      %3090 = vmatprep.subr.mxu0 %v2795
      %3091 = vmatpush1.msra.mxu0 %v2794
      %3092 = vmatprep.subr.mxu0 %v2799
      %3093 = vmatpush1.msra.mxu0 %v2798
      %3094 = vmatprep.subr.mxu0 %v2803
      %3095 = vmatpush1.msra.mxu0 %v2802
      %3096 = vmatprep.subr.mxu0 %v2807
      %3097 = vmatpush1.msra.mxu0 %v2806
      %3098 = vmatprep.subr.mxu0 %v2811
      %3099 = vmatpush1.msra.mxu0 %v2810
      %3100 = vmatprep.subr.mxu0 %v2815
      %3101 = vmatpush1.msra.mxu0 %v2814
      %3102 = vmatprep.subr.mxu0 %v2819
      %3103 = vmatpush1.msra.mxu0 %v2818
      %3104 = vmatprep.subr.mxu0 %v2823
      %3105 = vmatpush1.msra.mxu0 %v2822
      %3106 = vmatprep.subr.mxu0 %v2827
      %3107 = vmatpush1.msra.mxu0 %v2826
      %3108 = vmatprep.subr.mxu0 %v2831
      %3109 = vmatpush1.msra.mxu0 %v2830
      %3110 = vmatprep.subr.mxu0 %v2835
      %3111 = vmatpush1.msra.mxu0 %v2834
      %3112 = vmatprep.subr.mxu0 %v2839
      %3113 = vmatpush1.msra.mxu0 %v2838
      %3114 = vmatprep.subr.mxu0 %v2843
      %3115 = vmatpush1.msra.mxu0 %v2842
      %3116 = vmatprep.subr.mxu0 %v2847
      %3117 = vmatpush1.msra.mxu0 %v2846
      %3118 = vmatprep.subr.mxu0 %v2851
      %3119 = vmatpush1.msra.mxu0 %v2850
      %3120 = vmatprep.subr.mxu0 %v2855
      %3121 = vmatpush1.msra.mxu0 %v2854
      %3122 = vmatprep.subr.mxu0 %v2859
      %3123 = vmatpush1.msra.mxu0 %v2858
      %3124 = vmatprep.subr.mxu0 %v2863
      %3125 = vmatpush1.msra.mxu0 %v2862
      %3126 = vmatprep.subr.mxu0 %v2867
      %3127 = vmatpush1.msra.mxu0 %v2866
      %3128 = vmatprep.subr.mxu0 %v2871
      %3129 = vmatpush1.msra.mxu0 %v2870
      %3130 = vmatprep.subr.mxu0 %v2875
      %3131 = vmatpush1.msra.mxu0 %v2874
      %3132 = vmatprep.subr.mxu0 %v2879
      %3133 = vmatpush1.msra.mxu0 %v2878
      %3134 = vmatprep.subr.mxu0 %v2883
      %3135 = vmatpush1.msra.mxu0 %v2882
      %3136 = vmatprep.mubr.f32.mxu0 %v2751
      %3137 = vmatmul.mubr.f32.gmra.mrb[0].mxu0 %v2750
      %v3138 = vpop.f32.mrb[0].mxu0
      %v3139 = vadd.f32 %v2905, %v3138
      %v3140 = vpop.f32.mrb[0].mxu0
      %v3141 = vadd.f32 %v2905, %v3140
      %3142 = vmatprep.mubr.f32.mxu0 %v2754
      %3143 = vmatmul.mubr.f32.gmra.mrb[0].mxu0 %v2753
      %v3144 = vpop.f32.mrb[0].mxu0
      %v3145 = vadd.f32 %v2910, %v3144
      %v3146 = vpop.f32.mrb[0].mxu0
      %v3147 = vadd.f32 %v2910, %v3146
      %3148 = vdwg.mxu0
      %3149 = vmatprep.subr.mxu0 %v2887
      %3150 = vmatpush1.msra.mxu0 %v2886
      %3151 = vmatprep.subr.mxu0 %v2891
      %3152 = vmatpush1.msra.mxu0 %v2890
      %3153 = vmatprep.subr.mxu0 %v2895
      %3154 = vmatpush1.msra.mxu0 %v2894
      %3155 = vmatprep.subr.mxu0 %v2899
      %3156 = vmatpush1.msra.mxu0 %v2898
      %3157 = vmatprep.subr.mxu0 0.0
      %3158 = vmatpush1.msra.mxu0 0.0
      %3159 = vmatprep.subr.mxu0 0.0
      %3160 = vmatpush1.msra.mxu0 0.0
      %3161 = vmatprep.subr.mxu0 0.0
      %3162 = vmatpush1.msra.mxu0 0.0
      %3163 = vmatprep.subr.mxu0 0.0
      %3164 = vmatpush1.msra.mxu0 0.0
      %3165 = vmatprep.subr.mxu0 0.0
      %3166 = vmatpush1.msra.mxu0 0.0
      %3167 = vmatprep.subr.mxu0 0.0
      %3168 = vmatpush1.msra.mxu0 0.0
      %3169 = vmatprep.subr.mxu0 0.0
      %3170 = vmatpush1.msra.mxu0 0.0
      %3171 = vmatprep.subr.mxu0 0.0
      %3172 = vmatpush1.msra.mxu0 0.0
      %3173 = vmatprep.subr.mxu0 0.0
      %3174 = vmatpush1.msra.mxu0 0.0
      %3175 = vmatprep.subr.mxu0 0.0
      %3176 = vmatpush1.msra.mxu0 0.0
      %3177 = vmatprep.subr.mxu0 0.0
      %3178 = vmatpush1.msra.mxu0 0.0
      %3179 = vmatprep.subr.mxu0 0.0
      %3180 = vmatpush1.msra.mxu0 0.0
      %3181 = vmatprep.subr.mxu0 0.0
      %3182 = vmatpush1.msra.mxu0 0.0
      %3183 = vmatprep.subr.mxu0 0.0
      %3184 = vmatpush1.msra.mxu0 0.0
      %3185 = vmatprep.subr.mxu0 0.0
      %3186 = vmatpush1.msra.mxu0 0.0
      %3187 = vmatprep.subr.mxu0 0.0
      %3188 = vmatpush1.msra.mxu0 0.0
      %3189 = vmatprep.subr.mxu0 0.0
      %3190 = vmatpush1.msra.mxu0 0.0
      %3191 = vmatprep.subr.mxu0 0.0
      %3192 = vmatpush1.msra.mxu0 0.0
      %3193 = vmatprep.subr.mxu0 0.0
      %3194 = vmatpush1.msra.mxu0 0.0
      %3195 = vmatprep.subr.mxu0 0.0
      %3196 = vmatpush1.msra.mxu0 0.0
      %3197 = vmatprep.subr.mxu0 0.0
      %3198 = vmatpush1.msra.mxu0 0.0
      %3199 = vmatprep.subr.mxu0 0.0
      %3200 = vmatpush1.msra.mxu0 0.0
      %3201 = vmatprep.subr.mxu0 0.0
      %3202 = vmatpush1.msra.mxu0 0.0
      %3203 = vmatprep.subr.mxu0 0.0
      %3204 = vmatpush1.msra.mxu0 0.0
      %3205 = vmatprep.subr.mxu0 0.0
      %3206 = vmatpush1.msra.mxu0 0.0
      %3207 = vmatprep.subr.mxu0 0.0
      %3208 = vmatpush1.msra.mxu0 0.0
      %3209 = vmatprep.subr.mxu0 0.0
      %3210 = vmatpush1.msra.mxu0 0.0
      %3211 = vmatprep.subr.mxu0 0.0
      %3212 = vmatpush1.msra.mxu0 0.0
      %3213 = vmatprep.mubr.f32.mxu0 0.0
      %3214 = vmatmul.mubr.f32.gmra.mrb[0].mxu0 %v2913
      %v3215 = vpop.f32.mrb[0].mxu0
      %v3216 = vadd.f32 %v3139, %v3215
      %v3217 = vpop.f32.mrb[0].mxu0
      %v3218 = vadd.f32 %v3141, %v3217
      %3219 = vmatprep.mubr.f32.mxu0 0.0
      %3220 = vmatmul.mubr.f32.gmra.mrb[0].mxu0 %v2916
      %v3221 = vpop.f32.mrb[0].mxu0
      %v3222 = vadd.f32 %v3145, %v3221
      %v3223 = vpop.f32.mrb[0].mxu0
      %v3224 = vadd.f32 %v3147, %v3223
      %3225 = vdwg.mxu0
      %vm3226 = vcmp.ge.f32.partialorder %v3062, 0.0
      %vm3227 = vcmp.ge.f32.partialorder %v3064, 0.0
      %vm3228 = vcmp.ge.f32.partialorder %v3216, 0.0
      %vm3229 = vcmp.ge.f32.partialorder %v3218, 0.0
      %vm3230 = vcmp.ge.f32.partialorder %v3068, 0.0
      %vm3231 = vcmp.ge.f32.partialorder %v3070, 0.0
      %vm3232 = vcmp.ge.f32.partialorder %v3222, 0.0
      %vm3233 = vcmp.ge.f32.partialorder %v3224, 0.0
      %v3234 = vmul.f32 %v3062, 0.01
      %v3235 = vmul.f32 %v3064, 0.01
      %v3236 = vmul.f32 %v3216, 0.01
      %v3237 = vmul.f32 %v3218, 0.01
      %v3238 = vmul.f32 %v3068, 0.01
      %v3239 = vmul.f32 %v3070, 0.01
      %v3240 = vmul.f32 %v3222, 0.01
      %v3241 = vmul.f32 %v3224, 0.01
      %v3242 = vsel %vm3226, %v3062, %v3234
      %v3243 = vsel %vm3227, %v3064, %v3235
      %v3244 = vsel %vm3228, %v3216, %v3236
      %v3245 = vsel %vm3229, %v3218, %v3237
      %v3246 = vsel %vm3230, %v3068, %v3238
      %v3247 = vsel %vm3231, %v3070, %v3239
      %v3248 = vsel %vm3232, %v3222, %v3240
      %v3249 = vsel %vm3233, %v3224, %v3241
      %v3250 = vld [vmem:[%s8] sm:$0xff]
      %v3251 = vld [vmem:[%s8 + $0x8] sm:$0xff]
      %v3252 = vadd.f32 %v3242, %v3243
      %3253 = vadd.xlane.f32.xlu0 %v3252
      %v3254 = vpop.xlane.xlu0 %3253
      %v3255 = vadd.f32 %v3246, %v3247
      %3256 = vadd.xlane.f32.xlu0 %v3255
      %v3257 = vpop.xlane.xlu0 %3256
      %vm3258 = vcmask 130048
      %v3260 = vsel %vm3258, %v3250, 0
      %v3263 = vsel %vm3258, %v3251, 0
      %3265 = vmatprep.subr.mxu0 0.0
      %3266 = vmatpush1.msra.mxu0 %v3254
      %3267 = vmatprep.subr.mxu0 0.0
      %3268 = vmatpush1.msra.mxu0 %v3257
      %3269 = vmatprep.subr.mxu0 0.0
      %3270 = vmatpush1.msra.mxu0 0.0
      %3271 = vmatprep.subr.mxu0 0.0
      %3272 = vmatpush1.msra.mxu0 0.0
      %3273 = vmatprep.subr.mxu0 0.0
      %3274 = vmatpush1.msra.mxu0 0.0
      %3275 = vmatprep.subr.mxu0 0.0
      %3276 = vmatpush1.msra.mxu0 0.0
      %3277 = vmatprep.subr.mxu0 0.0
      %3278 = vmatpush1.msra.mxu0 0.0
      %3279 = vmatprep.subr.mxu0 0.0
      %3280 = vmatpush1.msra.mxu0 0.0
      %3281 = vmatprep.subr.mxu0 0.0
      %3282 = vmatpush1.msra.mxu0 0.0
      %3283 = vmatprep.subr.mxu0 0.0
      %3284 = vmatpush1.msra.mxu0 0.0
      %3285 = vmatprep.subr.mxu0 0.0
      %3286 = vmatpush1.msra.mxu0 0.0
      %3287 = vmatprep.subr.mxu0 0.0
      %3288 = vmatpush1.msra.mxu0 0.0
      %3289 = vmatprep.subr.mxu0 0.0
      %3290 = vmatpush1.msra.mxu0 0.0
      %3291 = vmatprep.subr.mxu0 0.0
      %3292 = vmatpush1.msra.mxu0 0.0
      %3293 = vmatprep.subr.mxu0 0.0
      %3294 = vmatpush1.msra.mxu0 0.0
      %3295 = vmatprep.subr.mxu0 0.0
      %3296 = vmatpush1.msra.mxu0 0.0
      %3297 = vmatprep.subr.mxu0 0.0
      %3298 = vmatpush1.msra.mxu0 0.0
      %3299 = vmatprep.subr.mxu0 0.0
      %3300 = vmatpush1.msra.mxu0 0.0
      %3301 = vmatprep.subr.mxu0 0.0
      %3302 = vmatpush1.msra.mxu0 0.0
      %3303 = vmatprep.subr.mxu0 0.0
      %3304 = vmatpush1.msra.mxu0 0.0
      %3305 = vmatprep.subr.mxu0 0.0
      %3306 = vmatpush1.msra.mxu0 0.0
      %3307 = vmatprep.subr.mxu0 0.0
      %3308 = vmatpush1.msra.mxu0 0.0
      %3309 = vmatprep.subr.mxu0 0.0
      %3310 = vmatpush1.msra.mxu0 0.0
      %3311 = vmatprep.subr.mxu0 0.0
      %3312 = vmatpush1.msra.mxu0 0.0
      %3313 = vmatprep.subr.mxu0 0.0
      %3314 = vmatpush1.msra.mxu0 0.0
      %3315 = vmatprep.subr.mxu0 0.0
      %3316 = vmatpush1.msra.mxu0 0.0
      %3317 = vmatprep.subr.mxu0 0.0
      %3318 = vmatpush1.msra.mxu0 0.0
      %3319 = vmatprep.subr.mxu0 0.0
      %3320 = vmatpush1.msra.mxu0 0.0
      %3321 = vmatprep.subr.mxu0 0.0
      %3322 = vmatpush1.msra.mxu0 0.0
      %3323 = vmatprep.subr.mxu0 0.0
      %3324 = vmatpush1.msra.mxu0 0.0
      %3325 = vmatprep.subr.mxu0 0.0
      %3326 = vmatpush1.msra.mxu0 0.0
      %3327 = vmatprep.subr.mxu0 0.0
      %3328 = vmatpush1.msra.mxu0 0.0
      %3329 = vmatprep.mubr.f32.mxu0 0.0
      %3330 = vmatmul.mubr.f32.gmra.mrb[0].mxu0 %v3260
      %v3331 = vpop.f32.mrb[0].mxu0
      %v3332 = vadd.f32 0.0, %v3331
      %v3333 = vpop.f32.mrb[0].mxu0
      %3334 = vmatprep.mubr.f32.mxu0 0.0
      %3335 = vmatmul.mubr.f32.gmra.mrb[0].mxu0 %v3263
      %v3336 = vpop.f32.mrb[0].mxu0
      %v3337 = vadd.f32 0.0, %v3336
      %v3338 = vpop.f32.mrb[0].mxu0
      %3339 = vdwg.mxu0
      %3341 = vset.pattern.permute.xlu0 0
      %3342 = vperm.xlu0 %3341, %v3332
      %v3343 = vpop.permute.xlu0 %3342
      %3346 = vset.pattern.permute.xlu0 0
      %3347 = vperm.xlu0 %3346, %v3337
      %v3348 = vpop.permute.xlu0 %3347
      %v3350 = vsub.f32 %v3242, %v3343
      %v3351 = vsub.f32 %v3243, %v3343
      %v3352 = vsub.f32 %v3246, %v3348
      %v3353 = vsub.f32 %v3247, %v3348
      %v3354 = vmul.f32 %v3350, %v3350
      %v3355 = vmul.f32 %v3351, %v3351
      %v3356 = vmul.f32 %v3352, %v3352
      %v3357 = vmul.f32 %v3353, %v3353
      %v3358 = vadd.f32 %v3354, %v3355
      %3359 = vadd.xlane.f32.xlu0 %v3358
      %v3360 = vpop.xlane.xlu0 %3359
      %v3361 = vadd.f32 %v3356, %v3357
      %3362 = vadd.xlane.f32.xlu0 %v3361
      %v3363 = vpop.xlane.xlu0 %3362
      %3364 = vmatprep.subr.mxu0 0.0
      %3365 = vmatpush1.msra.mxu0 %v3360
      %3366 = vmatprep.subr.mxu0 0.0
      %3367 = vmatpush1.msra.mxu0 %v3363
      %3368 = vmatprep.subr.mxu0 0.0
      %3369 = vmatpush1.msra.mxu0 0.0
      %3370 = vmatprep.subr.mxu0 0.0
      %3371 = vmatpush1.msra.mxu0 0.0
      %3372 = vmatprep.subr.mxu0 0.0
      %3373 = vmatpush1.msra.mxu0 0.0
      %3374 = vmatprep.subr.mxu0 0.0
      %3375 = vmatpush1.msra.mxu0 0.0
      %3376 = vmatprep.subr.mxu0 0.0
      %3377 = vmatpush1.msra.mxu0 0.0
      %3378 = vmatprep.subr.mxu0 0.0
      %3379 = vmatpush1.msra.mxu0 0.0
      %3380 = vmatprep.subr.mxu0 0.0
      %3381 = vmatpush1.msra.mxu0 0.0
      %3382 = vmatprep.subr.mxu0 0.0
      %3383 = vmatpush1.msra.mxu0 0.0
      %3384 = vmatprep.subr.mxu0 0.0
      %3385 = vmatpush1.msra.mxu0 0.0
      %3386 = vmatprep.subr.mxu0 0.0
      %3387 = vmatpush1.msra.mxu0 0.0
      %3388 = vmatprep.subr.mxu0 0.0
      %3389 = vmatpush1.msra.mxu0 0.0
      %3390 = vmatprep.subr.mxu0 0.0
      %3391 = vmatpush1.msra.mxu0 0.0
      %3392 = vmatprep.subr.mxu0 0.0
      %3393 = vmatpush1.msra.mxu0 0.0
      %3394 = vmatprep.subr.mxu0 0.0
      %3395 = vmatpush1.msra.mxu0 0.0
      %3396 = vmatprep.subr.mxu0 0.0
      %3397 = vmatpush1.msra.mxu0 0.0
      %3398 = vmatprep.subr.mxu0 0.0
      %3399 = vmatpush1.msra.mxu0 0.0
      %3400 = vmatprep.subr.mxu0 0.0
      %3401 = vmatpush1.msra.mxu0 0.0
      %3402 = vmatprep.subr.mxu0 0.0
      %3403 = vmatpush1.msra.mxu0 0.0
      %3404 = vmatprep.subr.mxu0 0.0
      %3405 = vmatpush1.msra.mxu0 0.0
      %3406 = vmatprep.subr.mxu0 0.0
      %3407 = vmatpush1.msra.mxu0 0.0
      %3408 = vmatprep.subr.mxu0 0.0
      %3409 = vmatpush1.msra.mxu0 0.0
      %3410 = vmatprep.subr.mxu0 0.0
      %3411 = vmatpush1.msra.mxu0 0.0
      %3412 = vmatprep.subr.mxu0 0.0
      %3413 = vmatpush1.msra.mxu0 0.0
      %3414 = vmatprep.subr.mxu0 0.0
      %3415 = vmatpush1.msra.mxu0 0.0
      %3416 = vmatprep.subr.mxu0 0.0
      %3417 = vmatpush1.msra.mxu0 0.0
      %3418 = vmatprep.subr.mxu0 0.0
      %3419 = vmatpush1.msra.mxu0 0.0
      %3420 = vmatprep.subr.mxu0 0.0
      %3421 = vmatpush1.msra.mxu0 0.0
      %3422 = vmatprep.subr.mxu0 0.0
      %3423 = vmatpush1.msra.mxu0 0.0
      %3424 = vmatprep.subr.mxu0 0.0
      %3425 = vmatpush1.msra.mxu0 0.0
      %3426 = vmatprep.subr.mxu0 0.0
      %3427 = vmatpush1.msra.mxu0 0.0
      %3428 = vmatprep.mubr.f32.mxu0 0.0
      %3429 = vmatmul.mubr.f32.gmra.mrb[0].mxu0 %v3260
      %v3430 = vpop.f32.mrb[0].mxu0
      %v3431 = vadd.f32 1e-05, %v3430
      %v3432 = vpop.f32.mrb[0].mxu0
      %3433 = vmatprep.mubr.f32.mxu0 0.0
      %3434 = vmatmul.mubr.f32.gmra.mrb[0].mxu0 %v3263
      %v3435 = vpop.f32.mrb[0].mxu0
      %v3436 = vadd.f32 1e-05, %v3435
      %v3437 = vpop.f32.mrb[0].mxu0
      %3438 = vdwg.mxu0
      %v3439 = vrsqrt.pop %v3431
      %v3440 = vrsqrt.pop %v3436
      %3442 = vset.pattern.permute.xlu0 0
      %3443 = vperm.xlu0 %3442, %v3439
      %v3444 = vpop.permute.xlu0 %3443
      %3447 = vset.pattern.permute.xlu0 0
      %3448 = vperm.xlu0 %3447, %v3440
      %v3449 = vpop.permute.xlu0 %3448
      %v3451 = vmul.f32 %v3350, %v3444
      %v3452 = vmul.f32 %v3351, %v3444
      %v3453 = vmul.f32 %v3352, %v3449
      %v3454 = vmul.f32 %v3353, %v3449
      %v3455 = vadd.f32 %v3244, %v3245
      %3456 = vadd.xlane.f32.xlu0 %v3455
      %v3457 = vpop.xlane.xlu0 %3456
      %v3458 = vadd.f32 %v3248, %v3249
      %3459 = vadd.xlane.f32.xlu0 %v3458
      %v3460 = vpop.xlane.xlu0 %3459
      %3461 = vmatprep.subr.mxu0 0.0
      %3462 = vmatpush1.msra.mxu0 %v3457
      %3463 = vmatprep.subr.mxu0 0.0
      %3464 = vmatpush1.msra.mxu0 %v3460
      %3465 = vmatprep.subr.mxu0 0.0
      %3466 = vmatpush1.msra.mxu0 0.0
      %3467 = vmatprep.subr.mxu0 0.0
      %3468 = vmatpush1.msra.mxu0 0.0
      %3469 = vmatprep.subr.mxu0 0.0
      %3470 = vmatpush1.msra.mxu0 0.0
      %3471 = vmatprep.subr.mxu0 0.0
      %3472 = vmatpush1.msra.mxu0 0.0
      %3473 = vmatprep.subr.mxu0 0.0
      %3474 = vmatpush1.msra.mxu0 0.0
      %3475 = vmatprep.subr.mxu0 0.0
      %3476 = vmatpush1.msra.mxu0 0.0
      %3477 = vmatprep.subr.mxu0 0.0
      %3478 = vmatpush1.msra.mxu0 0.0
      %3479 = vmatprep.subr.mxu0 0.0
      %3480 = vmatpush1.msra.mxu0 0.0
      %3481 = vmatprep.subr.mxu0 0.0
      %3482 = vmatpush1.msra.mxu0 0.0
      %3483 = vmatprep.subr.mxu0 0.0
      %3484 = vmatpush1.msra.mxu0 0.0
      %3485 = vmatprep.subr.mxu0 0.0
      %3486 = vmatpush1.msra.mxu0 0.0
      %3487 = vmatprep.subr.mxu0 0.0
      %3488 = vmatpush1.msra.mxu0 0.0
      %3489 = vmatprep.subr.mxu0 0.0
      %3490 = vmatpush1.msra.mxu0 0.0
      %3491 = vmatprep.subr.mxu0 0.0
      %3492 = vmatpush1.msra.mxu0 0.0
      %3493 = vmatprep.subr.mxu0 0.0
      %3494 = vmatpush1.msra.mxu0 0.0
      %3495 = vmatprep.subr.mxu0 0.0
      %3496 = vmatpush1.msra.mxu0 0.0
      %3497 = vmatprep.subr.mxu0 0.0
      %3498 = vmatpush1.msra.mxu0 0.0
      %3499 = vmatprep.subr.mxu0 0.0
      %3500 = vmatpush1.msra.mxu0 0.0
      %3501 = vmatprep.subr.mxu0 0.0
      %3502 = vmatpush1.msra.mxu0 0.0
      %3503 = vmatprep.subr.mxu0 0.0
      %3504 = vmatpush1.msra.mxu0 0.0
      %3505 = vmatprep.subr.mxu0 0.0
      %3506 = vmatpush1.msra.mxu0 0.0
      %3507 = vmatprep.subr.mxu0 0.0
      %3508 = vmatpush1.msra.mxu0 0.0
      %3509 = vmatprep.subr.mxu0 0.0
      %3510 = vmatpush1.msra.mxu0 0.0
      %3511 = vmatprep.subr.mxu0 0.0
      %3512 = vmatpush1.msra.mxu0 0.0
      %3513 = vmatprep.subr.mxu0 0.0
      %3514 = vmatpush1.msra.mxu0 0.0
      %3515 = vmatprep.subr.mxu0 0.0
      %3516 = vmatpush1.msra.mxu0 0.0
      %3517 = vmatprep.subr.mxu0 0.0
      %3518 = vmatpush1.msra.mxu0 0.0
      %3519 = vmatprep.subr.mxu0 0.0
      %3520 = vmatpush1.msra.mxu0 0.0
      %3521 = vmatprep.subr.mxu0 0.0
      %3522 = vmatpush1.msra.mxu0 0.0
      %3523 = vmatprep.subr.mxu0 0.0
      %3524 = vmatpush1.msra.mxu0 0.0
      %3525 = vmatprep.mubr.f32.mxu0 0.0
      %3526 = vmatmul.mubr.f32.gmra.mrb[0].mxu0 %v3260
      %v3527 = vpop.f32.mrb[0].mxu0
      %v3528 = vadd.f32 0.0, %v3527
      %v3529 = vpop.f32.mrb[0].mxu0
      %3530 = vmatprep.mubr.f32.mxu0 0.0
      %3531 = vmatmul.mubr.f32.gmra.mrb[0].mxu0 %v3263
      %v3532 = vpop.f32.mrb[0].mxu0
      %v3533 = vadd.f32 0.0, %v3532
      %v3534 = vpop.f32.mrb[0].mxu0
      %3535 = vdwg.mxu0
      %3537 = vset.pattern.permute.xlu0 0
      %3538 = vperm.xlu0 %3537, %v3528
      %v3539 = vpop.permute.xlu0 %3538
      %3542 = vset.pattern.permute.xlu0 0
      %3543 = vperm.xlu0 %3542, %v3533
      %v3544 = vpop.permute.xlu0 %3543
      %v3546 = vsub.f32 %v3244, %v3539
      %v3547 = vsub.f32 %v3245, %v3539
      %v3548 = vsub.f32 %v3248, %v3544
      %v3549 = vsub.f32 %v3249, %v3544
      %v3550 = vmul.f32 %v3546, %v3546
      %v3551 = vmul.f32 %v3547, %v3547
      %v3552 = vmul.f32 %v3548, %v3548
      %v3553 = vmul.f32 %v3549, %v3549
      %v3554 = vadd.f32 %v3550, %v3551
      %3555 = vadd.xlane.f32.xlu0 %v3554
      %v3556 = vpop.xlane.xlu0 %3555
      %v3557 = vadd.f32 %v3552, %v3553
      %3558 = vadd.xlane.f32.xlu0 %v3557
      %v3559 = vpop.xlane.xlu0 %3558
      %3560 = vmatprep.subr.mxu0 0.0
      %3561 = vmatpush1.msra.mxu0 %v3556
      %3562 = vmatprep.subr.mxu0 0.0
      %3563 = vmatpush1.msra.mxu0 %v3559
      %3564 = vmatprep.subr.mxu0 0.0
      %3565 = vmatpush1.msra.mxu0 0.0
      %3566 = vmatprep.subr.mxu0 0.0
      %3567 = vmatpush1.msra.mxu0 0.0
      %3568 = vmatprep.subr.mxu0 0.0
      %3569 = vmatpush1.msra.mxu0 0.0
      %3570 = vmatprep.subr.mxu0 0.0
      %3571 = vmatpush1.msra.mxu0 0.0
      %3572 = vmatprep.subr.mxu0 0.0
      %3573 = vmatpush1.msra.mxu0 0.0
      %3574 = vmatprep.subr.mxu0 0.0
      %3575 = vmatpush1.msra.mxu0 0.0
      %3576 = vmatprep.subr.mxu0 0.0
      %3577 = vmatpush1.msra.mxu0 0.0
      %3578 = vmatprep.subr.mxu0 0.0
      %3579 = vmatpush1.msra.mxu0 0.0
      %3580 = vmatprep.subr.mxu0 0.0
      %3581 = vmatpush1.msra.mxu0 0.0
      %3582 = vmatprep.subr.mxu0 0.0
      %3583 = vmatpush1.msra.mxu0 0.0
      %3584 = vmatprep.subr.mxu0 0.0
      %3585 = vmatpush1.msra.mxu0 0.0
      %3586 = vmatprep.subr.mxu0 0.0
      %3587 = vmatpush1.msra.mxu0 0.0
      %3588 = vmatprep.subr.mxu0 0.0
      %3589 = vmatpush1.msra.mxu0 0.0
      %3590 = vmatprep.subr.mxu0 0.0
      %3591 = vmatpush1.msra.mxu0 0.0
      %3592 = vmatprep.subr.mxu0 0.0
      %3593 = vmatpush1.msra.mxu0 0.0
      %3594 = vmatprep.subr.mxu0 0.0
      %3595 = vmatpush1.msra.mxu0 0.0
      %3596 = vmatprep.subr.mxu0 0.0
      %3597 = vmatpush1.msra.mxu0 0.0
      %3598 = vmatprep.subr.mxu0 0.0
      %3599 = vmatpush1.msra.mxu0 0.0
      %3600 = vmatprep.subr.mxu0 0.0
      %3601 = vmatpush1.msra.mxu0 0.0
      %3602 = vmatprep.subr.mxu0 0.0
      %3603 = vmatpush1.msra.mxu0 0.0
      %3604 = vmatprep.subr.mxu0 0.0
      %3605 = vmatpush1.msra.mxu0 0.0
      %3606 = vmatprep.subr.mxu0 0.0
      %3607 = vmatpush1.msra.mxu0 0.0
      %3608 = vmatprep.subr.mxu0 0.0
      %3609 = vmatpush1.msra.mxu0 0.0
      %3610 = vmatprep.subr.mxu0 0.0
      %3611 = vmatpush1.msra.mxu0 0.0
      %3612 = vmatprep.subr.mxu0 0.0
      %3613 = vmatpush1.msra.mxu0 0.0
      %3614 = vmatprep.subr.mxu0 0.0
      %3615 = vmatpush1.msra.mxu0 0.0
      %3616 = vmatprep.subr.mxu0 0.0
      %3617 = vmatpush1.msra.mxu0 0.0
      %3618 = vmatprep.subr.mxu0 0.0
      %3619 = vmatpush1.msra.mxu0 0.0
      %3620 = vmatprep.subr.mxu0 0.0
      %3621 = vmatpush1.msra.mxu0 0.0
      %3622 = vmatprep.subr.mxu0 0.0
      %3623 = vmatpush1.msra.mxu0 0.0
      %3624 = vmatprep.mubr.f32.mxu0 0.0
      %3625 = vmatmul.mubr.f32.gmra.mrb[0].mxu0 %v3260
      %v3626 = vpop.f32.mrb[0].mxu0
      %v3627 = vadd.f32 1e-05, %v3626
      %v3628 = vpop.f32.mrb[0].mxu0
      %3629 = vmatprep.mubr.f32.mxu0 0.0
      %3630 = vmatmul.mubr.f32.gmra.mrb[0].mxu0 %v3263
      %v3631 = vpop.f32.mrb[0].mxu0
      %v3632 = vadd.f32 1e-05, %v3631
      %v3633 = vpop.f32.mrb[0].mxu0
      %3634 = vdwg.mxu0
      %v3635 = vrsqrt.pop %v3627
      %v3636 = vrsqrt.pop %v3632
      %3638 = vset.pattern.permute.xlu0 0
      %3639 = vperm.xlu0 %3638, %v3635
      %v3640 = vpop.permute.xlu0 %3639
      %3643 = vset.pattern.permute.xlu0 0
      %3644 = vperm.xlu0 %3643, %v3636
      %v3645 = vpop.permute.xlu0 %3644
      %v3647 = vmul.f32 %v3546, %v3640
      %v3648 = vmul.f32 %v3547, %v3640
      %v3649 = vmul.f32 %v3548, %v3645
      %v3650 = vmul.f32 %v3549, %v3645
      %3651 = vrot.lane.b32.xlu0 %v3451, 17
      %v3652 = vpop.permute.xlu0 %3651
      %3653 = vrot.lane.b32.xlu0 %v3453, 17
      %v3654 = vpop.permute.xlu0 %3653
      %3655 = vrot.lane.b32.xlu0 %v3452, 17
      %v3656 = vpop.permute.xlu0 %3655
      %3657 = vrot.lane.b32.xlu0 %v3454, 17
      %v3658 = vpop.permute.xlu0 %3657
      %3659 = vrot.lane.b32.xlu0 %v3647, 17
      %v3660 = vpop.permute.xlu0 %3659
      %3661 = vrot.lane.b32.xlu0 %v3649, 17
      %v3662 = vpop.permute.xlu0 %3661
      %3663 = vrot.lane.b32.xlu0 %v3648, 17
      %v3664 = vpop.permute.xlu0 %3663
      %3665 = vrot.lane.b32.xlu0 %v3650, 17
      %v3666 = vpop.permute.xlu0 %3665
      %v3667 = vsel %vm401, %v3660, %v3664
      %v3668 = vsel %vm401, %v3662, %v3666
      %v3669 = vsel %vm401, %v3656, %v3660
      %v3670 = vsel %vm401, %v3658, %v3662
      %v3671 = vsel %vm401, %v3652, %v3656
      %v3672 = vsel %vm401, %v3654, %v3658
      %v3673 = vsel %vm401, %v3664, %v3652
      %v3674 = vsel %vm401, %v3666, %v3654
      %v3675 = vld [vmem:[%s9] ss:$8 sm:$0xf]
      %v3677 = vlaneseq
      %v3678 = vshrl.u32 %v3677, 7
      %v3679 = vsub.s32 0, %v3678
      %v3680 = vrot.slane %v3675, %v3679
      %v3681 = vlaneseq
      %v3682 = vshrl.u32 %v3681, 7
      %v3683 = vsub.s32 1, %v3682
      %v3684 = vrot.slane %v3675, %v3683
      %v3685 = vlaneseq
      %v3686 = vshrl.u32 %v3685, 7
      %v3687 = vsub.s32 2, %v3686
      %v3688 = vrot.slane %v3675, %v3687
      %v3689 = vlaneseq
      %v3690 = vshrl.u32 %v3689, 7
      %v3691 = vsub.s32 3, %v3690
      %v3692 = vrot.slane %v3675, %v3691
      %v3697 = vmul.f32 %v3673, %v3680
      %v3698 = vmul.f32 %v3671, %v3684
      %v3699 = vmul.f32 %v3669, %v3688
      %v3700 = vmul.f32 %v3667, %v3692
      %v3701 = vmul.f32 %v3674, %v3680
      %v3702 = vmul.f32 %v3672, %v3684
      %v3703 = vmul.f32 %v3670, %v3688
      %v3704 = vmul.f32 %v3668, %v3692
      %3705 = vst [vmem:[#allocation2] sm:$0xff] %v3697
      %3706 = vst [vmem:[#allocation2 + $0x8] sm:$0xff] %v3698
      %3707 = vst [vmem:[#allocation2 + $0x10] sm:$0xff] %v3699
      %3708 = vst [vmem:[#allocation2 + $0x18] sm:$0xff] %v3700
      %3709 = vst [vmem:[#allocation2 + $0x20] sm:$0xff] %v3701
      %3710 = vst [vmem:[#allocation2 + $0x28] sm:$0xff] %v3702
      %3711 = vst [vmem:[#allocation2 + $0x30] sm:$0xff] %v3703
      %3712 = vst [vmem:[#allocation2 + $0x38] sm:$0xff] %v3704
      %3713 = vrot.lane.b32.xlu0 %v3451, 16
      %v3714 = vpop.permute.xlu0 %3713
      %3715 = vrot.lane.b32.xlu0 %v3453, 16
      %v3716 = vpop.permute.xlu0 %3715
      %3717 = vrot.lane.b32.xlu0 %v3452, 16
      %v3718 = vpop.permute.xlu0 %3717
      %3719 = vrot.lane.b32.xlu0 %v3454, 16
      %v3720 = vpop.permute.xlu0 %3719
      %3721 = vrot.lane.b32.xlu0 %v3647, 16
      %v3722 = vpop.permute.xlu0 %3721
      %3723 = vrot.lane.b32.xlu0 %v3649, 16
      %v3724 = vpop.permute.xlu0 %3723
      %3725 = vrot.lane.b32.xlu0 %v3648, 16
      %v3726 = vpop.permute.xlu0 %3725
      %3727 = vrot.lane.b32.xlu0 %v3650, 16
      %v3728 = vpop.permute.xlu0 %3727
      %v3729 = vsel %vm444, %v3722, %v3726
      %v3730 = vsel %vm444, %v3724, %v3728
      %v3731 = vsel %vm444, %v3718, %v3722
      %v3732 = vsel %vm444, %v3720, %v3724
      %v3733 = vsel %vm444, %v3714, %v3718
      %v3734 = vsel %vm444, %v3716, %v3720
      %v3735 = vsel %vm444, %v3726, %v3714
      %v3736 = vsel %vm444, %v3728, %v3716
      %v3737 = vld [vmem:[%s449] ss:$8 sm:$0xf]
      %v3739 = vlaneseq
      %v3740 = vshrl.u32 %v3739, 7
      %v3741 = vsub.s32 0, %v3740
      %v3742 = vrot.slane %v3737, %v3741
      %v3743 = vlaneseq
      %v3744 = vshrl.u32 %v3743, 7
      %v3745 = vsub.s32 1, %v3744
      %v3746 = vrot.slane %v3737, %v3745
      %v3747 = vlaneseq
      %v3748 = vshrl.u32 %v3747, 7
      %v3749 = vsub.s32 2, %v3748
      %v3750 = vrot.slane %v3737, %v3749
      %v3751 = vlaneseq
      %v3752 = vshrl.u32 %v3751, 7
      %v3753 = vsub.s32 3, %v3752
      %v3754 = vrot.slane %v3737, %v3753
      %v3759 = vmul.f32 %v3735, %v3742
      %v3760 = vmul.f32 %v3733, %v3746
      %v3761 = vmul.f32 %v3731, %v3750
      %v3762 = vmul.f32 %v3729, %v3754
      %v3763 = vmul.f32 %v3736, %v3742
      %v3764 = vmul.f32 %v3734, %v3746
      %v3765 = vmul.f32 %v3732, %v3750
      %v3766 = vmul.f32 %v3730, %v3754
      %3767 = vst [vmem:[#allocation2 + $0x40] sm:$0xff] %v3759
      %3768 = vst [vmem:[#allocation2 + $0x48] sm:$0xff] %v3760
      %3769 = vst [vmem:[#allocation2 + $0x50] sm:$0xff] %v3761
      %3770 = vst [vmem:[#allocation2 + $0x58] sm:$0xff] %v3762
      %3771 = vst [vmem:[#allocation2 + $0x60] sm:$0xff] %v3763
      %3772 = vst [vmem:[#allocation2 + $0x68] sm:$0xff] %v3764
      %3773 = vst [vmem:[#allocation2 + $0x70] sm:$0xff] %v3765
      %3774 = vst [vmem:[#allocation2 + $0x78] sm:$0xff] %v3766
      %3775 = vrot.lane.b32.xlu0 %v3451, 15
      %v3776 = vpop.permute.xlu0 %3775
      %3777 = vrot.lane.b32.xlu0 %v3453, 15
      %v3778 = vpop.permute.xlu0 %3777
      %3779 = vrot.lane.b32.xlu0 %v3452, 15
      %v3780 = vpop.permute.xlu0 %3779
      %3781 = vrot.lane.b32.xlu0 %v3454, 15
      %v3782 = vpop.permute.xlu0 %3781
      %3783 = vrot.lane.b32.xlu0 %v3647, 15
      %v3784 = vpop.permute.xlu0 %3783
      %3785 = vrot.lane.b32.xlu0 %v3649, 15
      %v3786 = vpop.permute.xlu0 %3785
      %3787 = vrot.lane.b32.xlu0 %v3648, 15
      %v3788 = vpop.permute.xlu0 %3787
      %3789 = vrot.lane.b32.xlu0 %v3650, 15
      %v3790 = vpop.permute.xlu0 %3789
      %v3791 = vsel %vm488, %v3784, %v3788
      %v3792 = vsel %vm488, %v3786, %v3790
      %v3793 = vsel %vm488, %v3780, %v3784
      %v3794 = vsel %vm488, %v3782, %v3786
      %v3795 = vsel %vm488, %v3776, %v3780
      %v3796 = vsel %vm488, %v3778, %v3782
      %v3797 = vsel %vm488, %v3788, %v3776
      %v3798 = vsel %vm488, %v3790, %v3778
      %v3799 = vld [vmem:[%s493] ss:$8 sm:$0xf]
      %v3801 = vlaneseq
      %v3802 = vshrl.u32 %v3801, 7
      %v3803 = vsub.s32 0, %v3802
      %v3804 = vrot.slane %v3799, %v3803
      %v3805 = vlaneseq
      %v3806 = vshrl.u32 %v3805, 7
      %v3807 = vsub.s32 1, %v3806
      %v3808 = vrot.slane %v3799, %v3807
      %v3809 = vlaneseq
      %v3810 = vshrl.u32 %v3809, 7
      %v3811 = vsub.s32 2, %v3810
      %v3812 = vrot.slane %v3799, %v3811
      %v3813 = vlaneseq
      %v3814 = vshrl.u32 %v3813, 7
      %v3815 = vsub.s32 3, %v3814
      %v3816 = vrot.slane %v3799, %v3815
      %v3821 = vmul.f32 %v3797, %v3804
      %v3822 = vmul.f32 %v3795, %v3808
      %v3823 = vmul.f32 %v3793, %v3812
      %v3824 = vmul.f32 %v3791, %v3816
      %v3825 = vmul.f32 %v3798, %v3804
      %v3826 = vmul.f32 %v3796, %v3808
      %v3827 = vmul.f32 %v3794, %v3812
      %v3828 = vmul.f32 %v3792, %v3816
      %3829 = vst [vmem:[#allocation2 + $0x80] sm:$0xff] %v3821
      %3830 = vst [vmem:[#allocation2 + $0x88] sm:$0xff] %v3822
      %3831 = vst [vmem:[#allocation2 + $0x90] sm:$0xff] %v3823
      %3832 = vst [vmem:[#allocation2 + $0x98] sm:$0xff] %v3824
      %3833 = vst [vmem:[#allocation2 + $0xa0] sm:$0xff] %v3825
      %3834 = vst [vmem:[#allocation2 + $0xa8] sm:$0xff] %v3826
      %3835 = vst [vmem:[#allocation2 + $0xb0] sm:$0xff] %v3827
      %3836 = vst [vmem:[#allocation2 + $0xb8] sm:$0xff] %v3828
      %3837 = vrot.lane.b32.xlu0 %v3451, 1
      %v3838 = vpop.permute.xlu0 %3837
      %3839 = vrot.lane.b32.xlu0 %v3453, 1
      %v3840 = vpop.permute.xlu0 %3839
      %3841 = vrot.lane.b32.xlu0 %v3452, 1
      %v3842 = vpop.permute.xlu0 %3841
      %3843 = vrot.lane.b32.xlu0 %v3454, 1
      %v3844 = vpop.permute.xlu0 %3843
      %3845 = vrot.lane.b32.xlu0 %v3647, 1
      %v3846 = vpop.permute.xlu0 %3845
      %3847 = vrot.lane.b32.xlu0 %v3649, 1
      %v3848 = vpop.permute.xlu0 %3847
      %3849 = vrot.lane.b32.xlu0 %v3648, 1
      %v3850 = vpop.permute.xlu0 %3849
      %3851 = vrot.lane.b32.xlu0 %v3650, 1
      %v3852 = vpop.permute.xlu0 %3851
      %v3853 = vsel %vm532, %v3846, %v3850
      %v3854 = vsel %vm532, %v3848, %v3852
      %v3855 = vsel %vm532, %v3842, %v3846
      %v3856 = vsel %vm532, %v3844, %v3848
      %v3857 = vsel %vm532, %v3838, %v3842
      %v3858 = vsel %vm532, %v3840, %v3844
      %v3859 = vsel %vm532, %v3850, %v3838
      %v3860 = vsel %vm532, %v3852, %v3840
      %v3861 = vld [vmem:[%s537] ss:$8 sm:$0xf]
      %v3863 = vlaneseq
      %v3864 = vshrl.u32 %v3863, 7
      %v3865 = vsub.s32 0, %v3864
      %v3866 = vrot.slane %v3861, %v3865
      %v3867 = vlaneseq
      %v3868 = vshrl.u32 %v3867, 7
      %v3869 = vsub.s32 1, %v3868
      %v3870 = vrot.slane %v3861, %v3869
      %v3871 = vlaneseq
      %v3872 = vshrl.u32 %v3871, 7
      %v3873 = vsub.s32 2, %v3872
      %v3874 = vrot.slane %v3861, %v3873
      %v3875 = vlaneseq
      %v3876 = vshrl.u32 %v3875, 7
      %v3877 = vsub.s32 3, %v3876
      %v3878 = vrot.slane %v3861, %v3877
      %v3883 = vmul.f32 %v3859, %v3866
      %v3884 = vmul.f32 %v3857, %v3870
      %v3885 = vmul.f32 %v3855, %v3874
      %v3886 = vmul.f32 %v3853, %v3878
      %v3887 = vmul.f32 %v3860, %v3866
      %v3888 = vmul.f32 %v3858, %v3870
      %v3889 = vmul.f32 %v3856, %v3874
      %v3890 = vmul.f32 %v3854, %v3878
      %3891 = vst [vmem:[#allocation2 + $0xc0] sm:$0xff] %v3883
      %3892 = vst [vmem:[#allocation2 + $0xc8] sm:$0xff] %v3884
      %3893 = vst [vmem:[#allocation2 + $0xd0] sm:$0xff] %v3885
      %3894 = vst [vmem:[#allocation2 + $0xd8] sm:$0xff] %v3886
      %3895 = vst [vmem:[#allocation2 + $0xe0] sm:$0xff] %v3887
      %3896 = vst [vmem:[#allocation2 + $0xe8] sm:$0xff] %v3888
      %3897 = vst [vmem:[#allocation2 + $0xf0] sm:$0xff] %v3889
      %3898 = vst [vmem:[#allocation2 + $0xf8] sm:$0xff] %v3890
      %3899 = vst [vmem:[#allocation2 + $0x100] sm:$0xff] %v3451
      %3900 = vst [vmem:[#allocation2 + $0x108] sm:$0xff] %v3452
      %3901 = vst [vmem:[#allocation2 + $0x110] sm:$0xff] %v3647
      %3902 = vst [vmem:[#allocation2 + $0x118] sm:$0xff] %v3648
      %3903 = vst [vmem:[#allocation2 + $0x120] sm:$0xff] %v3453
      %3904 = vst [vmem:[#allocation2 + $0x128] sm:$0xff] %v3454
      %3905 = vst [vmem:[#allocation2 + $0x130] sm:$0xff] %v3649
      %3906 = vst [vmem:[#allocation2 + $0x138] sm:$0xff] %v3650
      %3907 = vrot.lane.b32.xlu0 %v3451, 127
      %v3908 = vpop.permute.xlu0 %3907
      %3909 = vrot.lane.b32.xlu0 %v3453, 127
      %v3910 = vpop.permute.xlu0 %3909
      %3911 = vrot.lane.b32.xlu0 %v3452, 127
      %v3912 = vpop.permute.xlu0 %3911
      %3913 = vrot.lane.b32.xlu0 %v3454, 127
      %v3914 = vpop.permute.xlu0 %3913
      %3915 = vrot.lane.b32.xlu0 %v3647, 127
      %v3916 = vpop.permute.xlu0 %3915
      %3917 = vrot.lane.b32.xlu0 %v3649, 127
      %v3918 = vpop.permute.xlu0 %3917
      %3919 = vrot.lane.b32.xlu0 %v3648, 127
      %v3920 = vpop.permute.xlu0 %3919
      %3921 = vrot.lane.b32.xlu0 %v3650, 127
      %v3922 = vpop.permute.xlu0 %3921
      %v3923 = vsel %vm580, %v3916, %v3920
      %v3924 = vsel %vm580, %v3918, %v3922
      %v3925 = vsel %vm580, %v3912, %v3916
      %v3926 = vsel %vm580, %v3914, %v3918
      %v3927 = vsel %vm580, %v3908, %v3912
      %v3928 = vsel %vm580, %v3910, %v3914
      %v3929 = vsel %vm580, %v3920, %v3908
      %v3930 = vsel %vm580, %v3922, %v3910
      %v3931 = vld [vmem:[%s585] ss:$8 sm:$0xf]
      %v3933 = vlaneseq
      %v3934 = vshrl.u32 %v3933, 7
      %v3935 = vsub.s32 0, %v3934
      %v3936 = vrot.slane %v3931, %v3935
      %v3937 = vlaneseq
      %v3938 = vshrl.u32 %v3937, 7
      %v3939 = vsub.s32 1, %v3938
      %v3940 = vrot.slane %v3931, %v3939
      %v3941 = vlaneseq
      %v3942 = vshrl.u32 %v3941, 7
      %v3943 = vsub.s32 2, %v3942
      %v3944 = vrot.slane %v3931, %v3943
      %v3945 = vlaneseq
      %v3946 = vshrl.u32 %v3945, 7
      %v3947 = vsub.s32 3, %v3946
      %v3948 = vrot.slane %v3931, %v3947
      %v3953 = vmul.f32 %v3927, %v3936
      %v3954 = vmul.f32 %v3925, %v3940
      %v3955 = vmul.f32 %v3923, %v3944
      %v3956 = vmul.f32 %v3929, %v3948
      %v3957 = vmul.f32 %v3928, %v3936
      %v3958 = vmul.f32 %v3926, %v3940
      %v3959 = vmul.f32 %v3924, %v3944
      %v3960 = vmul.f32 %v3930, %v3948
      %3961 = vst [vmem:[#allocation2 + $0x140] sm:$0xff] %v3953
      %3962 = vst [vmem:[#allocation2 + $0x148] sm:$0xff] %v3954
      %3963 = vst [vmem:[#allocation2 + $0x150] sm:$0xff] %v3955
      %3964 = vst [vmem:[#allocation2 + $0x158] sm:$0xff] %v3956
      %3965 = vst [vmem:[#allocation2 + $0x160] sm:$0xff] %v3957
      %3966 = vst [vmem:[#allocation2 + $0x168] sm:$0xff] %v3958
      %3967 = vst [vmem:[#allocation2 + $0x170] sm:$0xff] %v3959
      %3968 = vst [vmem:[#allocation2 + $0x178] sm:$0xff] %v3960
      %3969 = vrot.lane.b32.xlu0 %v3451, 113
      %v3970 = vpop.permute.xlu0 %3969
      %3971 = vrot.lane.b32.xlu0 %v3453, 113
      %v3972 = vpop.permute.xlu0 %3971
      %3973 = vrot.lane.b32.xlu0 %v3452, 113
      %v3974 = vpop.permute.xlu0 %3973
      %3975 = vrot.lane.b32.xlu0 %v3454, 113
      %v3976 = vpop.permute.xlu0 %3975
      %3977 = vrot.lane.b32.xlu0 %v3647, 113
      %v3978 = vpop.permute.xlu0 %3977
      %3979 = vrot.lane.b32.xlu0 %v3649, 113
      %v3980 = vpop.permute.xlu0 %3979
      %3981 = vrot.lane.b32.xlu0 %v3648, 113
      %v3982 = vpop.permute.xlu0 %3981
      %3983 = vrot.lane.b32.xlu0 %v3650, 113
      %v3984 = vpop.permute.xlu0 %3983
      %v3985 = vsel %vm624, %v3978, %v3982
      %v3986 = vsel %vm624, %v3980, %v3984
      %v3987 = vsel %vm624, %v3974, %v3978
      %v3988 = vsel %vm624, %v3976, %v3980
      %v3989 = vsel %vm624, %v3970, %v3974
      %v3990 = vsel %vm624, %v3972, %v3976
      %v3991 = vsel %vm624, %v3982, %v3970
      %v3992 = vsel %vm624, %v3984, %v3972
      %v3993 = vld [vmem:[%s629] ss:$8 sm:$0xf]
      %v3995 = vlaneseq
      %v3996 = vshrl.u32 %v3995, 7
      %v3997 = vsub.s32 0, %v3996
      %v3998 = vrot.slane %v3993, %v3997
      %v3999 = vlaneseq
      %v4000 = vshrl.u32 %v3999, 7
      %v4001 = vsub.s32 1, %v4000
      %v4002 = vrot.slane %v3993, %v4001
      %v4003 = vlaneseq
      %v4004 = vshrl.u32 %v4003, 7
      %v4005 = vsub.s32 2, %v4004
      %v4006 = vrot.slane %v3993, %v4005
      %v4007 = vlaneseq
      %v4008 = vshrl.u32 %v4007, 7
      %v4009 = vsub.s32 3, %v4008
      %v4010 = vrot.slane %v3993, %v4009
      %v4015 = vmul.f32 %v3989, %v3998
      %v4016 = vmul.f32 %v3987, %v4002
      %v4017 = vmul.f32 %v3985, %v4006
      %v4018 = vmul.f32 %v3991, %v4010
      %v4019 = vmul.f32 %v3990, %v3998
      %v4020 = vmul.f32 %v3988, %v4002
      %v4021 = vmul.f32 %v3986, %v4006
      %v4022 = vmul.f32 %v3992, %v4010
      %4023 = vst [vmem:[#allocation2 + $0x180] sm:$0xff] %v4015
      %4024 = vst [vmem:[#allocation2 + $0x188] sm:$0xff] %v4016
      %4025 = vst [vmem:[#allocation2 + $0x190] sm:$0xff] %v4017
      %4026 = vst [vmem:[#allocation2 + $0x198] sm:$0xff] %v4018
      %4027 = vst [vmem:[#allocation2 + $0x1a0] sm:$0xff] %v4019
      %4028 = vst [vmem:[#allocation2 + $0x1a8] sm:$0xff] %v4020
      %4029 = vst [vmem:[#allocation2 + $0x1b0] sm:$0xff] %v4021
      %4030 = vst [vmem:[#allocation2 + $0x1b8] sm:$0xff] %v4022
      %4031 = vrot.lane.b32.xlu0 %v3451, 112
      %v4032 = vpop.permute.xlu0 %4031
      %4033 = vrot.lane.b32.xlu0 %v3453, 112
      %v4034 = vpop.permute.xlu0 %4033
      %4035 = vrot.lane.b32.xlu0 %v3452, 112
      %v4036 = vpop.permute.xlu0 %4035
      %4037 = vrot.lane.b32.xlu0 %v3454, 112
      %v4038 = vpop.permute.xlu0 %4037
      %4039 = vrot.lane.b32.xlu0 %v3647, 112
      %v4040 = vpop.permute.xlu0 %4039
      %4041 = vrot.lane.b32.xlu0 %v3649, 112
      %v4042 = vpop.permute.xlu0 %4041
      %4043 = vrot.lane.b32.xlu0 %v3648, 112
      %v4044 = vpop.permute.xlu0 %4043
      %4045 = vrot.lane.b32.xlu0 %v3650, 112
      %v4046 = vpop.permute.xlu0 %4045
      %v4047 = vsel %vm668, %v4040, %v4044
      %v4048 = vsel %vm668, %v4042, %v4046
      %v4049 = vsel %vm668, %v4036, %v4040
      %v4050 = vsel %vm668, %v4038, %v4042
      %v4051 = vsel %vm668, %v4032, %v4036
      %v4052 = vsel %vm668, %v4034, %v4038
      %v4053 = vsel %vm668, %v4044, %v4032
      %v4054 = vsel %vm668, %v4046, %v4034
      %v4055 = vld [vmem:[%s673] ss:$8 sm:$0xf]
      %v4057 = vlaneseq
      %v4058 = vshrl.u32 %v4057, 7
      %v4059 = vsub.s32 0, %v4058
      %v4060 = vrot.slane %v4055, %v4059
      %v4061 = vlaneseq
      %v4062 = vshrl.u32 %v4061, 7
      %v4063 = vsub.s32 1, %v4062
      %v4064 = vrot.slane %v4055, %v4063
      %v4065 = vlaneseq
      %v4066 = vshrl.u32 %v4065, 7
      %v4067 = vsub.s32 2, %v4066
      %v4068 = vrot.slane %v4055, %v4067
      %v4069 = vlaneseq
      %v4070 = vshrl.u32 %v4069, 7
      %v4071 = vsub.s32 3, %v4070
      %v4072 = vrot.slane %v4055, %v4071
      %v4077 = vmul.f32 %v4051, %v4060
      %v4078 = vmul.f32 %v4049, %v4064
      %v4079 = vmul.f32 %v4047, %v4068
      %v4080 = vmul.f32 %v4053, %v4072
      %v4081 = vmul.f32 %v4052, %v4060
      %v4082 = vmul.f32 %v4050, %v4064
      %v4083 = vmul.f32 %v4048, %v4068
      %v4084 = vmul.f32 %v4054, %v4072
      %4085 = vst [vmem:[#allocation2 + $0x1c0] sm:$0xff] %v4077
      %4086 = vst [vmem:[#allocation2 + $0x1c8] sm:$0xff] %v4078
      %4087 = vst [vmem:[#allocation2 + $0x1d0] sm:$0xff] %v4079
      %4088 = vst [vmem:[#allocation2 + $0x1d8] sm:$0xff] %v4080
      %4089 = vst [vmem:[#allocation2 + $0x1e0] sm:$0xff] %v4081
      %4090 = vst [vmem:[#allocation2 + $0x1e8] sm:$0xff] %v4082
      %4091 = vst [vmem:[#allocation2 + $0x1f0] sm:$0xff] %v4083
      %4092 = vst [vmem:[#allocation2 + $0x1f8] sm:$0xff] %v4084
      %4093 = vrot.lane.b32.xlu0 %v3451, 111
      %v4094 = vpop.permute.xlu0 %4093
      %4095 = vrot.lane.b32.xlu0 %v3453, 111
      %v4096 = vpop.permute.xlu0 %4095
      %4097 = vrot.lane.b32.xlu0 %v3452, 111
      %v4098 = vpop.permute.xlu0 %4097
      %4099 = vrot.lane.b32.xlu0 %v3454, 111
      %v4100 = vpop.permute.xlu0 %4099
      %4101 = vrot.lane.b32.xlu0 %v3647, 111
      %v4102 = vpop.permute.xlu0 %4101
      %4103 = vrot.lane.b32.xlu0 %v3649, 111
      %v4104 = vpop.permute.xlu0 %4103
      %4105 = vrot.lane.b32.xlu0 %v3648, 111
      %v4106 = vpop.permute.xlu0 %4105
      %4107 = vrot.lane.b32.xlu0 %v3650, 111
      %v4108 = vpop.permute.xlu0 %4107
      %v4109 = vsel %vm712, %v4102, %v4106
      %v4110 = vsel %vm712, %v4104, %v4108
      %v4111 = vsel %vm712, %v4098, %v4102
      %v4112 = vsel %vm712, %v4100, %v4104
      %v4113 = vsel %vm712, %v4094, %v4098
      %v4114 = vsel %vm712, %v4096, %v4100
      %v4115 = vsel %vm712, %v4106, %v4094
      %v4116 = vsel %vm712, %v4108, %v4096
      %v4117 = vld [vmem:[%s717] ss:$8 sm:$0xf]
      %v4119 = vlaneseq
      %v4120 = vshrl.u32 %v4119, 7
      %v4121 = vsub.s32 0, %v4120
      %v4122 = vrot.slane %v4117, %v4121
      %v4123 = vlaneseq
      %v4124 = vshrl.u32 %v4123, 7
      %v4125 = vsub.s32 1, %v4124
      %v4126 = vrot.slane %v4117, %v4125
      %v4127 = vlaneseq
      %v4128 = vshrl.u32 %v4127, 7
      %v4129 = vsub.s32 2, %v4128
      %v4130 = vrot.slane %v4117, %v4129
      %v4131 = vlaneseq
      %v4132 = vshrl.u32 %v4131, 7
      %v4133 = vsub.s32 3, %v4132
      %v4134 = vrot.slane %v4117, %v4133
      %v4139 = vmul.f32 %v4113, %v4122
      %v4140 = vmul.f32 %v4111, %v4126
      %v4141 = vmul.f32 %v4109, %v4130
      %v4142 = vmul.f32 %v4115, %v4134
      %v4143 = vmul.f32 %v4114, %v4122
      %v4144 = vmul.f32 %v4112, %v4126
      %v4145 = vmul.f32 %v4110, %v4130
      %v4146 = vmul.f32 %v4116, %v4134
      %4147 = vst [vmem:[#allocation2 + $0x200] sm:$0xff] %v4139
      %4148 = vst [vmem:[#allocation2 + $0x208] sm:$0xff] %v4140
      %4149 = vst [vmem:[#allocation2 + $0x210] sm:$0xff] %v4141
      %4150 = vst [vmem:[#allocation2 + $0x218] sm:$0xff] %v4142
      %4151 = vst [vmem:[#allocation2 + $0x220] sm:$0xff] %v4143
      %4152 = vst [vmem:[#allocation2 + $0x228] sm:$0xff] %v4144
      %4153 = vst [vmem:[#allocation2 + $0x230] sm:$0xff] %v4145
      %4154 = vst [vmem:[#allocation2 + $0x238] sm:$0xff] %v4146
      %v4155 = vld [vmem:[%s5] sm:$0xff]
      %v4156 = vld [vmem:[%s5 + $0x8] sm:$0xff]
      %v4157 = vld [vmem:[%s5 + $0x10] sm:$0xff]
      %v4158 = vld [vmem:[%s5 + $0x18] sm:$0xff]
      %v4159 = vld [vmem:[%s5 + $0x20] sm:$0xff]
      %v4160 = vld [vmem:[%s5 + $0x28] sm:$0xff]
      %v4161 = vld [vmem:[%s5 + $0x30] sm:$0xff]
      %v4162 = vld [vmem:[%s5 + $0x38] sm:$0xff]
      %v4163 = vld [vmem:[#allocation2] sm:$0xff]
      %v4164 = vld [vmem:[#allocation2 + $0x8] sm:$0xff]
      %v4165 = vld [vmem:[#allocation2 + $0x10] sm:$0xff]
      %v4166 = vld [vmem:[#allocation2 + $0x18] sm:$0xff]
      %v4167 = vld [vmem:[#allocation2 + $0x20] sm:$0xff]
      %v4168 = vld [vmem:[#allocation2 + $0x28] sm:$0xff]
      %v4169 = vld [vmem:[#allocation2 + $0x30] sm:$0xff]
      %v4170 = vld [vmem:[#allocation2 + $0x38] sm:$0xff]
      %v4171 = vld [vmem:[#allocation2 + $0x40] sm:$0xff]
      %v4172 = vld [vmem:[#allocation2 + $0x48] sm:$0xff]
      %v4173 = vld [vmem:[#allocation2 + $0x50] sm:$0xff]
      %v4174 = vld [vmem:[#allocation2 + $0x58] sm:$0xff]
      %v4175 = vld [vmem:[#allocation2 + $0x60] sm:$0xff]
      %v4176 = vld [vmem:[#allocation2 + $0x68] sm:$0xff]
      %v4177 = vld [vmem:[#allocation2 + $0x70] sm:$0xff]
      %v4178 = vld [vmem:[#allocation2 + $0x78] sm:$0xff]
      %v4179 = vld [vmem:[#allocation2 + $0x80] sm:$0xff]
      %v4180 = vld [vmem:[#allocation2 + $0x88] sm:$0xff]
      %v4181 = vld [vmem:[#allocation2 + $0x90] sm:$0xff]
      %v4182 = vld [vmem:[#allocation2 + $0x98] sm:$0xff]
      %v4183 = vld [vmem:[#allocation2 + $0xa0] sm:$0xff]
      %v4184 = vld [vmem:[#allocation2 + $0xa8] sm:$0xff]
      %v4185 = vld [vmem:[#allocation2 + $0xb0] sm:$0xff]
      %v4186 = vld [vmem:[#allocation2 + $0xb8] sm:$0xff]
      %v4187 = vld [vmem:[#allocation2 + $0xc0] sm:$0xff]
      %v4188 = vld [vmem:[#allocation2 + $0xc8] sm:$0xff]
      %v4189 = vld [vmem:[#allocation2 + $0xd0] sm:$0xff]
      %v4190 = vld [vmem:[#allocation2 + $0xd8] sm:$0xff]
      %v4191 = vld [vmem:[#allocation2 + $0xe0] sm:$0xff]
      %v4192 = vld [vmem:[#allocation2 + $0xe8] sm:$0xff]
      %v4193 = vld [vmem:[#allocation2 + $0xf0] sm:$0xff]
      %v4194 = vld [vmem:[#allocation2 + $0xf8] sm:$0xff]
      %v4195 = vld [vmem:[#allocation2 + $0x100] sm:$0xff]
      %v4196 = vld [vmem:[#allocation2 + $0x108] sm:$0xff]
      %v4197 = vld [vmem:[#allocation2 + $0x110] sm:$0xff]
      %v4198 = vld [vmem:[#allocation2 + $0x118] sm:$0xff]
      %v4199 = vld [vmem:[#allocation2 + $0x120] sm:$0xff]
      %v4200 = vld [vmem:[#allocation2 + $0x128] sm:$0xff]
      %v4201 = vld [vmem:[#allocation2 + $0x130] sm:$0xff]
      %v4202 = vld [vmem:[#allocation2 + $0x138] sm:$0xff]
      %v4203 = vld [vmem:[#allocation2 + $0x140] sm:$0xff]
      %v4204 = vld [vmem:[#allocation2 + $0x148] sm:$0xff]
      %v4205 = vld [vmem:[#allocation2 + $0x150] sm:$0xff]
      %v4206 = vld [vmem:[#allocation2 + $0x158] sm:$0xff]
      %v4207 = vld [vmem:[#allocation2 + $0x160] sm:$0xff]
      %v4208 = vld [vmem:[#allocation2 + $0x168] sm:$0xff]
      %v4209 = vld [vmem:[#allocation2 + $0x170] sm:$0xff]
      %v4210 = vld [vmem:[#allocation2 + $0x178] sm:$0xff]
      %v4211 = vld [vmem:[#allocation2 + $0x180] sm:$0xff]
      %v4212 = vld [vmem:[#allocation2 + $0x188] sm:$0xff]
      %v4213 = vld [vmem:[#allocation2 + $0x190] sm:$0xff]
      %v4214 = vld [vmem:[#allocation2 + $0x198] sm:$0xff]
      %v4215 = vld [vmem:[#allocation2 + $0x1a0] sm:$0xff]
      %v4216 = vld [vmem:[#allocation2 + $0x1a8] sm:$0xff]
      %v4217 = vld [vmem:[#allocation2 + $0x1b0] sm:$0xff]
      %v4218 = vld [vmem:[#allocation2 + $0x1b8] sm:$0xff]
      %v4219 = vld [vmem:[#allocation2 + $0x1c0] sm:$0xff]
      %v4220 = vld [vmem:[#allocation2 + $0x1c8] sm:$0xff]
      %v4221 = vld [vmem:[#allocation2 + $0x1d0] sm:$0xff]
      %v4222 = vld [vmem:[#allocation2 + $0x1d8] sm:$0xff]
      %v4223 = vld [vmem:[#allocation2 + $0x1e0] sm:$0xff]
      %v4224 = vld [vmem:[#allocation2 + $0x1e8] sm:$0xff]
      %v4225 = vld [vmem:[#allocation2 + $0x1f0] sm:$0xff]
      %v4226 = vld [vmem:[#allocation2 + $0x1f8] sm:$0xff]
      %v4227 = vld [vmem:[#allocation2 + $0x200] sm:$0xff]
      %v4228 = vld [vmem:[#allocation2 + $0x208] sm:$0xff]
      %v4229 = vld [vmem:[#allocation2 + $0x210] sm:$0xff]
      %v4230 = vld [vmem:[#allocation2 + $0x218] sm:$0xff]
      %v4231 = vld [vmem:[#allocation2 + $0x220] sm:$0xff]
      %v4232 = vld [vmem:[#allocation2 + $0x228] sm:$0xff]
      %v4233 = vld [vmem:[#allocation2 + $0x230] sm:$0xff]
      %v4234 = vld [vmem:[#allocation2 + $0x238] sm:$0xff]
      %v4235 = vld [vmem:[%s6] sm:$0xff]
      %v4236 = vld [vmem:[%s6 + $0x8] sm:$0xff]
      %v4237 = vld [vmem:[%s6 + $0x10] sm:$0xff]
      %v4238 = vld [vmem:[%s6 + $0x18] sm:$0xff]
      %4240 = vset.pattern.permute.xlu0 0
      %4241 = vperm.xlu0 %4240, %v4235
      %v4242 = vpop.permute.xlu0 %4241
      %4245 = vset.pattern.permute.xlu0 0
      %4246 = vperm.xlu0 %4245, %v4236
      %v4247 = vpop.permute.xlu0 %4246
      %4250 = vset.pattern.permute.xlu0 0
      %4251 = vperm.xlu0 %4250, %v4237
      %v4252 = vpop.permute.xlu0 %4251
      %4255 = vset.pattern.permute.xlu0 0
      %4256 = vperm.xlu0 %4255, %v4238
      %v4257 = vpop.permute.xlu0 %4256
      %v4260 = vsel %vm3258, %v4156, 0
      %v4263 = vsel %vm3258, %v4158, 0
      %v4266 = vsel %vm3258, %v4160, 0
      %v4269 = vsel %vm3258, %v4162, 0
      %4271 = vmatprep.subr.mxu0 %v4164
      %4272 = vmatpush1.msra.mxu0 %v4163
      %4273 = vmatprep.subr.mxu0 %v4168
      %4274 = vmatpush1.msra.mxu0 %v4167
      %4275 = vmatprep.subr.mxu0 %v4172
      %4276 = vmatpush1.msra.mxu0 %v4171
      %4277 = vmatprep.subr.mxu0 %v4176
      %4278 = vmatpush1.msra.mxu0 %v4175
      %4279 = vmatprep.subr.mxu0 %v4180
      %4280 = vmatpush1.msra.mxu0 %v4179
      %4281 = vmatprep.subr.mxu0 %v4184
      %4282 = vmatpush1.msra.mxu0 %v4183
      %4283 = vmatprep.subr.mxu0 %v4188
      %4284 = vmatpush1.msra.mxu0 %v4187
      %4285 = vmatprep.subr.mxu0 %v4192
      %4286 = vmatpush1.msra.mxu0 %v4191
      %4287 = vmatprep.subr.mxu0 %v4196
      %4288 = vmatpush1.msra.mxu0 %v4195
      %4289 = vmatprep.subr.mxu0 %v4200
      %4290 = vmatpush1.msra.mxu0 %v4199
      %4291 = vmatprep.subr.mxu0 %v4204
      %4292 = vmatpush1.msra.mxu0 %v4203
      %4293 = vmatprep.subr.mxu0 %v4208
      %4294 = vmatpush1.msra.mxu0 %v4207
      %4295 = vmatprep.subr.mxu0 %v4212
      %4296 = vmatpush1.msra.mxu0 %v4211
      %4297 = vmatprep.subr.mxu0 %v4216
      %4298 = vmatpush1.msra.mxu0 %v4215
      %4299 = vmatprep.subr.mxu0 %v4220
      %4300 = vmatpush1.msra.mxu0 %v4219
      %4301 = vmatprep.subr.mxu0 %v4224
      %4302 = vmatpush1.msra.mxu0 %v4223
      %4303 = vmatprep.subr.mxu0 %v4228
      %4304 = vmatpush1.msra.mxu0 %v4227
      %4305 = vmatprep.subr.mxu0 %v4232
      %4306 = vmatpush1.msra.mxu0 %v4231
      %4307 = vmatprep.subr.mxu0 0.0
      %4308 = vmatpush1.msra.mxu0 0.0
      %4309 = vmatprep.subr.mxu0 0.0
      %4310 = vmatpush1.msra.mxu0 0.0
      %4311 = vmatprep.subr.mxu0 0.0
      %4312 = vmatpush1.msra.mxu0 0.0
      %4313 = vmatprep.subr.mxu0 0.0
      %4314 = vmatpush1.msra.mxu0 0.0
      %4315 = vmatprep.subr.mxu0 0.0
      %4316 = vmatpush1.msra.mxu0 0.0
      %4317 = vmatprep.subr.mxu0 0.0
      %4318 = vmatpush1.msra.mxu0 0.0
      %4319 = vmatprep.subr.mxu0 0.0
      %4320 = vmatpush1.msra.mxu0 0.0
      %4321 = vmatprep.subr.mxu0 0.0
      %4322 = vmatpush1.msra.mxu0 0.0
      %4323 = vmatprep.subr.mxu0 0.0
      %4324 = vmatpush1.msra.mxu0 0.0
      %4325 = vmatprep.subr.mxu0 0.0
      %4326 = vmatpush1.msra.mxu0 0.0
      %4327 = vmatprep.subr.mxu0 0.0
      %4328 = vmatpush1.msra.mxu0 0.0
      %4329 = vmatprep.subr.mxu0 0.0
      %4330 = vmatpush1.msra.mxu0 0.0
      %4331 = vmatprep.subr.mxu0 0.0
      %4332 = vmatpush1.msra.mxu0 0.0
      %4333 = vmatprep.subr.mxu0 0.0
      %4334 = vmatpush1.msra.mxu0 0.0
      %4335 = vmatprep.mubr.f32.mxu0 %v4260
      %4336 = vmatmul.mubr.f32.gmra.mrb[0].mxu0 %v4155
      %v4337 = vpop.f32.mrb[0].mxu0
      %v4338 = vadd.f32 %v4242, %v4337
      %v4339 = vpop.f32.mrb[0].mxu0
      %v4340 = vadd.f32 %v4242, %v4339
      %4341 = vmatprep.mubr.f32.mxu0 %v4263
      %4342 = vmatmul.mubr.f32.gmra.mrb[0].mxu0 %v4157
      %v4343 = vpop.f32.mrb[0].mxu0
      %v4344 = vadd.f32 %v4247, %v4343
      %v4345 = vpop.f32.mrb[0].mxu0
      %v4346 = vadd.f32 %v4247, %v4345
      %4347 = vmatprep.mubr.f32.mxu0 %v4266
      %4348 = vmatmul.mubr.f32.gmra.mrb[0].mxu0 %v4159
      %v4349 = vpop.f32.mrb[0].mxu0
      %v4350 = vadd.f32 %v4252, %v4349
      %v4351 = vpop.f32.mrb[0].mxu0
      %v4352 = vadd.f32 %v4252, %v4351
      %4353 = vmatprep.mubr.f32.mxu0 %v4269
      %4354 = vmatmul.mubr.f32.gmra.mrb[0].mxu0 %v4161
      %v4355 = vpop.f32.mrb[0].mxu0
      %v4356 = vadd.f32 %v4257, %v4355
      %v4357 = vpop.f32.mrb[0].mxu0
      %v4358 = vadd.f32 %v4257, %v4357
      %4359 = vdwg.mxu0
      %4360 = vmatprep.subr.mxu0 %v4166
      %4361 = vmatpush1.msra.mxu0 %v4165
      %4362 = vmatprep.subr.mxu0 %v4170
      %4363 = vmatpush1.msra.mxu0 %v4169
      %4364 = vmatprep.subr.mxu0 %v4174
      %4365 = vmatpush1.msra.mxu0 %v4173
      %4366 = vmatprep.subr.mxu0 %v4178
      %4367 = vmatpush1.msra.mxu0 %v4177
      %4368 = vmatprep.subr.mxu0 %v4182
      %4369 = vmatpush1.msra.mxu0 %v4181
      %4370 = vmatprep.subr.mxu0 %v4186
      %4371 = vmatpush1.msra.mxu0 %v4185
      %4372 = vmatprep.subr.mxu0 %v4190
      %4373 = vmatpush1.msra.mxu0 %v4189
      %4374 = vmatprep.subr.mxu0 %v4194
      %4375 = vmatpush1.msra.mxu0 %v4193
      %4376 = vmatprep.subr.mxu0 %v4198
      %4377 = vmatpush1.msra.mxu0 %v4197
      %4378 = vmatprep.subr.mxu0 %v4202
      %4379 = vmatpush1.msra.mxu0 %v4201
      %4380 = vmatprep.subr.mxu0 %v4206
      %4381 = vmatpush1.msra.mxu0 %v4205
      %4382 = vmatprep.subr.mxu0 %v4210
      %4383 = vmatpush1.msra.mxu0 %v4209
      %4384 = vmatprep.subr.mxu0 %v4214
      %4385 = vmatpush1.msra.mxu0 %v4213
      %4386 = vmatprep.subr.mxu0 %v4218
      %4387 = vmatpush1.msra.mxu0 %v4217
      %4388 = vmatprep.subr.mxu0 %v4222
      %4389 = vmatpush1.msra.mxu0 %v4221
      %4390 = vmatprep.subr.mxu0 %v4226
      %4391 = vmatpush1.msra.mxu0 %v4225
      %4392 = vmatprep.subr.mxu0 %v4230
      %4393 = vmatpush1.msra.mxu0 %v4229
      %4394 = vmatprep.subr.mxu0 %v4234
      %4395 = vmatpush1.msra.mxu0 %v4233
      %4396 = vmatprep.subr.mxu0 0.0
      %4397 = vmatpush1.msra.mxu0 0.0
      %4398 = vmatprep.subr.mxu0 0.0
      %4399 = vmatpush1.msra.mxu0 0.0
      %4400 = vmatprep.subr.mxu0 0.0
      %4401 = vmatpush1.msra.mxu0 0.0
      %4402 = vmatprep.subr.mxu0 0.0
      %4403 = vmatpush1.msra.mxu0 0.0
      %4404 = vmatprep.subr.mxu0 0.0
      %4405 = vmatpush1.msra.mxu0 0.0
      %4406 = vmatprep.subr.mxu0 0.0
      %4407 = vmatpush1.msra.mxu0 0.0
      %4408 = vmatprep.subr.mxu0 0.0
      %4409 = vmatpush1.msra.mxu0 0.0
      %4410 = vmatprep.subr.mxu0 0.0
      %4411 = vmatpush1.msra.mxu0 0.0
      %4412 = vmatprep.subr.mxu0 0.0
      %4413 = vmatpush1.msra.mxu0 0.0
      %4414 = vmatprep.subr.mxu0 0.0
      %4415 = vmatpush1.msra.mxu0 0.0
      %4416 = vmatprep.subr.mxu0 0.0
      %4417 = vmatpush1.msra.mxu0 0.0
      %4418 = vmatprep.subr.mxu0 0.0
      %4419 = vmatpush1.msra.mxu0 0.0
      %4420 = vmatprep.subr.mxu0 0.0
      %4421 = vmatpush1.msra.mxu0 0.0
      %4422 = vmatprep.subr.mxu0 0.0
      %4423 = vmatpush1.msra.mxu0 0.0
      %4424 = vmatprep.mubr.f32.mxu0 %v4260
      %4425 = vmatmul.mubr.f32.gmra.mrb[0].mxu0 %v4155
      %v4426 = vpop.f32.mrb[0].mxu0
      %v4427 = vadd.f32 %v4242, %v4426
      %v4428 = vpop.f32.mrb[0].mxu0
      %v4429 = vadd.f32 %v4242, %v4428
      %4430 = vmatprep.mubr.f32.mxu0 %v4263
      %4431 = vmatmul.mubr.f32.gmra.mrb[0].mxu0 %v4157
      %v4432 = vpop.f32.mrb[0].mxu0
      %v4433 = vadd.f32 %v4247, %v4432
      %v4434 = vpop.f32.mrb[0].mxu0
      %v4435 = vadd.f32 %v4247, %v4434
      %4436 = vmatprep.mubr.f32.mxu0 %v4266
      %4437 = vmatmul.mubr.f32.gmra.mrb[0].mxu0 %v4159
      %v4438 = vpop.f32.mrb[0].mxu0
      %v4439 = vadd.f32 %v4252, %v4438
      %v4440 = vpop.f32.mrb[0].mxu0
      %v4441 = vadd.f32 %v4252, %v4440
      %4442 = vmatprep.mubr.f32.mxu0 %v4269
      %4443 = vmatmul.mubr.f32.gmra.mrb[0].mxu0 %v4161
      %v4444 = vpop.f32.mrb[0].mxu0
      %v4445 = vadd.f32 %v4257, %v4444
      %v4446 = vpop.f32.mrb[0].mxu0
      %v4447 = vadd.f32 %v4257, %v4446
      %4448 = vdwg.mxu0
      %vm4449 = vcmp.ge.f32.partialorder %v4338, 0.0
      %vm4450 = vcmp.ge.f32.partialorder %v4340, 0.0
      %vm4451 = vcmp.ge.f32.partialorder %v4427, 0.0
      %vm4452 = vcmp.ge.f32.partialorder %v4429, 0.0
      %vm4453 = vcmp.ge.f32.partialorder %v4344, 0.0
      %vm4454 = vcmp.ge.f32.partialorder %v4346, 0.0
      %vm4455 = vcmp.ge.f32.partialorder %v4433, 0.0
      %vm4456 = vcmp.ge.f32.partialorder %v4435, 0.0
      %vm4457 = vcmp.ge.f32.partialorder %v4350, 0.0
      %vm4458 = vcmp.ge.f32.partialorder %v4352, 0.0
      %vm4459 = vcmp.ge.f32.partialorder %v4439, 0.0
      %vm4460 = vcmp.ge.f32.partialorder %v4441, 0.0
      %vm4461 = vcmp.ge.f32.partialorder %v4356, 0.0
      %vm4462 = vcmp.ge.f32.partialorder %v4358, 0.0
      %vm4463 = vcmp.ge.f32.partialorder %v4445, 0.0
      %vm4464 = vcmp.ge.f32.partialorder %v4447, 0.0
      %v4465 = vmul.f32 %v4338, 0.01
      %v4466 = vmul.f32 %v4340, 0.01
      %v4467 = vmul.f32 %v4427, 0.01
      %v4468 = vmul.f32 %v4429, 0.01
      %v4469 = vmul.f32 %v4344, 0.01
      %v4470 = vmul.f32 %v4346, 0.01
      %v4471 = vmul.f32 %v4433, 0.01
      %v4472 = vmul.f32 %v4435, 0.01
      %v4473 = vmul.f32 %v4350, 0.01
      %v4474 = vmul.f32 %v4352, 0.01
      %v4475 = vmul.f32 %v4439, 0.01
      %v4476 = vmul.f32 %v4441, 0.01
      %v4477 = vmul.f32 %v4356, 0.01
      %v4478 = vmul.f32 %v4358, 0.01
      %v4479 = vmul.f32 %v4445, 0.01
      %v4480 = vmul.f32 %v4447, 0.01
      %v4481 = vsel %vm4449, %v4338, %v4465
      %v4482 = vsel %vm4450, %v4340, %v4466
      %v4483 = vsel %vm4451, %v4427, %v4467
      %v4484 = vsel %vm4452, %v4429, %v4468
      %v4485 = vsel %vm4453, %v4344, %v4469
      %v4486 = vsel %vm4454, %v4346, %v4470
      %v4487 = vsel %vm4455, %v4433, %v4471
      %v4488 = vsel %vm4456, %v4435, %v4472
      %v4489 = vsel %vm4457, %v4350, %v4473
      %v4490 = vsel %vm4458, %v4352, %v4474
      %v4491 = vsel %vm4459, %v4439, %v4475
      %v4492 = vsel %vm4460, %v4441, %v4476
      %v4493 = vsel %vm4461, %v4356, %v4477
      %v4494 = vsel %vm4462, %v4358, %v4478
      %v4495 = vsel %vm4463, %v4445, %v4479
      %v4496 = vsel %vm4464, %v4447, %v4480
      %v4497 = vld [vmem:[%s10] sm:$0xff]
      %v4498 = vld [vmem:[%s10 + $0x8] sm:$0xff]
      %v4499 = vld [vmem:[%s10 + $0x10] sm:$0xff]
      %v4500 = vld [vmem:[%s10 + $0x18] sm:$0xff]
      %v4501 = vld [vmem:[%s10 + $0x20] sm:$0xff]
      %v4502 = vld [vmem:[%s10 + $0x28] sm:$0xff]
      %v4503 = vld [vmem:[%s10 + $0x30] sm:$0xff]
      %v4504 = vld [vmem:[%s10 + $0x38] sm:$0xff]
      %v4505 = vld [vmem:[%s10 + $0x40] sm:$0xff]
      %v4506 = vld [vmem:[%s10 + $0x48] sm:$0xff]
      %v4507 = vld [vmem:[%s10 + $0x50] sm:$0xff]
      %v4508 = vld [vmem:[%s10 + $0x58] sm:$0xff]
      %v4509 = vld [vmem:[%s10 + $0x60] sm:$0xff]
      %v4510 = vld [vmem:[%s10 + $0x68] sm:$0xff]
      %v4511 = vld [vmem:[%s10 + $0x70] sm:$0xff]
      %v4512 = vld [vmem:[%s10 + $0x78] sm:$0xff]
      %v4513 = vld [vmem:[%s10 + $0x80] sm:$0xff]
      %v4514 = vld [vmem:[%s10 + $0x88] sm:$0xff]
      %v4515 = vld [vmem:[%s10 + $0x90] sm:$0xff]
      %v4516 = vld [vmem:[%s10 + $0x98] sm:$0xff]
      %v4517 = vld [vmem:[%s10 + $0xa0] sm:$0xff]
      %v4518 = vld [vmem:[%s10 + $0xa8] sm:$0xff]
      %v4519 = vld [vmem:[%s10 + $0xb0] sm:$0xff]
      %v4520 = vld [vmem:[%s10 + $0xb8] sm:$0xff]
      %v4521 = vld [vmem:[%s10 + $0xc0] sm:$0xff]
      %v4522 = vld [vmem:[%s10 + $0xc8] sm:$0xff]
      %v4523 = vld [vmem:[%s10 + $0xd0] sm:$0xff]
      %v4524 = vld [vmem:[%s10 + $0xd8] sm:$0xff]
      %v4525 = vld [vmem:[%s10 + $0xe0] sm:$0xff]
      %v4526 = vld [vmem:[%s10 + $0xe8] sm:$0xff]
      %v4527 = vld [vmem:[%s10 + $0xf0] sm:$0xff]
      %v4528 = vld [vmem:[%s10 + $0xf8] sm:$0xff]
      %v4529 = vld [vmem:[%s10 + $0x100] sm:$0xff]
      %v4530 = vld [vmem:[%s10 + $0x108] sm:$0xff]
      %v4531 = vld [vmem:[%s10 + $0x110] sm:$0xff]
      %v4532 = vld [vmem:[%s10 + $0x118] sm:$0xff]
      %v4533 = vld [vmem:[%s10 + $0x120] sm:$0xff]
      %v4534 = vld [vmem:[%s10 + $0x128] sm:$0xff]
      %v4535 = vld [vmem:[%s10 + $0x130] sm:$0xff]
      %v4536 = vld [vmem:[%s10 + $0x138] sm:$0xff]
      %v4537 = vld [vmem:[%s10 + $0x140] sm:$0xff]
      %v4538 = vld [vmem:[%s10 + $0x148] sm:$0xff]
      %v4539 = vld [vmem:[%s10 + $0x150] sm:$0xff]
      %v4540 = vld [vmem:[%s10 + $0x158] sm:$0xff]
      %v4541 = vld [vmem:[%s10 + $0x160] sm:$0xff]
      %v4542 = vld [vmem:[%s10 + $0x168] sm:$0xff]
      %v4543 = vld [vmem:[%s10 + $0x170] sm:$0xff]
      %v4544 = vld [vmem:[%s10 + $0x178] sm:$0xff]
      %v4545 = vld [vmem:[%s10 + $0x180] sm:$0xff]
      %v4546 = vld [vmem:[%s10 + $0x188] sm:$0xff]
      %v4547 = vld [vmem:[%s10 + $0x190] sm:$0xff]
      %v4548 = vld [vmem:[%s10 + $0x198] sm:$0xff]
      %v4549 = vld [vmem:[%s10 + $0x1a0] sm:$0xff]
      %v4550 = vld [vmem:[%s10 + $0x1a8] sm:$0xff]
      %v4551 = vld [vmem:[%s10 + $0x1b0] sm:$0xff]
      %v4552 = vld [vmem:[%s10 + $0x1b8] sm:$0xff]
      %v4553 = vld [vmem:[%s10 + $0x1c0] sm:$0xff]
      %v4554 = vld [vmem:[%s10 + $0x1c8] sm:$0xff]
      %v4555 = vld [vmem:[%s10 + $0x1d0] sm:$0xff]
      %v4556 = vld [vmem:[%s10 + $0x1d8] sm:$0xff]
      %v4557 = vld [vmem:[%s10 + $0x1e0] sm:$0xff]
      %v4558 = vld [vmem:[%s10 + $0x1e8] sm:$0xff]
      %v4559 = vld [vmem:[%s10 + $0x1f0] sm:$0xff]
      %v4560 = vld [vmem:[%s10 + $0x1f8] sm:$0xff]
      %v4561 = vld [vmem:[#allocation3] sm:$0xff]
      %v4562 = vld [vmem:[#allocation3 + $0x8] sm:$0xff]
      %v4563 = vld [vmem:[#allocation3 + $0x10] sm:$0xff]
      %v4564 = vld [vmem:[#allocation3 + $0x18] sm:$0xff]
      %4565 = vmatprep.subr.mxu0 0.0
      %4566 = vmatpush1.msra.mxu0 %v4497
      %4567 = vmatprep.subr.mxu0 0.0
      %4568 = vmatpush1.msra.mxu0 %v4498
      %4569 = vmatprep.subr.mxu0 0.0
      %4570 = vmatpush1.msra.mxu0 %v4499
      %4571 = vmatprep.subr.mxu0 0.0
      %4572 = vmatpush1.msra.mxu0 %v4500
      %4573 = vmatprep.subr.mxu0 0.0
      %4574 = vmatpush1.msra.mxu0 %v4501
      %4575 = vmatprep.subr.mxu0 0.0
      %4576 = vmatpush1.msra.mxu0 %v4502
      %4577 = vmatprep.subr.mxu0 0.0
      %4578 = vmatpush1.msra.mxu0 %v4503
      %4579 = vmatprep.subr.mxu0 0.0
      %4580 = vmatpush1.msra.mxu0 %v4504
      %4581 = vmatprep.subr.mxu0 0.0
      %4582 = vmatpush1.msra.mxu0 %v4505
      %4583 = vmatprep.subr.mxu0 0.0
      %4584 = vmatpush1.msra.mxu0 %v4506
      %4585 = vmatprep.subr.mxu0 0.0
      %4586 = vmatpush1.msra.mxu0 %v4507
      %4587 = vmatprep.subr.mxu0 0.0
      %4588 = vmatpush1.msra.mxu0 %v4508
      %4589 = vmatprep.subr.mxu0 0.0
      %4590 = vmatpush1.msra.mxu0 %v4509
      %4591 = vmatprep.subr.mxu0 0.0
      %4592 = vmatpush1.msra.mxu0 %v4510
      %4593 = vmatprep.subr.mxu0 0.0
      %4594 = vmatpush1.msra.mxu0 %v4511
      %4595 = vmatprep.subr.mxu0 0.0
      %4596 = vmatpush1.msra.mxu0 %v4512
      %4597 = vmatprep.subr.mxu0 0.0
      %4598 = vmatpush1.msra.mxu0 %v4513
      %4599 = vmatprep.subr.mxu0 0.0
      %4600 = vmatpush1.msra.mxu0 %v4514
      %4601 = vmatprep.subr.mxu0 0.0
      %4602 = vmatpush1.msra.mxu0 %v4515
      %4603 = vmatprep.subr.mxu0 0.0
      %4604 = vmatpush1.msra.mxu0 %v4516
      %4605 = vmatprep.subr.mxu0 0.0
      %4606 = vmatpush1.msra.mxu0 %v4517
      %4607 = vmatprep.subr.mxu0 0.0
      %4608 = vmatpush1.msra.mxu0 %v4518
      %4609 = vmatprep.subr.mxu0 0.0
      %4610 = vmatpush1.msra.mxu0 %v4519
      %4611 = vmatprep.subr.mxu0 0.0
      %4612 = vmatpush1.msra.mxu0 %v4520
      %4613 = vmatprep.subr.mxu0 0.0
      %4614 = vmatpush1.msra.mxu0 %v4521
      %4615 = vmatprep.subr.mxu0 0.0
      %4616 = vmatpush1.msra.mxu0 %v4522
      %4617 = vmatprep.subr.mxu0 0.0
      %4618 = vmatpush1.msra.mxu0 %v4523
      %4619 = vmatprep.subr.mxu0 0.0
      %4620 = vmatpush1.msra.mxu0 %v4524
      %4621 = vmatprep.subr.mxu0 0.0
      %4622 = vmatpush1.msra.mxu0 %v4525
      %4623 = vmatprep.subr.mxu0 0.0
      %4624 = vmatpush1.msra.mxu0 %v4526
      %4625 = vmatprep.subr.mxu0 0.0
      %4626 = vmatpush1.msra.mxu0 %v4527
      %4627 = vmatprep.subr.mxu0 0.0
      %4628 = vmatpush1.msra.mxu0 %v4528
      %4629 = vmatprep.mubr.f32.mxu0 %v4482
      %4630 = vmatmul.mubr.f32.gmra.mrb[0].mxu0 %v4481
      %v4631 = vpop.f32.mrb[0].mxu0
      %v4632 = vadd.f32 %v4561, %v4631
      %v4633 = vpop.f32.mrb[0].mxu0
      %4634 = vmatprep.mubr.f32.mxu0 %v4486
      %4635 = vmatmul.mubr.f32.gmra.mrb[0].mxu0 %v4485
      %v4636 = vpop.f32.mrb[0].mxu0
      %v4637 = vadd.f32 %v4562, %v4636
      %v4638 = vpop.f32.mrb[0].mxu0
      %4639 = vmatprep.mubr.f32.mxu0 %v4490
      %4640 = vmatmul.mubr.f32.gmra.mrb[0].mxu0 %v4489
      %v4641 = vpop.f32.mrb[0].mxu0
      %v4642 = vadd.f32 %v4563, %v4641
      %v4643 = vpop.f32.mrb[0].mxu0
      %4644 = vmatprep.mubr.f32.mxu0 %v4494
      %4645 = vmatmul.mubr.f32.gmra.mrb[0].mxu0 %v4493
      %v4646 = vpop.f32.mrb[0].mxu0
      %v4647 = vadd.f32 %v4564, %v4646
      %v4648 = vpop.f32.mrb[0].mxu0
      %4649 = vdwg.mxu0
      %4650 = vmatprep.subr.mxu0 0.0
      %4651 = vmatpush1.msra.mxu0 %v4529
      %4652 = vmatprep.subr.mxu0 0.0
      %4653 = vmatpush1.msra.mxu0 %v4530
      %4654 = vmatprep.subr.mxu0 0.0
      %4655 = vmatpush1.msra.mxu0 %v4531
      %4656 = vmatprep.subr.mxu0 0.0
      %4657 = vmatpush1.msra.mxu0 %v4532
      %4658 = vmatprep.subr.mxu0 0.0
      %4659 = vmatpush1.msra.mxu0 %v4533
      %4660 = vmatprep.subr.mxu0 0.0
      %4661 = vmatpush1.msra.mxu0 %v4534
      %4662 = vmatprep.subr.mxu0 0.0
      %4663 = vmatpush1.msra.mxu0 %v4535
      %4664 = vmatprep.subr.mxu0 0.0
      %4665 = vmatpush1.msra.mxu0 %v4536
      %4666 = vmatprep.subr.mxu0 0.0
      %4667 = vmatpush1.msra.mxu0 %v4537
      %4668 = vmatprep.subr.mxu0 0.0
      %4669 = vmatpush1.msra.mxu0 %v4538
      %4670 = vmatprep.subr.mxu0 0.0
      %4671 = vmatpush1.msra.mxu0 %v4539
      %4672 = vmatprep.subr.mxu0 0.0
      %4673 = vmatpush1.msra.mxu0 %v4540
      %4674 = vmatprep.subr.mxu0 0.0
      %4675 = vmatpush1.msra.mxu0 %v4541
      %4676 = vmatprep.subr.mxu0 0.0
      %4677 = vmatpush1.msra.mxu0 %v4542
      %4678 = vmatprep.subr.mxu0 0.0
      %4679 = vmatpush1.msra.mxu0 %v4543
      %4680 = vmatprep.subr.mxu0 0.0
      %4681 = vmatpush1.msra.mxu0 %v4544
      %4682 = vmatprep.subr.mxu0 0.0
      %4683 = vmatpush1.msra.mxu0 %v4545
      %4684 = vmatprep.subr.mxu0 0.0
      %4685 = vmatpush1.msra.mxu0 %v4546
      %4686 = vmatprep.subr.mxu0 0.0
      %4687 = vmatpush1.msra.mxu0 %v4547
      %4688 = vmatprep.subr.mxu0 0.0
      %4689 = vmatpush1.msra.mxu0 %v4548
      %4690 = vmatprep.subr.mxu0 0.0
      %4691 = vmatpush1.msra.mxu0 %v4549
      %4692 = vmatprep.subr.mxu0 0.0
      %4693 = vmatpush1.msra.mxu0 %v4550
      %4694 = vmatprep.subr.mxu0 0.0
      %4695 = vmatpush1.msra.mxu0 %v4551
      %4696 = vmatprep.subr.mxu0 0.0
      %4697 = vmatpush1.msra.mxu0 %v4552
      %4698 = vmatprep.subr.mxu0 0.0
      %4699 = vmatpush1.msra.mxu0 %v4553
      %4700 = vmatprep.subr.mxu0 0.0
      %4701 = vmatpush1.msra.mxu0 %v4554
      %4702 = vmatprep.subr.mxu0 0.0
      %4703 = vmatpush1.msra.mxu0 %v4555
      %4704 = vmatprep.subr.mxu0 0.0
      %4705 = vmatpush1.msra.mxu0 %v4556
      %4706 = vmatprep.subr.mxu0 0.0
      %4707 = vmatpush1.msra.mxu0 %v4557
      %4708 = vmatprep.subr.mxu0 0.0
      %4709 = vmatpush1.msra.mxu0 %v4558
      %4710 = vmatprep.subr.mxu0 0.0
      %4711 = vmatpush1.msra.mxu0 %v4559
      %4712 = vmatprep.subr.mxu0 0.0
      %4713 = vmatpush1.msra.mxu0 %v4560
      %4714 = vmatprep.mubr.f32.mxu0 %v4484
      %4715 = vmatmul.mubr.f32.gmra.mrb[0].mxu0 %v4483
      %v4716 = vpop.f32.mrb[0].mxu0
      %v4717 = vadd.f32 %v4632, %v4716
      %v4718 = vpop.f32.mrb[0].mxu0
      %4719 = vmatprep.mubr.f32.mxu0 %v4488
      %4720 = vmatmul.mubr.f32.gmra.mrb[0].mxu0 %v4487
      %v4721 = vpop.f32.mrb[0].mxu0
      %v4722 = vadd.f32 %v4637, %v4721
      %v4723 = vpop.f32.mrb[0].mxu0
      %4724 = vmatprep.mubr.f32.mxu0 %v4492
      %4725 = vmatmul.mubr.f32.gmra.mrb[0].mxu0 %v4491
      %v4726 = vpop.f32.mrb[0].mxu0
      %v4727 = vadd.f32 %v4642, %v4726
      %v4728 = vpop.f32.mrb[0].mxu0
      %4729 = vmatprep.mubr.f32.mxu0 %v4496
      %4730 = vmatmul.mubr.f32.gmra.mrb[0].mxu0 %v4495
      %v4731 = vpop.f32.mrb[0].mxu0
      %v4732 = vadd.f32 %v4647, %v4731
      %v4733 = vpop.f32.mrb[0].mxu0
      %4734 = vdwg.mxu0
      %4735 = vst [vmem:[%s386] sm:$0xff] %v4717
      %4736 = vst [vmem:[%s386 + $0x8] sm:$0xff] %v4722
      %4737 = vst [vmem:[%s386 + $0x10] sm:$0xff] %v4727
      %4738 = vst [vmem:[%s386 + $0x18] sm:$0xff] %v4732
      %p4739 = scmp.lt.s32.totalorder %s22, 1
      %s4740 = scalar_select %p4739, %s22, 1
      %s4741 = smul.addr %s4740, 4
      %s4742 = smul.addr %s4741, 8
      %s4743 = scalar_lea.vmem %s11, %s4742
      // Predicated region
      $region65: #{strided_resnet_forward.1} parent=63 // pred_check
        %p4744 = pneg %p276
      $region66: #{strided_resnet_forward.1} parent=63 // pred_check_branch
        %4746 = sbr.rel (%p4744) target = $region68
      $region67: #{strided_resnet_forward.1} parent=63 // pred_region
        _
      $region68: #{strided_resnet_forward.1} parent=63 // pred_fallthru
        _
    $region64: #{strided_resnet_forward.1} parent=5 // pred_fallthru
      _
    %p4747 = scmp.le.s32.totalorder 2, %s17
    // Predicated region
    $region69: #{strided_resnet_forward.1} parent=5 // pred_check
      %p4748 = pneg %p4747
    $region70: #{strided_resnet_forward.1} parent=5 // pred_check_branch
      %4750 = sbr.rel (%p4748) target = $region72
    $region71: #{strided_resnet_forward.1} parent=5 // pred_region
      %s4751 = ssub.s32 %s17, 2
      // Predicated region
      $region73: #{strided_resnet_forward.1} parent=71 // pred_check
        %p4752 = pneg %p282
      $region74: #{strided_resnet_forward.1} parent=71 // pred_check_branch
        %4754 = sbr.rel (%p4752) target = $region76
      $region75: #{strided_resnet_forward.1} parent=71 // pred_region
        %p4755 = scmp.lt.s32.totalorder %s23, 1
        %s4756 = scalar_select %p4755, %s23, 1
        %s4757 = smul.addr %s4756, 4
        %s4758 = smul.addr %s4757, 8
        %s4759 = scalar_lea.vmem %s11, %s4758
      $region76: #{strided_resnet_forward.1} parent=71 // pred_fallthru
        _
    $region72: #{strided_resnet_forward.1} parent=5 // pred_fallthru
      _
  $region6: #{strided_resnet_forward.1} parent=0 // loop_footer
    %s21 = sadd.s32 1, %s17
  $region7: #{strided_resnet_forward.1} parent=0 // loop_footer_branch
    %16 = sbr.rel target = $region3
  $region8: #{strided_resnet_forward.1} parent=0 // loop_exit
    _

</llo_original>
